<compile_context>
chip_gen: v6e
topology: v6e:2x2x1
jax: 0.10.0
libtpu: 0.0.40
codegen_flags: <defaults>
</compile_context>

<pallas_src>
import numpy as np
import jax
import jax.numpy as jnp
from jax.experimental import pallas as pl
from jax.experimental.pallas import tpu as pltpu

FRAME_STACK = 4
BN_EPS = 1e-5


# ------------------------------ Pallas kernel -------------------------------

def _mxu(a, b):
    # Single-pass bf16 MXU matmul with f32 accumulation.
    return jnp.dot(a.astype(jnp.bfloat16), b.astype(jnp.bfloat16),
                   preferred_element_type=jnp.float32)


def _bn_relu(y, gamma, beta):
    # Training-mode BatchNorm (biased batch statistics, PyTorch default) + ReLU,
    # one-pass variance E[y^2] - E[y]^2, all in f32 on the VPU.
    m = jnp.mean(y, axis=0, keepdims=True)
    var = jnp.maximum(jnp.mean(y * y, axis=0, keepdims=True) - m * m, 0.0)
    return jnp.maximum((y - m) * (jax.lax.rsqrt(var + BN_EPS) * gamma) + beta, 0.0)


def dqn_fused_kernel(p1_ref, w1_ref, g1_ref, bt1_ref,
                     G2_ref, w2_ref, g2_ref, bt2_ref,
                     G3_ref, w3_ref, g3_ref, bt3_ref,
                     w4_ref, b4_ref, w5_ref, b5_ref, out_ref):
    # conv1 (patches pre-built by the wrapper) + BN1 + ReLU -> [N*H1*W1, 32]
    h1 = _bn_relu(_mxu(p1_ref[...], w1_ref[...]), g1_ref[...], bt1_ref[...])

    # conv2 as a sum over the 4x4 kernel taps: rows for every output position
    # are gathered from h1 with exact 0/1 selection matmuls, then hit the
    # per-tap weight slab.  (No conv bias: cancelled by the BN mean.)
    y2 = jnp.zeros((G2_ref.shape[1], w2_ref.shape[2]), jnp.float32)
    for t in range(G2_ref.shape[0]):
        rows = _mxu(G2_ref[t], h1)           # [N*H2*W2, 32]
        y2 = y2 + _mxu(rows, w2_ref[t])      # [N*H2*W2, 64]
    h2 = _bn_relu(y2, g2_ref[...], bt2_ref[...])

    # conv3 (3x3, stride 1, 1x1 output) the same way.
    y3 = jnp.zeros((G3_ref.shape[1], w3_ref.shape[2]), jnp.float32)
    for t in range(G3_ref.shape[0]):
        rows = _mxu(G3_ref[t], h2)           # [N, 64]
        y3 = y3 + _mxu(rows, w3_ref[t])
    h3 = _bn_relu(y3, g3_ref[...], bt3_ref[...])

    # Flatten: conv3 output is 1x1 spatial, so rows of h3 are already the
    # per-sample 64-channel features (== PyTorch x.view(N, -1)).  MLP head.
    h4 = jnp.maximum(_mxu(h3, w4_ref[...]) + b4_ref[...], 0.0)
    out_ref[...] = _mxu(h4, w5_ref[...]) + b5_ref[...]


# ------------------------------ JAX wrapper ----------------------------------

def _vmem_spec():
    return pl.BlockSpec(memory_space=pltpu.MemorySpace.VMEM)


def _conv_out(size, k, s):
    return (size - (k - 1) - 1) // s + 1


def _gather_mats(n, hi, wi, k, s):
    """0/1 matrices G[k*k, n*ho*wo, n*hi*wi]; G[ki*k+kj] selects, for every conv
    output position, the input row at kernel tap (ki, kj)."""
    ho, wo = _conv_out(hi, k, s), _conv_out(wi, k, s)
    G = np.zeros((k * k, n * ho * wo, n * hi * wi), np.float32)
    for b in range(n):
        for oi in range(ho):
            for oj in range(wo):
                p = (b * ho + oi) * wo + oj
                for ki in range(k):
                    for kj in range(k):
                        r = (b * hi + s * oi + ki) * wi + (s * oj + kj)
                        G[ki * k + kj, p, r] = 1.0
    return jnp.asarray(G)


def conv1_patches(x_nchw):
    """im2col for conv1 (k=8, s=4) via 4 block views (instead of 64 strided
    slices).  Column order is (bi, bj, di, dj, c) with kh = 4*bi + di,
    kw = 4*bj + dj; the conv1 weight in prepare_dqn() is permuted to match."""
    n, c, h, w = x_nchw.shape
    ho, wo = _conv_out(h, 8, 4), _conv_out(w, 8, 4)
    xb = x_nchw.reshape(n, c, h // 4, 4, w // 4, 4)        # (n, c, BI, di, BJ, dj)
    pieces = []
    for bi in (0, 1):
        for bj in (0, 1):
            v = xb[:, :, bi:bi + ho, :, bj:bj + wo, :]     # (n, c, oi, di, oj, dj)
            pieces.append(v.transpose(0, 2, 4, 3, 5, 1)    # (n, oi, oj, di, dj, c)
                          .reshape(n, ho, wo, 16 * c))
    return jnp.concatenate(pieces, axis=-1).reshape(n * ho * wo, 64 * c)


def prepare_dqn(params, batch, h, w):
    """One-time packing of weights / BN params / gather matrices."""
    c = FRAME_STACK
    ho1, wo1 = _conv_out(h, 8, 4), _conv_out(w, 8, 4)
    ho2, wo2 = _conv_out(ho1, 4, 2), _conv_out(wo1, 4, 2)
    ho3, wo3 = _conv_out(ho2, 3, 1), _conv_out(wo2, 3, 1)
    assert h % 4 == 0 and w % 4 == 0, "conv1 block im2col needs H, W % 4 == 0"
    # TODO(synk): conv3 spatial outputs > 1x1 would need a channel-major flatten
    # (extra gather) before the MLP head; the 36x36 config here yields 1x1.
    assert ho3 == 1 and wo3 == 1, "fused flatten assumes 1x1 conv3 output"

    # conv1 weight permuted to the (bi, bj, di, dj, c) patch-column order.
    w1m = (params["w1"].reshape(2, 4, 2, 4, c, 32)
           .transpose(0, 2, 1, 3, 4, 5).reshape(8 * 8 * c, 32))
    return dict(
        w1m=w1m,
        g1=params["g1"].reshape(1, -1), bt1=params["beta1"].reshape(1, -1),
        G2=_gather_mats(batch, ho1, wo1, 4, 2),
        w2s=params["w2"].reshape(16, 32, 64),
        g2=params["g2"].reshape(1, -1), bt2=params["beta2"].reshape(1, -1),
        G3=_gather_mats(batch, ho2, wo2, 3, 1),
        w3s=params["w3"].reshape(9, 64, 64),
        g3=params["g3"].reshape(1, -1), bt3=params["beta3"].reshape(1, -1),
        w4=params["w4"], b4=params["b4"].reshape(1, -1),
        w5=params["w5"], b5=params["b5"].reshape(1, -1),
    )


def dqn_forward_pallas(x_nchw, prep):
    n = x_nchw.shape[0]
    outputs = prep["w5"].shape[1]
    patches1 = conv1_patches(x_nchw.astype(jnp.float32))
    args = (patches1, prep["w1m"], prep["g1"], prep["bt1"],
            prep["G2"], prep["w2s"], prep["g2"], prep["bt2"],
            prep["G3"], prep["w3s"], prep["g3"], prep["bt3"],
            prep["w4"], prep["b4"], prep["w5"], prep["b5"])
    return pl.pallas_call(
        dqn_fused_kernel,
        out_shape=jax.ShapeDtypeStruct((n, outputs), jnp.float32),
        in_specs=[_vmem_spec()] * len(args),
        out_specs=_vmem_spec(),
    )(*args)


# ---------------------------- pure-JAX reference -----------------------------

def dqn_forward_ref(x_nchw, params, mxu_dtype=jnp.bfloat16):
    """PyTorch-faithful reference (conv bias included, two-pass BN variance).
    mxu_dtype=bfloat16 mirrors the kernel's MXU rounding; jnp.float32 gives the
    exact f32 PyTorch math."""
    x = jnp.transpose(x_nchw, (0, 2, 3, 1)).astype(jnp.float32)
    prec = jax.lax.Precision.HIGHEST if mxu_dtype == jnp.float32 else None

    def block(x, w, b, g, bt, s):
        y = jax.lax.conv_general_dilated(
            x.astype(mxu_dtype), w.astype(mxu_dtype), window_strides=(s, s),
            padding="VALID", dimension_numbers=("NHWC", "HWIO", "NHWC"),
            preferred_element_type=jnp.float32, precision=prec)
        y = y + b[None, None, None, :]
        m = jnp.mean(y, axis=(0, 1, 2), keepdims=True)
        v = jnp.mean((y - m) ** 2, axis=(0, 1, 2), keepdims=True)
        y = (y - m) * jax.lax.rsqrt(v + BN_EPS) * g[None, None, None, :] \
            + bt[None, None, None, :]
        return jnp.maximum(y, 0.0)

    x = block(x, params["w1"], params["b1"], params["g1"], params["beta1"], 4)
    x = block(x, params["w2"], params["b2"], params["g2"], params["beta2"], 2)
    x = block(x, params["w3"], params["b3"], params["g3"], params["beta3"], 1)
    flat = jnp.transpose(x, (0, 3, 1, 2)).reshape(x.shape[0], -1)
    h = jnp.maximum(
        jnp.dot(flat.astype(mxu_dtype), params["w4"].astype(mxu_dtype),
                preferred_element_type=jnp.float32, precision=prec)
        + params["b4"], 0.0)
    return jnp.dot(h.astype(mxu_dtype), params["w5"].astype(mxu_dtype),
                   preferred_element_type=jnp.float32, precision=prec) + params["b5"]


# ------------------------------ parameter init --------------------------------

def init_params(key, h, w, outputs):
    convw = _conv_out(_conv_out(_conv_out(w, 8, 4), 4, 2), 3, 1)
    convh = _conv_out(_conv_out(_conv_out(h, 8, 4), 4, 2), 3, 1)
    lin_in = convw * convh * 64
    keys = jax.random.split(key, 16)

    def nrm(k, shape, scale):
        return (scale * jax.random.normal(k, shape)).astype(jnp.float32)

    return dict(
        # conv weights stored as HWIO ([kh, kw, cin, cout])
        w1=nrm(keys[0], (8, 8, FRAME_STACK, 32), 0.05), b1=nrm(keys[1], (32,), 0.05),
        g1=1.0 + nrm(keys[2], (32,), 0.1),              beta1=nrm(keys[3], (32,), 0.1),
        w2=nrm(keys[4], (4, 4, 32, 64), 0.05),          b2=nrm(keys[5], (64,), 0.05),
        g2=1.0 + nrm(keys[6], (64,), 0.1),              beta2=nrm(keys[7], (64,), 0.1),
        w3=nrm(keys[8], (3, 3, 64, 64), 0.05),          b3=nrm(keys[9], (64,), 0.05),
        g3=1.0 + nrm(keys[10], (64,), 0.1),             beta3=nrm(keys[11], (64,), 0.1),
        # linear weights stored as [in, out]
        w4=nrm(keys[12], (lin_in, 512), 0.05),          b4=nrm(keys[13], (512,), 0.05),
        w5=nrm(keys[14], (512, outputs), 0.05),         b5=nrm(keys[15], (outputs,), 0.05),
    )


# ------------------------------------ main ------------------------------------

if __name__ == "__main__":
    H = W = 36          # -> conv feature sizes 8 -> 3 -> 1 ; linear_input_size = 64
    BATCH = 2
    OUTPUTS = 6

    key = jax.random.PRNGKey(0)
    pkey, xkey = jax.random.split(key)
    params = init_params(pkey, H, W, OUTPUTS)
    x = jax.random.normal(xkey, (BATCH, FRAME_STACK, H, W), dtype=jnp.float32)

    prep = prepare_dqn(params, BATCH, H, W)       # one-time weight packing
    fwd = jax.jit(dqn_forward_pallas)
    out = jax.block_until_ready(fwd(x, prep))

    # Matched-precision reference (bf16 MXU inputs, f32 accumulation -- the same
    # rounding as the kernel) validates the kernel implementation tightly; the
    # bf16 MXU path (vs the f32 PyTorch module) is an intentional precision
    # tradeoff recommended by the perf review.
    ref = jax.block_until_ready(dqn_forward_ref(x, params, jnp.bfloat16))
    assert out.shape == (BATCH, OUTPUTS), out.shape
    assert bool(jnp.all(jnp.isfinite(out)))
    assert jnp.allclose(out, ref, atol=2e-3, rtol=2e-3), \
        f"max abs err {jnp.max(jnp.abs(out - ref))}"

    print("KERNEL_OK")
</pallas_src>

<mosaic_0001>
module attributes {stable_mosaic.version = 11 : i64} {
  func.func @dqn_fused_kernel(%arg0: memref<128x256xf32, #tpu.memory_space<vmem>>, %arg1: memref<256x32xf32, #tpu.memory_space<vmem>>, %arg2: memref<1x32xf32, #tpu.memory_space<vmem>>, %arg3: memref<1x32xf32, #tpu.memory_space<vmem>>, %arg4: memref<16x18x128xf32, #tpu.memory_space<vmem>>, %arg5: memref<16x32x64xf32, #tpu.memory_space<vmem>>, %arg6: memref<1x64xf32, #tpu.memory_space<vmem>>, %arg7: memref<1x64xf32, #tpu.memory_space<vmem>>, %arg8: memref<9x2x18xf32, #tpu.memory_space<vmem>>, %arg9: memref<9x64x64xf32, #tpu.memory_space<vmem>>, %arg10: memref<1x64xf32, #tpu.memory_space<vmem>>, %arg11: memref<1x64xf32, #tpu.memory_space<vmem>>, %arg12: memref<64x512xf32, #tpu.memory_space<vmem>>, %arg13: memref<1x512xf32, #tpu.memory_space<vmem>>, %arg14: memref<512x6xf32, #tpu.memory_space<vmem>>, %arg15: memref<1x6xf32, #tpu.memory_space<vmem>>, %arg16: memref<2x6xf32, #tpu.memory_space<vmem>>) attributes {dimension_semantics = [], scalar_prefetch = 0 : i64, scratch_operands = 0 : i64, tpu.core_type = #tpu.core_type<tc>} {
    %c0 = arith.constant 0 : index
    %c0_0 = arith.constant 0 : index
    %0 = vector.load %arg0[%c0, %c0_0] : memref<128x256xf32, #tpu.memory_space<vmem>>, vector<128x256xf32>
    %c0_1 = arith.constant 0 : index
    %c0_2 = arith.constant 0 : index
    %1 = vector.load %arg1[%c0_1, %c0_2] : memref<256x32xf32, #tpu.memory_space<vmem>>, vector<256x32xf32>
    %2 = arith.truncf %0 : vector<128x256xf32> to vector<128x256xbf16>
    %3 = arith.truncf %1 : vector<256x32xf32> to vector<256x32xbf16>
    %cst = arith.constant dense<0.000000e+00> : vector<128x32xf32>
    %4 = tpu.matmul %2, %3, %cst {dimension_numbers = #tpu.dot_dimension_numbers<[1], [0], [0], [1], [0, 0, 1, 1], [], []>} : vector<128x256xbf16>, vector<256x32xbf16>, vector<128x32xf32> -> vector<128x32xf32>
    %c0_3 = arith.constant 0 : index
    %c0_4 = arith.constant 0 : index
    %5 = vector.load %arg2[%c0_3, %c0_4] : memref<1x32xf32, #tpu.memory_space<vmem>>, vector<1x32xf32>
    %c0_5 = arith.constant 0 : index
    %c0_6 = arith.constant 0 : index
    %6 = vector.load %arg3[%c0_5, %c0_6] : memref<1x32xf32, #tpu.memory_space<vmem>>, vector<1x32xf32>
    %cst_7 = arith.constant dense<0.000000e+00> : vector<32xf32>
    %7 = vector.multi_reduction <add>, %4, %cst_7 [0] : vector<128x32xf32> to vector<32xf32>
    %8 = vector.shape_cast %7 : vector<32xf32> to vector<1x32xf32>
    %cst_8 = arith.constant 1.280000e+02 : f32
    %9 = vector.broadcast %cst_8 : f32 to vector<1x32xf32>
    %10 = arith.divf %8, %9 : vector<1x32xf32>
    %11 = arith.mulf %4, %4 : vector<128x32xf32>
    %cst_9 = arith.constant dense<0.000000e+00> : vector<32xf32>
    %12 = vector.multi_reduction <add>, %11, %cst_9 [0] : vector<128x32xf32> to vector<32xf32>
    %13 = vector.shape_cast %12 : vector<32xf32> to vector<1x32xf32>
    %cst_10 = arith.constant 1.280000e+02 : f32
    %14 = vector.broadcast %cst_10 : f32 to vector<1x32xf32>
    %15 = arith.divf %13, %14 : vector<1x32xf32>
    %16 = arith.mulf %10, %10 : vector<1x32xf32>
    %17 = arith.subf %15, %16 : vector<1x32xf32>
    %cst_11 = arith.constant 0.000000e+00 : f32
    %18 = vector.broadcast %cst_11 : f32 to vector<1x32xf32>
    %19 = arith.maximumf %17, %18 : vector<1x32xf32>
    %20 = vector.broadcast %10 : vector<1x32xf32> to vector<128x32xf32>
    %21 = arith.subf %4, %20 : vector<128x32xf32>
    %cst_12 = arith.constant 9.99999974E-6 : f32
    %22 = vector.broadcast %cst_12 : f32 to vector<1x32xf32>
    %23 = arith.addf %19, %22 : vector<1x32xf32>
    %24 = math.rsqrt %23 : vector<1x32xf32>
    %25 = arith.mulf %24, %5 : vector<1x32xf32>
    %26 = vector.broadcast %25 : vector<1x32xf32> to vector<128x32xf32>
    %27 = arith.mulf %21, %26 : vector<128x32xf32>
    %28 = vector.broadcast %6 : vector<1x32xf32> to vector<128x32xf32>
    %29 = arith.addf %27, %28 : vector<128x32xf32>
    %cst_13 = arith.constant 0.000000e+00 : f32
    %30 = vector.broadcast %cst_13 : f32 to vector<128x32xf32>
    %31 = arith.maximumf %29, %30 : vector<128x32xf32>
    %cst_14 = arith.constant 0.000000e+00 : f32
    %32 = vector.broadcast %cst_14 : f32 to vector<18x64xf32>
    %c0_15 = arith.constant 0 : index
    %c0_16 = arith.constant 0 : index
    %c0_17 = arith.constant 0 : index
    %33 = vector.load %arg4[%c0_15, %c0_16, %c0_17] : memref<16x18x128xf32, #tpu.memory_space<vmem>>, vector<1x18x128xf32>
    %34 = vector.shape_cast %33 : vector<1x18x128xf32> to vector<18x128xf32>
    %35 = arith.truncf %34 : vector<18x128xf32> to vector<18x128xbf16>
    %36 = arith.truncf %31 : vector<128x32xf32> to vector<128x32xbf16>
    %cst_18 = arith.constant dense<0.000000e+00> : vector<18x32xf32>
    %37 = tpu.matmul %35, %36, %cst_18 {dimension_numbers = #tpu.dot_dimension_numbers<[1], [0], [0], [1], [0, 0, 1, 1], [], []>} : vector<18x128xbf16>, vector<128x32xbf16>, vector<18x32xf32> -> vector<18x32xf32>
    %c0_19 = arith.constant 0 : index
    %c0_20 = arith.constant 0 : index
    %c0_21 = arith.constant 0 : index
    %38 = vector.load %arg5[%c0_19, %c0_20, %c0_21] : memref<16x32x64xf32, #tpu.memory_space<vmem>>, vector<1x32x64xf32>
    %39 = vector.shape_cast %38 : vector<1x32x64xf32> to vector<32x64xf32>
    %40 = arith.truncf %37 : vector<18x32xf32> to vector<18x32xbf16>
    %41 = arith.truncf %39 : vector<32x64xf32> to vector<32x64xbf16>
    %cst_22 = arith.constant dense<0.000000e+00> : vector<18x64xf32>
    %42 = tpu.matmul %40, %41, %cst_22 {dimension_numbers = #tpu.dot_dimension_numbers<[1], [0], [0], [1], [0, 0, 1, 1], [], []>} : vector<18x32xbf16>, vector<32x64xbf16>, vector<18x64xf32> -> vector<18x64xf32>
    %43 = arith.addf %32, %42 : vector<18x64xf32>
    %c1 = arith.constant 1 : index
    %c0_23 = arith.constant 0 : index
    %c0_24 = arith.constant 0 : index
    %44 = vector.load %arg4[%c1, %c0_23, %c0_24] : memref<16x18x128xf32, #tpu.memory_space<vmem>>, vector<1x18x128xf32>
    %45 = vector.shape_cast %44 : vector<1x18x128xf32> to vector<18x128xf32>
    %46 = arith.truncf %45 : vector<18x128xf32> to vector<18x128xbf16>
    %47 = arith.truncf %31 : vector<128x32xf32> to vector<128x32xbf16>
    %cst_25 = arith.constant dense<0.000000e+00> : vector<18x32xf32>
    %48 = tpu.matmul %46, %47, %cst_25 {dimension_numbers = #tpu.dot_dimension_numbers<[1], [0], [0], [1], [0, 0, 1, 1], [], []>} : vector<18x128xbf16>, vector<128x32xbf16>, vector<18x32xf32> -> vector<18x32xf32>
    %c1_26 = arith.constant 1 : index
    %c0_27 = arith.constant 0 : index
    %c0_28 = arith.constant 0 : index
    %49 = vector.load %arg5[%c1_26, %c0_27, %c0_28] : memref<16x32x64xf32, #tpu.memory_space<vmem>>, vector<1x32x64xf32>
    %50 = vector.shape_cast %49 : vector<1x32x64xf32> to vector<32x64xf32>
    %51 = arith.truncf %48 : vector<18x32xf32> to vector<18x32xbf16>
    %52 = arith.truncf %50 : vector<32x64xf32> to vector<32x64xbf16>
    %cst_29 = arith.constant dense<0.000000e+00> : vector<18x64xf32>
    %53 = tpu.matmul %51, %52, %cst_29 {dimension_numbers = #tpu.dot_dimension_numbers<[1], [0], [0], [1], [0, 0, 1, 1], [], []>} : vector<18x32xbf16>, vector<32x64xbf16>, vector<18x64xf32> -> vector<18x64xf32>
    %54 = arith.addf %43, %53 : vector<18x64xf32>
    %c2 = arith.constant 2 : index
    %c0_30 = arith.constant 0 : index
    %c0_31 = arith.constant 0 : index
    %55 = vector.load %arg4[%c2, %c0_30, %c0_31] : memref<16x18x128xf32, #tpu.memory_space<vmem>>, vector<1x18x128xf32>
    %56 = vector.shape_cast %55 : vector<1x18x128xf32> to vector<18x128xf32>
    %57 = arith.truncf %56 : vector<18x128xf32> to vector<18x128xbf16>
    %58 = arith.truncf %31 : vector<128x32xf32> to vector<128x32xbf16>
    %cst_32 = arith.constant dense<0.000000e+00> : vector<18x32xf32>
    %59 = tpu.matmul %57, %58, %cst_32 {dimension_numbers = #tpu.dot_dimension_numbers<[1], [0], [0], [1], [0, 0, 1, 1], [], []>} : vector<18x128xbf16>, vector<128x32xbf16>, vector<18x32xf32> -> vector<18x32xf32>
    %c2_33 = arith.constant 2 : index
    %c0_34 = arith.constant 0 : index
    %c0_35 = arith.constant 0 : index
    %60 = vector.load %arg5[%c2_33, %c0_34, %c0_35] : memref<16x32x64xf32, #tpu.memory_space<vmem>>, vector<1x32x64xf32>
    %61 = vector.shape_cast %60 : vector<1x32x64xf32> to vector<32x64xf32>
    %62 = arith.truncf %59 : vector<18x32xf32> to vector<18x32xbf16>
    %63 = arith.truncf %61 : vector<32x64xf32> to vector<32x64xbf16>
    %cst_36 = arith.constant dense<0.000000e+00> : vector<18x64xf32>
    %64 = tpu.matmul %62, %63, %cst_36 {dimension_numbers = #tpu.dot_dimension_numbers<[1], [0], [0], [1], [0, 0, 1, 1], [], []>} : vector<18x32xbf16>, vector<32x64xbf16>, vector<18x64xf32> -> vector<18x64xf32>
    %65 = arith.addf %54, %64 : vector<18x64xf32>
    %c3 = arith.constant 3 : index
    %c0_37 = arith.constant 0 : index
    %c0_38 = arith.constant 0 : index
    %66 = vector.load %arg4[%c3, %c0_37, %c0_38] : memref<16x18x128xf32, #tpu.memory_space<vmem>>, vector<1x18x128xf32>
    %67 = vector.shape_cast %66 : vector<1x18x128xf32> to vector<18x128xf32>
    %68 = arith.truncf %67 : vector<18x128xf32> to vector<18x128xbf16>
    %69 = arith.truncf %31 : vector<128x32xf32> to vector<128x32xbf16>
    %cst_39 = arith.constant dense<0.000000e+00> : vector<18x32xf32>
    %70 = tpu.matmul %68, %69, %cst_39 {dimension_numbers = #tpu.dot_dimension_numbers<[1], [0], [0], [1], [0, 0, 1, 1], [], []>} : vector<18x128xbf16>, vector<128x32xbf16>, vector<18x32xf32> -> vector<18x32xf32>
    %c3_40 = arith.constant 3 : index
    %c0_41 = arith.constant 0 : index
    %c0_42 = arith.constant 0 : index
    %71 = vector.load %arg5[%c3_40, %c0_41, %c0_42] : memref<16x32x64xf32, #tpu.memory_space<vmem>>, vector<1x32x64xf32>
    %72 = vector.shape_cast %71 : vector<1x32x64xf32> to vector<32x64xf32>
    %73 = arith.truncf %70 : vector<18x32xf32> to vector<18x32xbf16>
    %74 = arith.truncf %72 : vector<32x64xf32> to vector<32x64xbf16>
    %cst_43 = arith.constant dense<0.000000e+00> : vector<18x64xf32>
    %75 = tpu.matmul %73, %74, %cst_43 {dimension_numbers = #tpu.dot_dimension_numbers<[1], [0], [0], [1], [0, 0, 1, 1], [], []>} : vector<18x32xbf16>, vector<32x64xbf16>, vector<18x64xf32> -> vector<18x64xf32>
    %76 = arith.addf %65, %75 : vector<18x64xf32>
    %c4 = arith.constant 4 : index
    %c0_44 = arith.constant 0 : index
    %c0_45 = arith.constant 0 : index
    %77 = vector.load %arg4[%c4, %c0_44, %c0_45] : memref<16x18x128xf32, #tpu.memory_space<vmem>>, vector<1x18x128xf32>
    %78 = vector.shape_cast %77 : vector<1x18x128xf32> to vector<18x128xf32>
    %79 = arith.truncf %78 : vector<18x128xf32> to vector<18x128xbf16>
    %80 = arith.truncf %31 : vector<128x32xf32> to vector<128x32xbf16>
    %cst_46 = arith.constant dense<0.000000e+00> : vector<18x32xf32>
    %81 = tpu.matmul %79, %80, %cst_46 {dimension_numbers = #tpu.dot_dimension_numbers<[1], [0], [0], [1], [0, 0, 1, 1], [], []>} : vector<18x128xbf16>, vector<128x32xbf16>, vector<18x32xf32> -> vector<18x32xf32>
    %c4_47 = arith.constant 4 : index
    %c0_48 = arith.constant 0 : index
    %c0_49 = arith.constant 0 : index
    %82 = vector.load %arg5[%c4_47, %c0_48, %c0_49] : memref<16x32x64xf32, #tpu.memory_space<vmem>>, vector<1x32x64xf32>
    %83 = vector.shape_cast %82 : vector<1x32x64xf32> to vector<32x64xf32>
    %84 = arith.truncf %81 : vector<18x32xf32> to vector<18x32xbf16>
    %85 = arith.truncf %83 : vector<32x64xf32> to vector<32x64xbf16>
    %cst_50 = arith.constant dense<0.000000e+00> : vector<18x64xf32>
    %86 = tpu.matmul %84, %85, %cst_50 {dimension_numbers = #tpu.dot_dimension_numbers<[1], [0], [0], [1], [0, 0, 1, 1], [], []>} : vector<18x32xbf16>, vector<32x64xbf16>, vector<18x64xf32> -> vector<18x64xf32>
    %87 = arith.addf %76, %86 : vector<18x64xf32>
    %c5 = arith.constant 5 : index
    %c0_51 = arith.constant 0 : index
    %c0_52 = arith.constant 0 : index
    %88 = vector.load %arg4[%c5, %c0_51, %c0_52] : memref<16x18x128xf32, #tpu.memory_space<vmem>>, vector<1x18x128xf32>
    %89 = vector.shape_cast %88 : vector<1x18x128xf32> to vector<18x128xf32>
    %90 = arith.truncf %89 : vector<18x128xf32> to vector<18x128xbf16>
    %91 = arith.truncf %31 : vector<128x32xf32> to vector<128x32xbf16>
    %cst_53 = arith.constant dense<0.000000e+00> : vector<18x32xf32>
    %92 = tpu.matmul %90, %91, %cst_53 {dimension_numbers = #tpu.dot_dimension_numbers<[1], [0], [0], [1], [0, 0, 1, 1], [], []>} : vector<18x128xbf16>, vector<128x32xbf16>, vector<18x32xf32> -> vector<18x32xf32>
    %c5_54 = arith.constant 5 : index
    %c0_55 = arith.constant 0 : index
    %c0_56 = arith.constant 0 : index
    %93 = vector.load %arg5[%c5_54, %c0_55, %c0_56] : memref<16x32x64xf32, #tpu.memory_space<vmem>>, vector<1x32x64xf32>
    %94 = vector.shape_cast %93 : vector<1x32x64xf32> to vector<32x64xf32>
    %95 = arith.truncf %92 : vector<18x32xf32> to vector<18x32xbf16>
    %96 = arith.truncf %94 : vector<32x64xf32> to vector<32x64xbf16>
    %cst_57 = arith.constant dense<0.000000e+00> : vector<18x64xf32>
    %97 = tpu.matmul %95, %96, %cst_57 {dimension_numbers = #tpu.dot_dimension_numbers<[1], [0], [0], [1], [0, 0, 1, 1], [], []>} : vector<18x32xbf16>, vector<32x64xbf16>, vector<18x64xf32> -> vector<18x64xf32>
    %98 = arith.addf %87, %97 : vector<18x64xf32>
    %c6 = arith.constant 6 : index
    %c0_58 = arith.constant 0 : index
    %c0_59 = arith.constant 0 : index
    %99 = vector.load %arg4[%c6, %c0_58, %c0_59] : memref<16x18x128xf32, #tpu.memory_space<vmem>>, vector<1x18x128xf32>
    %100 = vector.shape_cast %99 : vector<1x18x128xf32> to vector<18x128xf32>
    %101 = arith.truncf %100 : vector<18x128xf32> to vector<18x128xbf16>
    %102 = arith.truncf %31 : vector<128x32xf32> to vector<128x32xbf16>
    %cst_60 = arith.constant dense<0.000000e+00> : vector<18x32xf32>
    %103 = tpu.matmul %101, %102, %cst_60 {dimension_numbers = #tpu.dot_dimension_numbers<[1], [0], [0], [1], [0, 0, 1, 1], [], []>} : vector<18x128xbf16>, vector<128x32xbf16>, vector<18x32xf32> -> vector<18x32xf32>
    %c6_61 = arith.constant 6 : index
    %c0_62 = arith.constant 0 : index
    %c0_63 = arith.constant 0 : index
    %104 = vector.load %arg5[%c6_61, %c0_62, %c0_63] : memref<16x32x64xf32, #tpu.memory_space<vmem>>, vector<1x32x64xf32>
    %105 = vector.shape_cast %104 : vector<1x32x64xf32> to vector<32x64xf32>
    %106 = arith.truncf %103 : vector<18x32xf32> to vector<18x32xbf16>
    %107 = arith.truncf %105 : vector<32x64xf32> to vector<32x64xbf16>
    %cst_64 = arith.constant dense<0.000000e+00> : vector<18x64xf32>
    %108 = tpu.matmul %106, %107, %cst_64 {dimension_numbers = #tpu.dot_dimension_numbers<[1], [0], [0], [1], [0, 0, 1, 1], [], []>} : vector<18x32xbf16>, vector<32x64xbf16>, vector<18x64xf32> -> vector<18x64xf32>
    %109 = arith.addf %98, %108 : vector<18x64xf32>
    %c7 = arith.constant 7 : index
    %c0_65 = arith.constant 0 : index
    %c0_66 = arith.constant 0 : index
    %110 = vector.load %arg4[%c7, %c0_65, %c0_66] : memref<16x18x128xf32, #tpu.memory_space<vmem>>, vector<1x18x128xf32>
    %111 = vector.shape_cast %110 : vector<1x18x128xf32> to vector<18x128xf32>
    %112 = arith.truncf %111 : vector<18x128xf32> to vector<18x128xbf16>
    %113 = arith.truncf %31 : vector<128x32xf32> to vector<128x32xbf16>
    %cst_67 = arith.constant dense<0.000000e+00> : vector<18x32xf32>
    %114 = tpu.matmul %112, %113, %cst_67 {dimension_numbers = #tpu.dot_dimension_numbers<[1], [0], [0], [1], [0, 0, 1, 1], [], []>} : vector<18x128xbf16>, vector<128x32xbf16>, vector<18x32xf32> -> vector<18x32xf32>
    %c7_68 = arith.constant 7 : index
    %c0_69 = arith.constant 0 : index
    %c0_70 = arith.constant 0 : index
    %115 = vector.load %arg5[%c7_68, %c0_69, %c0_70] : memref<16x32x64xf32, #tpu.memory_space<vmem>>, vector<1x32x64xf32>
    %116 = vector.shape_cast %115 : vector<1x32x64xf32> to vector<32x64xf32>
    %117 = arith.truncf %114 : vector<18x32xf32> to vector<18x32xbf16>
    %118 = arith.truncf %116 : vector<32x64xf32> to vector<32x64xbf16>
    %cst_71 = arith.constant dense<0.000000e+00> : vector<18x64xf32>
    %119 = tpu.matmul %117, %118, %cst_71 {dimension_numbers = #tpu.dot_dimension_numbers<[1], [0], [0], [1], [0, 0, 1, 1], [], []>} : vector<18x32xbf16>, vector<32x64xbf16>, vector<18x64xf32> -> vector<18x64xf32>
    %120 = arith.addf %109, %119 : vector<18x64xf32>
    %c8 = arith.constant 8 : index
    %c0_72 = arith.constant 0 : index
    %c0_73 = arith.constant 0 : index
    %121 = vector.load %arg4[%c8, %c0_72, %c0_73] : memref<16x18x128xf32, #tpu.memory_space<vmem>>, vector<1x18x128xf32>
    %122 = vector.shape_cast %121 : vector<1x18x128xf32> to vector<18x128xf32>
    %123 = arith.truncf %122 : vector<18x128xf32> to vector<18x128xbf16>
    %124 = arith.truncf %31 : vector<128x32xf32> to vector<128x32xbf16>
    %cst_74 = arith.constant dense<0.000000e+00> : vector<18x32xf32>
    %125 = tpu.matmul %123, %124, %cst_74 {dimension_numbers = #tpu.dot_dimension_numbers<[1], [0], [0], [1], [0, 0, 1, 1], [], []>} : vector<18x128xbf16>, vector<128x32xbf16>, vector<18x32xf32> -> vector<18x32xf32>
    %c8_75 = arith.constant 8 : index
    %c0_76 = arith.constant 0 : index
    %c0_77 = arith.constant 0 : index
    %126 = vector.load %arg5[%c8_75, %c0_76, %c0_77] : memref<16x32x64xf32, #tpu.memory_space<vmem>>, vector<1x32x64xf32>
    %127 = vector.shape_cast %126 : vector<1x32x64xf32> to vector<32x64xf32>
    %128 = arith.truncf %125 : vector<18x32xf32> to vector<18x32xbf16>
    %129 = arith.truncf %127 : vector<32x64xf32> to vector<32x64xbf16>
    %cst_78 = arith.constant dense<0.000000e+00> : vector<18x64xf32>
    %130 = tpu.matmul %128, %129, %cst_78 {dimension_numbers = #tpu.dot_dimension_numbers<[1], [0], [0], [1], [0, 0, 1, 1], [], []>} : vector<18x32xbf16>, vector<32x64xbf16>, vector<18x64xf32> -> vector<18x64xf32>
    %131 = arith.addf %120, %130 : vector<18x64xf32>
    %c9 = arith.constant 9 : index
    %c0_79 = arith.constant 0 : index
    %c0_80 = arith.constant 0 : index
    %132 = vector.load %arg4[%c9, %c0_79, %c0_80] : memref<16x18x128xf32, #tpu.memory_space<vmem>>, vector<1x18x128xf32>
    %133 = vector.shape_cast %132 : vector<1x18x128xf32> to vector<18x128xf32>
    %134 = arith.truncf %133 : vector<18x128xf32> to vector<18x128xbf16>
    %135 = arith.truncf %31 : vector<128x32xf32> to vector<128x32xbf16>
    %cst_81 = arith.constant dense<0.000000e+00> : vector<18x32xf32>
    %136 = tpu.matmul %134, %135, %cst_81 {dimension_numbers = #tpu.dot_dimension_numbers<[1], [0], [0], [1], [0, 0, 1, 1], [], []>} : vector<18x128xbf16>, vector<128x32xbf16>, vector<18x32xf32> -> vector<18x32xf32>
    %c9_82 = arith.constant 9 : index
    %c0_83 = arith.constant 0 : index
    %c0_84 = arith.constant 0 : index
    %137 = vector.load %arg5[%c9_82, %c0_83, %c0_84] : memref<16x32x64xf32, #tpu.memory_space<vmem>>, vector<1x32x64xf32>
    %138 = vector.shape_cast %137 : vector<1x32x64xf32> to vector<32x64xf32>
    %139 = arith.truncf %136 : vector<18x32xf32> to vector<18x32xbf16>
    %140 = arith.truncf %138 : vector<32x64xf32> to vector<32x64xbf16>
    %cst_85 = arith.constant dense<0.000000e+00> : vector<18x64xf32>
    %141 = tpu.matmul %139, %140, %cst_85 {dimension_numbers = #tpu.dot_dimension_numbers<[1], [0], [0], [1], [0, 0, 1, 1], [], []>} : vector<18x32xbf16>, vector<32x64xbf16>, vector<18x64xf32> -> vector<18x64xf32>
    %142 = arith.addf %131, %141 : vector<18x64xf32>
    %c10 = arith.constant 10 : index
    %c0_86 = arith.constant 0 : index
    %c0_87 = arith.constant 0 : index
    %143 = vector.load %arg4[%c10, %c0_86, %c0_87] : memref<16x18x128xf32, #tpu.memory_space<vmem>>, vector<1x18x128xf32>
    %144 = vector.shape_cast %143 : vector<1x18x128xf32> to vector<18x128xf32>
    %145 = arith.truncf %144 : vector<18x128xf32> to vector<18x128xbf16>
    %146 = arith.truncf %31 : vector<128x32xf32> to vector<128x32xbf16>
    %cst_88 = arith.constant dense<0.000000e+00> : vector<18x32xf32>
    %147 = tpu.matmul %145, %146, %cst_88 {dimension_numbers = #tpu.dot_dimension_numbers<[1], [0], [0], [1], [0, 0, 1, 1], [], []>} : vector<18x128xbf16>, vector<128x32xbf16>, vector<18x32xf32> -> vector<18x32xf32>
    %c10_89 = arith.constant 10 : index
    %c0_90 = arith.constant 0 : index
    %c0_91 = arith.constant 0 : index
    %148 = vector.load %arg5[%c10_89, %c0_90, %c0_91] : memref<16x32x64xf32, #tpu.memory_space<vmem>>, vector<1x32x64xf32>
    %149 = vector.shape_cast %148 : vector<1x32x64xf32> to vector<32x64xf32>
    %150 = arith.truncf %147 : vector<18x32xf32> to vector<18x32xbf16>
    %151 = arith.truncf %149 : vector<32x64xf32> to vector<32x64xbf16>
    %cst_92 = arith.constant dense<0.000000e+00> : vector<18x64xf32>
    %152 = tpu.matmul %150, %151, %cst_92 {dimension_numbers = #tpu.dot_dimension_numbers<[1], [0], [0], [1], [0, 0, 1, 1], [], []>} : vector<18x32xbf16>, vector<32x64xbf16>, vector<18x64xf32> -> vector<18x64xf32>
    %153 = arith.addf %142, %152 : vector<18x64xf32>
    %c11 = arith.constant 11 : index
    %c0_93 = arith.constant 0 : index
    %c0_94 = arith.constant 0 : index
    %154 = vector.load %arg4[%c11, %c0_93, %c0_94] : memref<16x18x128xf32, #tpu.memory_space<vmem>>, vector<1x18x128xf32>
    %155 = vector.shape_cast %154 : vector<1x18x128xf32> to vector<18x128xf32>
    %156 = arith.truncf %155 : vector<18x128xf32> to vector<18x128xbf16>
    %157 = arith.truncf %31 : vector<128x32xf32> to vector<128x32xbf16>
    %cst_95 = arith.constant dense<0.000000e+00> : vector<18x32xf32>
    %158 = tpu.matmul %156, %157, %cst_95 {dimension_numbers = #tpu.dot_dimension_numbers<[1], [0], [0], [1], [0, 0, 1, 1], [], []>} : vector<18x128xbf16>, vector<128x32xbf16>, vector<18x32xf32> -> vector<18x32xf32>
    %c11_96 = arith.constant 11 : index
    %c0_97 = arith.constant 0 : index
    %c0_98 = arith.constant 0 : index
    %159 = vector.load %arg5[%c11_96, %c0_97, %c0_98] : memref<16x32x64xf32, #tpu.memory_space<vmem>>, vector<1x32x64xf32>
    %160 = vector.shape_cast %159 : vector<1x32x64xf32> to vector<32x64xf32>
    %161 = arith.truncf %158 : vector<18x32xf32> to vector<18x32xbf16>
    %162 = arith.truncf %160 : vector<32x64xf32> to vector<32x64xbf16>
    %cst_99 = arith.constant dense<0.000000e+00> : vector<18x64xf32>
    %163 = tpu.matmul %161, %162, %cst_99 {dimension_numbers = #tpu.dot_dimension_numbers<[1], [0], [0], [1], [0, 0, 1, 1], [], []>} : vector<18x32xbf16>, vector<32x64xbf16>, vector<18x64xf32> -> vector<18x64xf32>
    %164 = arith.addf %153, %163 : vector<18x64xf32>
    %c12 = arith.constant 12 : index
    %c0_100 = arith.constant 0 : index
    %c0_101 = arith.constant 0 : index
    %165 = vector.load %arg4[%c12, %c0_100, %c0_101] : memref<16x18x128xf32, #tpu.memory_space<vmem>>, vector<1x18x128xf32>
    %166 = vector.shape_cast %165 : vector<1x18x128xf32> to vector<18x128xf32>
    %167 = arith.truncf %166 : vector<18x128xf32> to vector<18x128xbf16>
    %168 = arith.truncf %31 : vector<128x32xf32> to vector<128x32xbf16>
    %cst_102 = arith.constant dense<0.000000e+00> : vector<18x32xf32>
    %169 = tpu.matmul %167, %168, %cst_102 {dimension_numbers = #tpu.dot_dimension_numbers<[1], [0], [0], [1], [0, 0, 1, 1], [], []>} : vector<18x128xbf16>, vector<128x32xbf16>, vector<18x32xf32> -> vector<18x32xf32>
    %c12_103 = arith.constant 12 : index
    %c0_104 = arith.constant 0 : index
    %c0_105 = arith.constant 0 : index
    %170 = vector.load %arg5[%c12_103, %c0_104, %c0_105] : memref<16x32x64xf32, #tpu.memory_space<vmem>>, vector<1x32x64xf32>
    %171 = vector.shape_cast %170 : vector<1x32x64xf32> to vector<32x64xf32>
    %172 = arith.truncf %169 : vector<18x32xf32> to vector<18x32xbf16>
    %173 = arith.truncf %171 : vector<32x64xf32> to vector<32x64xbf16>
    %cst_106 = arith.constant dense<0.000000e+00> : vector<18x64xf32>
    %174 = tpu.matmul %172, %173, %cst_106 {dimension_numbers = #tpu.dot_dimension_numbers<[1], [0], [0], [1], [0, 0, 1, 1], [], []>} : vector<18x32xbf16>, vector<32x64xbf16>, vector<18x64xf32> -> vector<18x64xf32>
    %175 = arith.addf %164, %174 : vector<18x64xf32>
    %c13 = arith.constant 13 : index
    %c0_107 = arith.constant 0 : index
    %c0_108 = arith.constant 0 : index
    %176 = vector.load %arg4[%c13, %c0_107, %c0_108] : memref<16x18x128xf32, #tpu.memory_space<vmem>>, vector<1x18x128xf32>
    %177 = vector.shape_cast %176 : vector<1x18x128xf32> to vector<18x128xf32>
    %178 = arith.truncf %177 : vector<18x128xf32> to vector<18x128xbf16>
    %179 = arith.truncf %31 : vector<128x32xf32> to vector<128x32xbf16>
    %cst_109 = arith.constant dense<0.000000e+00> : vector<18x32xf32>
    %180 = tpu.matmul %178, %179, %cst_109 {dimension_numbers = #tpu.dot_dimension_numbers<[1], [0], [0], [1], [0, 0, 1, 1], [], []>} : vector<18x128xbf16>, vector<128x32xbf16>, vector<18x32xf32> -> vector<18x32xf32>
    %c13_110 = arith.constant 13 : index
    %c0_111 = arith.constant 0 : index
    %c0_112 = arith.constant 0 : index
    %181 = vector.load %arg5[%c13_110, %c0_111, %c0_112] : memref<16x32x64xf32, #tpu.memory_space<vmem>>, vector<1x32x64xf32>
    %182 = vector.shape_cast %181 : vector<1x32x64xf32> to vector<32x64xf32>
    %183 = arith.truncf %180 : vector<18x32xf32> to vector<18x32xbf16>
    %184 = arith.truncf %182 : vector<32x64xf32> to vector<32x64xbf16>
    %cst_113 = arith.constant dense<0.000000e+00> : vector<18x64xf32>
    %185 = tpu.matmul %183, %184, %cst_113 {dimension_numbers = #tpu.dot_dimension_numbers<[1], [0], [0], [1], [0, 0, 1, 1], [], []>} : vector<18x32xbf16>, vector<32x64xbf16>, vector<18x64xf32> -> vector<18x64xf32>
    %186 = arith.addf %175, %185 : vector<18x64xf32>
    %c14 = arith.constant 14 : index
    %c0_114 = arith.constant 0 : index
    %c0_115 = arith.constant 0 : index
    %187 = vector.load %arg4[%c14, %c0_114, %c0_115] : memref<16x18x128xf32, #tpu.memory_space<vmem>>, vector<1x18x128xf32>
    %188 = vector.shape_cast %187 : vector<1x18x128xf32> to vector<18x128xf32>
    %189 = arith.truncf %188 : vector<18x128xf32> to vector<18x128xbf16>
    %190 = arith.truncf %31 : vector<128x32xf32> to vector<128x32xbf16>
    %cst_116 = arith.constant dense<0.000000e+00> : vector<18x32xf32>
    %191 = tpu.matmul %189, %190, %cst_116 {dimension_numbers = #tpu.dot_dimension_numbers<[1], [0], [0], [1], [0, 0, 1, 1], [], []>} : vector<18x128xbf16>, vector<128x32xbf16>, vector<18x32xf32> -> vector<18x32xf32>
    %c14_117 = arith.constant 14 : index
    %c0_118 = arith.constant 0 : index
    %c0_119 = arith.constant 0 : index
    %192 = vector.load %arg5[%c14_117, %c0_118, %c0_119] : memref<16x32x64xf32, #tpu.memory_space<vmem>>, vector<1x32x64xf32>
    %193 = vector.shape_cast %192 : vector<1x32x64xf32> to vector<32x64xf32>
    %194 = arith.truncf %191 : vector<18x32xf32> to vector<18x32xbf16>
    %195 = arith.truncf %193 : vector<32x64xf32> to vector<32x64xbf16>
    %cst_120 = arith.constant dense<0.000000e+00> : vector<18x64xf32>
    %196 = tpu.matmul %194, %195, %cst_120 {dimension_numbers = #tpu.dot_dimension_numbers<[1], [0], [0], [1], [0, 0, 1, 1], [], []>} : vector<18x32xbf16>, vector<32x64xbf16>, vector<18x64xf32> -> vector<18x64xf32>
    %197 = arith.addf %186, %196 : vector<18x64xf32>
    %c15 = arith.constant 15 : index
    %c0_121 = arith.constant 0 : index
    %c0_122 = arith.constant 0 : index
    %198 = vector.load %arg4[%c15, %c0_121, %c0_122] : memref<16x18x128xf32, #tpu.memory_space<vmem>>, vector<1x18x128xf32>
    %199 = vector.shape_cast %198 : vector<1x18x128xf32> to vector<18x128xf32>
    %200 = arith.truncf %199 : vector<18x128xf32> to vector<18x128xbf16>
    %201 = arith.truncf %31 : vector<128x32xf32> to vector<128x32xbf16>
    %cst_123 = arith.constant dense<0.000000e+00> : vector<18x32xf32>
    %202 = tpu.matmul %200, %201, %cst_123 {dimension_numbers = #tpu.dot_dimension_numbers<[1], [0], [0], [1], [0, 0, 1, 1], [], []>} : vector<18x128xbf16>, vector<128x32xbf16>, vector<18x32xf32> -> vector<18x32xf32>
    %c15_124 = arith.constant 15 : index
    %c0_125 = arith.constant 0 : index
    %c0_126 = arith.constant 0 : index
    %203 = vector.load %arg5[%c15_124, %c0_125, %c0_126] : memref<16x32x64xf32, #tpu.memory_space<vmem>>, vector<1x32x64xf32>
    %204 = vector.shape_cast %203 : vector<1x32x64xf32> to vector<32x64xf32>
    %205 = arith.truncf %202 : vector<18x32xf32> to vector<18x32xbf16>
    %206 = arith.truncf %204 : vector<32x64xf32> to vector<32x64xbf16>
    %cst_127 = arith.constant dense<0.000000e+00> : vector<18x64xf32>
    %207 = tpu.matmul %205, %206, %cst_127 {dimension_numbers = #tpu.dot_dimension_numbers<[1], [0], [0], [1], [0, 0, 1, 1], [], []>} : vector<18x32xbf16>, vector<32x64xbf16>, vector<18x64xf32> -> vector<18x64xf32>
    %208 = arith.addf %197, %207 : vector<18x64xf32>
    %c0_128 = arith.constant 0 : index
    %c0_129 = arith.constant 0 : index
    %209 = vector.load %arg6[%c0_128, %c0_129] : memref<1x64xf32, #tpu.memory_space<vmem>>, vector<1x64xf32>
    %c0_130 = arith.constant 0 : index
    %c0_131 = arith.constant 0 : index
    %210 = vector.load %arg7[%c0_130, %c0_131] : memref<1x64xf32, #tpu.memory_space<vmem>>, vector<1x64xf32>
    %cst_132 = arith.constant dense<0.000000e+00> : vector<64xf32>
    %211 = vector.multi_reduction <add>, %208, %cst_132 [0] : vector<18x64xf32> to vector<64xf32>
    %212 = vector.shape_cast %211 : vector<64xf32> to vector<1x64xf32>
    %cst_133 = arith.constant 1.800000e+01 : f32
    %213 = vector.broadcast %cst_133 : f32 to vector<1x64xf32>
    %214 = arith.divf %212, %213 : vector<1x64xf32>
    %215 = arith.mulf %208, %208 : vector<18x64xf32>
    %cst_134 = arith.constant dense<0.000000e+00> : vector<64xf32>
    %216 = vector.multi_reduction <add>, %215, %cst_134 [0] : vector<18x64xf32> to vector<64xf32>
    %217 = vector.shape_cast %216 : vector<64xf32> to vector<1x64xf32>
    %cst_135 = arith.constant 1.800000e+01 : f32
    %218 = vector.broadcast %cst_135 : f32 to vector<1x64xf32>
    %219 = arith.divf %217, %218 : vector<1x64xf32>
    %220 = arith.mulf %214, %214 : vector<1x64xf32>
    %221 = arith.subf %219, %220 : vector<1x64xf32>
    %cst_136 = arith.constant 0.000000e+00 : f32
    %222 = vector.broadcast %cst_136 : f32 to vector<1x64xf32>
    %223 = arith.maximumf %221, %222 : vector<1x64xf32>
    %224 = vector.broadcast %214 : vector<1x64xf32> to vector<18x64xf32>
    %225 = arith.subf %208, %224 : vector<18x64xf32>
    %cst_137 = arith.constant 9.99999974E-6 : f32
    %226 = vector.broadcast %cst_137 : f32 to vector<1x64xf32>
    %227 = arith.addf %223, %226 : vector<1x64xf32>
    %228 = math.rsqrt %227 : vector<1x64xf32>
    %229 = arith.mulf %228, %209 : vector<1x64xf32>
    %230 = vector.broadcast %229 : vector<1x64xf32> to vector<18x64xf32>
    %231 = arith.mulf %225, %230 : vector<18x64xf32>
    %232 = vector.broadcast %210 : vector<1x64xf32> to vector<18x64xf32>
    %233 = arith.addf %231, %232 : vector<18x64xf32>
    %cst_138 = arith.constant 0.000000e+00 : f32
    %234 = vector.broadcast %cst_138 : f32 to vector<18x64xf32>
    %235 = arith.maximumf %233, %234 : vector<18x64xf32>
    %cst_139 = arith.constant 0.000000e+00 : f32
    %236 = vector.broadcast %cst_139 : f32 to vector<2x64xf32>
    %c0_140 = arith.constant 0 : index
    %c0_141 = arith.constant 0 : index
    %c0_142 = arith.constant 0 : index
    %237 = vector.load %arg8[%c0_140, %c0_141, %c0_142] : memref<9x2x18xf32, #tpu.memory_space<vmem>>, vector<1x2x18xf32>
    %238 = vector.shape_cast %237 : vector<1x2x18xf32> to vector<2x18xf32>
    %239 = arith.truncf %238 : vector<2x18xf32> to vector<2x18xbf16>
    %240 = arith.truncf %235 : vector<18x64xf32> to vector<18x64xbf16>
    %cst_143 = arith.constant dense<0.000000e+00> : vector<2x64xf32>
    %241 = tpu.matmul %239, %240, %cst_143 {dimension_numbers = #tpu.dot_dimension_numbers<[1], [0], [0], [1], [0, 0, 1, 1], [], []>} : vector<2x18xbf16>, vector<18x64xbf16>, vector<2x64xf32> -> vector<2x64xf32>
    %c0_144 = arith.constant 0 : index
    %c0_145 = arith.constant 0 : index
    %c0_146 = arith.constant 0 : index
    %242 = vector.load %arg9[%c0_144, %c0_145, %c0_146] : memref<9x64x64xf32, #tpu.memory_space<vmem>>, vector<1x64x64xf32>
    %243 = vector.shape_cast %242 : vector<1x64x64xf32> to vector<64x64xf32>
    %244 = arith.truncf %241 : vector<2x64xf32> to vector<2x64xbf16>
    %245 = arith.truncf %243 : vector<64x64xf32> to vector<64x64xbf16>
    %cst_147 = arith.constant dense<0.000000e+00> : vector<2x64xf32>
    %246 = tpu.matmul %244, %245, %cst_147 {dimension_numbers = #tpu.dot_dimension_numbers<[1], [0], [0], [1], [0, 0, 1, 1], [], []>} : vector<2x64xbf16>, vector<64x64xbf16>, vector<2x64xf32> -> vector<2x64xf32>
    %247 = arith.addf %236, %246 : vector<2x64xf32>
    %c1_148 = arith.constant 1 : index
    %c0_149 = arith.constant 0 : index
    %c0_150 = arith.constant 0 : index
    %248 = vector.load %arg8[%c1_148, %c0_149, %c0_150] : memref<9x2x18xf32, #tpu.memory_space<vmem>>, vector<1x2x18xf32>
    %249 = vector.shape_cast %248 : vector<1x2x18xf32> to vector<2x18xf32>
    %250 = arith.truncf %249 : vector<2x18xf32> to vector<2x18xbf16>
    %251 = arith.truncf %235 : vector<18x64xf32> to vector<18x64xbf16>
    %cst_151 = arith.constant dense<0.000000e+00> : vector<2x64xf32>
    %252 = tpu.matmul %250, %251, %cst_151 {dimension_numbers = #tpu.dot_dimension_numbers<[1], [0], [0], [1], [0, 0, 1, 1], [], []>} : vector<2x18xbf16>, vector<18x64xbf16>, vector<2x64xf32> -> vector<2x64xf32>
    %c1_152 = arith.constant 1 : index
    %c0_153 = arith.constant 0 : index
    %c0_154 = arith.constant 0 : index
    %253 = vector.load %arg9[%c1_152, %c0_153, %c0_154] : memref<9x64x64xf32, #tpu.memory_space<vmem>>, vector<1x64x64xf32>
    %254 = vector.shape_cast %253 : vector<1x64x64xf32> to vector<64x64xf32>
    %255 = arith.truncf %252 : vector<2x64xf32> to vector<2x64xbf16>
    %256 = arith.truncf %254 : vector<64x64xf32> to vector<64x64xbf16>
    %cst_155 = arith.constant dense<0.000000e+00> : vector<2x64xf32>
    %257 = tpu.matmul %255, %256, %cst_155 {dimension_numbers = #tpu.dot_dimension_numbers<[1], [0], [0], [1], [0, 0, 1, 1], [], []>} : vector<2x64xbf16>, vector<64x64xbf16>, vector<2x64xf32> -> vector<2x64xf32>
    %258 = arith.addf %247, %257 : vector<2x64xf32>
    %c2_156 = arith.constant 2 : index
    %c0_157 = arith.constant 0 : index
    %c0_158 = arith.constant 0 : index
    %259 = vector.load %arg8[%c2_156, %c0_157, %c0_158] : memref<9x2x18xf32, #tpu.memory_space<vmem>>, vector<1x2x18xf32>
    %260 = vector.shape_cast %259 : vector<1x2x18xf32> to vector<2x18xf32>
    %261 = arith.truncf %260 : vector<2x18xf32> to vector<2x18xbf16>
    %262 = arith.truncf %235 : vector<18x64xf32> to vector<18x64xbf16>
    %cst_159 = arith.constant dense<0.000000e+00> : vector<2x64xf32>
    %263 = tpu.matmul %261, %262, %cst_159 {dimension_numbers = #tpu.dot_dimension_numbers<[1], [0], [0], [1], [0, 0, 1, 1], [], []>} : vector<2x18xbf16>, vector<18x64xbf16>, vector<2x64xf32> -> vector<2x64xf32>
    %c2_160 = arith.constant 2 : index
    %c0_161 = arith.constant 0 : index
    %c0_162 = arith.constant 0 : index
    %264 = vector.load %arg9[%c2_160, %c0_161, %c0_162] : memref<9x64x64xf32, #tpu.memory_space<vmem>>, vector<1x64x64xf32>
    %265 = vector.shape_cast %264 : vector<1x64x64xf32> to vector<64x64xf32>
    %266 = arith.truncf %263 : vector<2x64xf32> to vector<2x64xbf16>
    %267 = arith.truncf %265 : vector<64x64xf32> to vector<64x64xbf16>
    %cst_163 = arith.constant dense<0.000000e+00> : vector<2x64xf32>
    %268 = tpu.matmul %266, %267, %cst_163 {dimension_numbers = #tpu.dot_dimension_numbers<[1], [0], [0], [1], [0, 0, 1, 1], [], []>} : vector<2x64xbf16>, vector<64x64xbf16>, vector<2x64xf32> -> vector<2x64xf32>
    %269 = arith.addf %258, %268 : vector<2x64xf32>
    %c3_164 = arith.constant 3 : index
    %c0_165 = arith.constant 0 : index
    %c0_166 = arith.constant 0 : index
    %270 = vector.load %arg8[%c3_164, %c0_165, %c0_166] : memref<9x2x18xf32, #tpu.memory_space<vmem>>, vector<1x2x18xf32>
    %271 = vector.shape_cast %270 : vector<1x2x18xf32> to vector<2x18xf32>
    %272 = arith.truncf %271 : vector<2x18xf32> to vector<2x18xbf16>
    %273 = arith.truncf %235 : vector<18x64xf32> to vector<18x64xbf16>
    %cst_167 = arith.constant dense<0.000000e+00> : vector<2x64xf32>
    %274 = tpu.matmul %272, %273, %cst_167 {dimension_numbers = #tpu.dot_dimension_numbers<[1], [0], [0], [1], [0, 0, 1, 1], [], []>} : vector<2x18xbf16>, vector<18x64xbf16>, vector<2x64xf32> -> vector<2x64xf32>
    %c3_168 = arith.constant 3 : index
    %c0_169 = arith.constant 0 : index
    %c0_170 = arith.constant 0 : index
    %275 = vector.load %arg9[%c3_168, %c0_169, %c0_170] : memref<9x64x64xf32, #tpu.memory_space<vmem>>, vector<1x64x64xf32>
    %276 = vector.shape_cast %275 : vector<1x64x64xf32> to vector<64x64xf32>
    %277 = arith.truncf %274 : vector<2x64xf32> to vector<2x64xbf16>
    %278 = arith.truncf %276 : vector<64x64xf32> to vector<64x64xbf16>
    %cst_171 = arith.constant dense<0.000000e+00> : vector<2x64xf32>
    %279 = tpu.matmul %277, %278, %cst_171 {dimension_numbers = #tpu.dot_dimension_numbers<[1], [0], [0], [1], [0, 0, 1, 1], [], []>} : vector<2x64xbf16>, vector<64x64xbf16>, vector<2x64xf32> -> vector<2x64xf32>
    %280 = arith.addf %269, %279 : vector<2x64xf32>
    %c4_172 = arith.constant 4 : index
    %c0_173 = arith.constant 0 : index
    %c0_174 = arith.constant 0 : index
    %281 = vector.load %arg8[%c4_172, %c0_173, %c0_174] : memref<9x2x18xf32, #tpu.memory_space<vmem>>, vector<1x2x18xf32>
    %282 = vector.shape_cast %281 : vector<1x2x18xf32> to vector<2x18xf32>
    %283 = arith.truncf %282 : vector<2x18xf32> to vector<2x18xbf16>
    %284 = arith.truncf %235 : vector<18x64xf32> to vector<18x64xbf16>
    %cst_175 = arith.constant dense<0.000000e+00> : vector<2x64xf32>
    %285 = tpu.matmul %283, %284, %cst_175 {dimension_numbers = #tpu.dot_dimension_numbers<[1], [0], [0], [1], [0, 0, 1, 1], [], []>} : vector<2x18xbf16>, vector<18x64xbf16>, vector<2x64xf32> -> vector<2x64xf32>
    %c4_176 = arith.constant 4 : index
    %c0_177 = arith.constant 0 : index
    %c0_178 = arith.constant 0 : index
    %286 = vector.load %arg9[%c4_176, %c0_177, %c0_178] : memref<9x64x64xf32, #tpu.memory_space<vmem>>, vector<1x64x64xf32>
    %287 = vector.shape_cast %286 : vector<1x64x64xf32> to vector<64x64xf32>
    %288 = arith.truncf %285 : vector<2x64xf32> to vector<2x64xbf16>
    %289 = arith.truncf %287 : vector<64x64xf32> to vector<64x64xbf16>
    %cst_179 = arith.constant dense<0.000000e+00> : vector<2x64xf32>
    %290 = tpu.matmul %288, %289, %cst_179 {dimension_numbers = #tpu.dot_dimension_numbers<[1], [0], [0], [1], [0, 0, 1, 1], [], []>} : vector<2x64xbf16>, vector<64x64xbf16>, vector<2x64xf32> -> vector<2x64xf32>
    %291 = arith.addf %280, %290 : vector<2x64xf32>
    %c5_180 = arith.constant 5 : index
    %c0_181 = arith.constant 0 : index
    %c0_182 = arith.constant 0 : index
    %292 = vector.load %arg8[%c5_180, %c0_181, %c0_182] : memref<9x2x18xf32, #tpu.memory_space<vmem>>, vector<1x2x18xf32>
    %293 = vector.shape_cast %292 : vector<1x2x18xf32> to vector<2x18xf32>
    %294 = arith.truncf %293 : vector<2x18xf32> to vector<2x18xbf16>
    %295 = arith.truncf %235 : vector<18x64xf32> to vector<18x64xbf16>
    %cst_183 = arith.constant dense<0.000000e+00> : vector<2x64xf32>
    %296 = tpu.matmul %294, %295, %cst_183 {dimension_numbers = #tpu.dot_dimension_numbers<[1], [0], [0], [1], [0, 0, 1, 1], [], []>} : vector<2x18xbf16>, vector<18x64xbf16>, vector<2x64xf32> -> vector<2x64xf32>
    %c5_184 = arith.constant 5 : index
    %c0_185 = arith.constant 0 : index
    %c0_186 = arith.constant 0 : index
    %297 = vector.load %arg9[%c5_184, %c0_185, %c0_186] : memref<9x64x64xf32, #tpu.memory_space<vmem>>, vector<1x64x64xf32>
    %298 = vector.shape_cast %297 : vector<1x64x64xf32> to vector<64x64xf32>
    %299 = arith.truncf %296 : vector<2x64xf32> to vector<2x64xbf16>
    %300 = arith.truncf %298 : vector<64x64xf32> to vector<64x64xbf16>
    %cst_187 = arith.constant dense<0.000000e+00> : vector<2x64xf32>
    %301 = tpu.matmul %299, %300, %cst_187 {dimension_numbers = #tpu.dot_dimension_numbers<[1], [0], [0], [1], [0, 0, 1, 1], [], []>} : vector<2x64xbf16>, vector<64x64xbf16>, vector<2x64xf32> -> vector<2x64xf32>
    %302 = arith.addf %291, %301 : vector<2x64xf32>
    %c6_188 = arith.constant 6 : index
    %c0_189 = arith.constant 0 : index
    %c0_190 = arith.constant 0 : index
    %303 = vector.load %arg8[%c6_188, %c0_189, %c0_190] : memref<9x2x18xf32, #tpu.memory_space<vmem>>, vector<1x2x18xf32>
    %304 = vector.shape_cast %303 : vector<1x2x18xf32> to vector<2x18xf32>
    %305 = arith.truncf %304 : vector<2x18xf32> to vector<2x18xbf16>
    %306 = arith.truncf %235 : vector<18x64xf32> to vector<18x64xbf16>
    %cst_191 = arith.constant dense<0.000000e+00> : vector<2x64xf32>
    %307 = tpu.matmul %305, %306, %cst_191 {dimension_numbers = #tpu.dot_dimension_numbers<[1], [0], [0], [1], [0, 0, 1, 1], [], []>} : vector<2x18xbf16>, vector<18x64xbf16>, vector<2x64xf32> -> vector<2x64xf32>
    %c6_192 = arith.constant 6 : index
    %c0_193 = arith.constant 0 : index
    %c0_194 = arith.constant 0 : index
    %308 = vector.load %arg9[%c6_192, %c0_193, %c0_194] : memref<9x64x64xf32, #tpu.memory_space<vmem>>, vector<1x64x64xf32>
    %309 = vector.shape_cast %308 : vector<1x64x64xf32> to vector<64x64xf32>
    %310 = arith.truncf %307 : vector<2x64xf32> to vector<2x64xbf16>
    %311 = arith.truncf %309 : vector<64x64xf32> to vector<64x64xbf16>
    %cst_195 = arith.constant dense<0.000000e+00> : vector<2x64xf32>
    %312 = tpu.matmul %310, %311, %cst_195 {dimension_numbers = #tpu.dot_dimension_numbers<[1], [0], [0], [1], [0, 0, 1, 1], [], []>} : vector<2x64xbf16>, vector<64x64xbf16>, vector<2x64xf32> -> vector<2x64xf32>
    %313 = arith.addf %302, %312 : vector<2x64xf32>
    %c7_196 = arith.constant 7 : index
    %c0_197 = arith.constant 0 : index
    %c0_198 = arith.constant 0 : index
    %314 = vector.load %arg8[%c7_196, %c0_197, %c0_198] : memref<9x2x18xf32, #tpu.memory_space<vmem>>, vector<1x2x18xf32>
    %315 = vector.shape_cast %314 : vector<1x2x18xf32> to vector<2x18xf32>
    %316 = arith.truncf %315 : vector<2x18xf32> to vector<2x18xbf16>
    %317 = arith.truncf %235 : vector<18x64xf32> to vector<18x64xbf16>
    %cst_199 = arith.constant dense<0.000000e+00> : vector<2x64xf32>
    %318 = tpu.matmul %316, %317, %cst_199 {dimension_numbers = #tpu.dot_dimension_numbers<[1], [0], [0], [1], [0, 0, 1, 1], [], []>} : vector<2x18xbf16>, vector<18x64xbf16>, vector<2x64xf32> -> vector<2x64xf32>
    %c7_200 = arith.constant 7 : index
    %c0_201 = arith.constant 0 : index
    %c0_202 = arith.constant 0 : index
    %319 = vector.load %arg9[%c7_200, %c0_201, %c0_202] : memref<9x64x64xf32, #tpu.memory_space<vmem>>, vector<1x64x64xf32>
    %320 = vector.shape_cast %319 : vector<1x64x64xf32> to vector<64x64xf32>
    %321 = arith.truncf %318 : vector<2x64xf32> to vector<2x64xbf16>
    %322 = arith.truncf %320 : vector<64x64xf32> to vector<64x64xbf16>
    %cst_203 = arith.constant dense<0.000000e+00> : vector<2x64xf32>
    %323 = tpu.matmul %321, %322, %cst_203 {dimension_numbers = #tpu.dot_dimension_numbers<[1], [0], [0], [1], [0, 0, 1, 1], [], []>} : vector<2x64xbf16>, vector<64x64xbf16>, vector<2x64xf32> -> vector<2x64xf32>
    %324 = arith.addf %313, %323 : vector<2x64xf32>
    %c8_204 = arith.constant 8 : index
    %c0_205 = arith.constant 0 : index
    %c0_206 = arith.constant 0 : index
    %325 = vector.load %arg8[%c8_204, %c0_205, %c0_206] : memref<9x2x18xf32, #tpu.memory_space<vmem>>, vector<1x2x18xf32>
    %326 = vector.shape_cast %325 : vector<1x2x18xf32> to vector<2x18xf32>
    %327 = arith.truncf %326 : vector<2x18xf32> to vector<2x18xbf16>
    %328 = arith.truncf %235 : vector<18x64xf32> to vector<18x64xbf16>
    %cst_207 = arith.constant dense<0.000000e+00> : vector<2x64xf32>
    %329 = tpu.matmul %327, %328, %cst_207 {dimension_numbers = #tpu.dot_dimension_numbers<[1], [0], [0], [1], [0, 0, 1, 1], [], []>} : vector<2x18xbf16>, vector<18x64xbf16>, vector<2x64xf32> -> vector<2x64xf32>
    %c8_208 = arith.constant 8 : index
    %c0_209 = arith.constant 0 : index
    %c0_210 = arith.constant 0 : index
    %330 = vector.load %arg9[%c8_208, %c0_209, %c0_210] : memref<9x64x64xf32, #tpu.memory_space<vmem>>, vector<1x64x64xf32>
    %331 = vector.shape_cast %330 : vector<1x64x64xf32> to vector<64x64xf32>
    %332 = arith.truncf %329 : vector<2x64xf32> to vector<2x64xbf16>
    %333 = arith.truncf %331 : vector<64x64xf32> to vector<64x64xbf16>
    %cst_211 = arith.constant dense<0.000000e+00> : vector<2x64xf32>
    %334 = tpu.matmul %332, %333, %cst_211 {dimension_numbers = #tpu.dot_dimension_numbers<[1], [0], [0], [1], [0, 0, 1, 1], [], []>} : vector<2x64xbf16>, vector<64x64xbf16>, vector<2x64xf32> -> vector<2x64xf32>
    %335 = arith.addf %324, %334 : vector<2x64xf32>
    %c0_212 = arith.constant 0 : index
    %c0_213 = arith.constant 0 : index
    %336 = vector.load %arg10[%c0_212, %c0_213] : memref<1x64xf32, #tpu.memory_space<vmem>>, vector<1x64xf32>
    %c0_214 = arith.constant 0 : index
    %c0_215 = arith.constant 0 : index
    %337 = vector.load %arg11[%c0_214, %c0_215] : memref<1x64xf32, #tpu.memory_space<vmem>>, vector<1x64xf32>
    %cst_216 = arith.constant dense<0.000000e+00> : vector<64xf32>
    %338 = vector.multi_reduction <add>, %335, %cst_216 [0] : vector<2x64xf32> to vector<64xf32>
    %339 = vector.shape_cast %338 : vector<64xf32> to vector<1x64xf32>
    %cst_217 = arith.constant 2.000000e+00 : f32
    %340 = vector.broadcast %cst_217 : f32 to vector<1x64xf32>
    %341 = arith.divf %339, %340 : vector<1x64xf32>
    %342 = arith.mulf %335, %335 : vector<2x64xf32>
    %cst_218 = arith.constant dense<0.000000e+00> : vector<64xf32>
    %343 = vector.multi_reduction <add>, %342, %cst_218 [0] : vector<2x64xf32> to vector<64xf32>
    %344 = vector.shape_cast %343 : vector<64xf32> to vector<1x64xf32>
    %cst_219 = arith.constant 2.000000e+00 : f32
    %345 = vector.broadcast %cst_219 : f32 to vector<1x64xf32>
    %346 = arith.divf %344, %345 : vector<1x64xf32>
    %347 = arith.mulf %341, %341 : vector<1x64xf32>
    %348 = arith.subf %346, %347 : vector<1x64xf32>
    %cst_220 = arith.constant 0.000000e+00 : f32
    %349 = vector.broadcast %cst_220 : f32 to vector<1x64xf32>
    %350 = arith.maximumf %348, %349 : vector<1x64xf32>
    %351 = vector.broadcast %341 : vector<1x64xf32> to vector<2x64xf32>
    %352 = arith.subf %335, %351 : vector<2x64xf32>
    %cst_221 = arith.constant 9.99999974E-6 : f32
    %353 = vector.broadcast %cst_221 : f32 to vector<1x64xf32>
    %354 = arith.addf %350, %353 : vector<1x64xf32>
    %355 = math.rsqrt %354 : vector<1x64xf32>
    %356 = arith.mulf %355, %336 : vector<1x64xf32>
    %357 = vector.broadcast %356 : vector<1x64xf32> to vector<2x64xf32>
    %358 = arith.mulf %352, %357 : vector<2x64xf32>
    %359 = vector.broadcast %337 : vector<1x64xf32> to vector<2x64xf32>
    %360 = arith.addf %358, %359 : vector<2x64xf32>
    %cst_222 = arith.constant 0.000000e+00 : f32
    %361 = vector.broadcast %cst_222 : f32 to vector<2x64xf32>
    %362 = arith.maximumf %360, %361 : vector<2x64xf32>
    %c0_223 = arith.constant 0 : index
    %c0_224 = arith.constant 0 : index
    %363 = vector.load %arg12[%c0_223, %c0_224] : memref<64x512xf32, #tpu.memory_space<vmem>>, vector<64x512xf32>
    %364 = arith.truncf %362 : vector<2x64xf32> to vector<2x64xbf16>
    %365 = arith.truncf %363 : vector<64x512xf32> to vector<64x512xbf16>
    %cst_225 = arith.constant dense<0.000000e+00> : vector<2x512xf32>
    %366 = tpu.matmul %364, %365, %cst_225 {dimension_numbers = #tpu.dot_dimension_numbers<[1], [0], [0], [1], [0, 0, 1, 1], [], []>} : vector<2x64xbf16>, vector<64x512xbf16>, vector<2x512xf32> -> vector<2x512xf32>
    %c0_226 = arith.constant 0 : index
    %c0_227 = arith.constant 0 : index
    %367 = vector.load %arg13[%c0_226, %c0_227] : memref<1x512xf32, #tpu.memory_space<vmem>>, vector<1x512xf32>
    %368 = vector.broadcast %367 : vector<1x512xf32> to vector<2x512xf32>
    %369 = arith.addf %366, %368 : vector<2x512xf32>
    %cst_228 = arith.constant 0.000000e+00 : f32
    %370 = vector.broadcast %cst_228 : f32 to vector<2x512xf32>
    %371 = arith.maximumf %369, %370 : vector<2x512xf32>
    %c0_229 = arith.constant 0 : index
    %c0_230 = arith.constant 0 : index
    %372 = vector.load %arg14[%c0_229, %c0_230] : memref<512x6xf32, #tpu.memory_space<vmem>>, vector<512x6xf32>
    %373 = arith.truncf %371 : vector<2x512xf32> to vector<2x512xbf16>
    %374 = arith.truncf %372 : vector<512x6xf32> to vector<512x6xbf16>
    %cst_231 = arith.constant dense<0.000000e+00> : vector<2x6xf32>
    %375 = tpu.matmul %373, %374, %cst_231 {dimension_numbers = #tpu.dot_dimension_numbers<[1], [0], [0], [1], [0, 0, 1, 1], [], []>} : vector<2x512xbf16>, vector<512x6xbf16>, vector<2x6xf32> -> vector<2x6xf32>
    %c0_232 = arith.constant 0 : index
    %c0_233 = arith.constant 0 : index
    %376 = vector.load %arg15[%c0_232, %c0_233] : memref<1x6xf32, #tpu.memory_space<vmem>>, vector<1x6xf32>
    %377 = vector.broadcast %376 : vector<1x6xf32> to vector<2x6xf32>
    %378 = arith.addf %375, %377 : vector<2x6xf32>
    %c0_234 = arith.constant 0 : index
    %c0_235 = arith.constant 0 : index
    %379 = vector.load %arg16[%c0_234, %c0_235] : memref<2x6xf32, #tpu.memory_space<vmem>>, vector<2x6xf32>
    tpu.vector_store %arg16[%c0_234, %c0_235], %378 {strides = array<i32>} : memref<2x6xf32, #tpu.memory_space<vmem>>, vector<2x6xf32>,
    return
  }
}

</mosaic_0001>

<llo_original>
// kernel: dqn_forward_pallas.1
$region0: #{dqn_forward_pallas.1}
  #allocation0 [shape = 'u32[]', space=smem, size = 0x4, offset = 0x4, fixed_abs, tag = 'smem constant byte address 0x4 - core index']
  #allocation1 [shape = 'u32[144,128]{1,0:T(1,128)}', space=vmem, size = 0x12000, scoped, tag = 'internal scratch']
  %s0 = inlined_call_operand.vmem [shape: f32[128,256], index: 0, kind: input, shape index: {}]
  %s1 = inlined_call_operand.vmem [shape: f32[256,32], index: 1, kind: input, shape index: {}]
  %s2 = inlined_call_operand.vmem [shape: f32[1,32], index: 2, kind: input, shape index: {}]
  %s3 = inlined_call_operand.vmem [shape: f32[1,32], index: 3, kind: input, shape index: {}]
  %s4 = inlined_call_operand.vmem [shape: f32[16,18,128], index: 4, kind: input, shape index: {}]
  %s5 = inlined_call_operand.vmem [shape: f32[16,32,64], index: 5, kind: input, shape index: {}]
  %s6 = inlined_call_operand.vmem [shape: f32[1,64], index: 6, kind: input, shape index: {}]
  %s7 = inlined_call_operand.vmem [shape: f32[1,64], index: 7, kind: input, shape index: {}]
  %s8 = inlined_call_operand.vmem [shape: f32[9,2,18], index: 8, kind: input, shape index: {}]
  %s9 = inlined_call_operand.vmem [shape: f32[9,64,64], index: 9, kind: input, shape index: {}]
  %s10 = inlined_call_operand.vmem [shape: f32[1,64], index: 10, kind: input, shape index: {}]
  %s11 = inlined_call_operand.vmem [shape: f32[1,64], index: 11, kind: input, shape index: {}]
  %s12 = inlined_call_operand.vmem [shape: f32[64,512], index: 12, kind: input, shape index: {}]
  %s13 = inlined_call_operand.vmem [shape: f32[1,512], index: 13, kind: input, shape index: {}]
  %s14 = inlined_call_operand.vmem [shape: f32[512,6], index: 14, kind: input, shape index: {}]
  %s15 = inlined_call_operand.vmem [shape: f32[1,6], index: 15, kind: input, shape index: {}]
  %s16 = inlined_call_operand.hbm [shape: f32[2,6], index: 16, kind: output, shape index: {}]
  %s17 = sld [smem:[#allocation0]]
  $region74: #{dqn_forward_pallas.1} parent=0
    _
  %s19 = ssub.s32 1, %s17
  %s20 = scalar_select 0, %s19, %s17
  $region1: #{dqn_forward_pallas.1} parent=0
    #allocation2 [shape = 'u8[1024]{0}', space=vmem, size = 0x400, scoped, tag = 'output window, operand 0, single buffered']
    #allocation3 [shape = 's32[1]{0}', space=sflag, size = 0x4, scoped, tag = 'scoped memory for dqn_forward_pallas.1']
    %21 = vsyncpa [#allocation3], 0
    // Predicated region
    $region2: #{dqn_forward_pallas.1} parent=1 // pred_check
      _
    $region3: #{dqn_forward_pallas.1} parent=1 // pred_check_branch
      %23 = sbr.rel (0) target = $region5
    $region4: #{dqn_forward_pallas.1} parent=1 // pred_region
      _
    $region5: #{dqn_forward_pallas.1} parent=1 // pred_fallthru
      _
    // Predicated region
    $region6: #{dqn_forward_pallas.1} parent=1 // pred_check
      _
    $region7: #{dqn_forward_pallas.1} parent=1 // pred_check_branch
      %25 = sbr.rel (0) target = $region9
    $region8: #{dqn_forward_pallas.1} parent=1 // pred_region
      _
    $region9: #{dqn_forward_pallas.1} parent=1 // pred_fallthru
      _
    // Predicated region
    $region10: #{dqn_forward_pallas.1} parent=1 // pred_check
      _
    $region11: #{dqn_forward_pallas.1} parent=1 // pred_check_branch
      %27 = sbr.rel (0) target = $region13
    $region12: #{dqn_forward_pallas.1} parent=1 // pred_region
      _
    $region13: #{dqn_forward_pallas.1} parent=1 // pred_fallthru
      _
    // Predicated region
    $region14: #{dqn_forward_pallas.1} parent=1 // pred_check
      _
    $region15: #{dqn_forward_pallas.1} parent=1 // pred_check_branch
      %29 = sbr.rel (0) target = $region17
    $region16: #{dqn_forward_pallas.1} parent=1 // pred_region
      _
    $region17: #{dqn_forward_pallas.1} parent=1 // pred_fallthru
      _
    // Predicated region
    $region18: #{dqn_forward_pallas.1} parent=1 // pred_check
      _
    $region19: #{dqn_forward_pallas.1} parent=1 // pred_check_branch
      %31 = sbr.rel (0) target = $region21
    $region20: #{dqn_forward_pallas.1} parent=1 // pred_region
      _
    $region21: #{dqn_forward_pallas.1} parent=1 // pred_fallthru
      _
    // Predicated region
    $region22: #{dqn_forward_pallas.1} parent=1 // pred_check
      _
    $region23: #{dqn_forward_pallas.1} parent=1 // pred_check_branch
      %33 = sbr.rel (0) target = $region25
    $region24: #{dqn_forward_pallas.1} parent=1 // pred_region
      _
    $region25: #{dqn_forward_pallas.1} parent=1 // pred_fallthru
      _
    // Predicated region
    $region26: #{dqn_forward_pallas.1} parent=1 // pred_check
      _
    $region27: #{dqn_forward_pallas.1} parent=1 // pred_check_branch
      %35 = sbr.rel (0) target = $region29
    $region28: #{dqn_forward_pallas.1} parent=1 // pred_region
      _
    $region29: #{dqn_forward_pallas.1} parent=1 // pred_fallthru
      _
    // Predicated region
    $region30: #{dqn_forward_pallas.1} parent=1 // pred_check
      _
    $region31: #{dqn_forward_pallas.1} parent=1 // pred_check_branch
      %37 = sbr.rel (0) target = $region33
    $region32: #{dqn_forward_pallas.1} parent=1 // pred_region
      _
    $region33: #{dqn_forward_pallas.1} parent=1 // pred_fallthru
      _
    // Predicated region
    $region34: #{dqn_forward_pallas.1} parent=1 // pred_check
      _
    $region35: #{dqn_forward_pallas.1} parent=1 // pred_check_branch
      %39 = sbr.rel (0) target = $region37
    $region36: #{dqn_forward_pallas.1} parent=1 // pred_region
      _
    $region37: #{dqn_forward_pallas.1} parent=1 // pred_fallthru
      _
    // Predicated region
    $region38: #{dqn_forward_pallas.1} parent=1 // pred_check
      _
    $region39: #{dqn_forward_pallas.1} parent=1 // pred_check_branch
      %41 = sbr.rel (0) target = $region41
    $region40: #{dqn_forward_pallas.1} parent=1 // pred_region
      _
    $region41: #{dqn_forward_pallas.1} parent=1 // pred_fallthru
      _
    // Predicated region
    $region42: #{dqn_forward_pallas.1} parent=1 // pred_check
      _
    $region43: #{dqn_forward_pallas.1} parent=1 // pred_check_branch
      %43 = sbr.rel (0) target = $region45
    $region44: #{dqn_forward_pallas.1} parent=1 // pred_region
      _
    $region45: #{dqn_forward_pallas.1} parent=1 // pred_fallthru
      _
    // Predicated region
    $region46: #{dqn_forward_pallas.1} parent=1 // pred_check
      _
    $region47: #{dqn_forward_pallas.1} parent=1 // pred_check_branch
      %45 = sbr.rel (0) target = $region49
    $region48: #{dqn_forward_pallas.1} parent=1 // pred_region
      _
    $region49: #{dqn_forward_pallas.1} parent=1 // pred_fallthru
      _
    // Predicated region
    $region50: #{dqn_forward_pallas.1} parent=1 // pred_check
      _
    $region51: #{dqn_forward_pallas.1} parent=1 // pred_check_branch
      %47 = sbr.rel (0) target = $region53
    $region52: #{dqn_forward_pallas.1} parent=1 // pred_region
      _
    $region53: #{dqn_forward_pallas.1} parent=1 // pred_fallthru
      _
    // Predicated region
    $region54: #{dqn_forward_pallas.1} parent=1 // pred_check
      _
    $region55: #{dqn_forward_pallas.1} parent=1 // pred_check_branch
      %49 = sbr.rel (0) target = $region57
    $region56: #{dqn_forward_pallas.1} parent=1 // pred_region
      _
    $region57: #{dqn_forward_pallas.1} parent=1 // pred_fallthru
      _
    // Predicated region
    $region58: #{dqn_forward_pallas.1} parent=1 // pred_check
      _
    $region59: #{dqn_forward_pallas.1} parent=1 // pred_check_branch
      %51 = sbr.rel (0) target = $region61
    $region60: #{dqn_forward_pallas.1} parent=1 // pred_region
      _
    $region61: #{dqn_forward_pallas.1} parent=1 // pred_fallthru
      _
    // Predicated region
    $region62: #{dqn_forward_pallas.1} parent=1 // pred_check
      _
    $region63: #{dqn_forward_pallas.1} parent=1 // pred_check_branch
      %53 = sbr.rel (0) target = $region65
    $region64: #{dqn_forward_pallas.1} parent=1 // pred_region
      _
    $region65: #{dqn_forward_pallas.1} parent=1 // pred_fallthru
      _
    %v55 = vld [vmem:[%s0] sm:$0xff]
    %v56 = vld [vmem:[%s0 + $0x8] sm:$0xff]
    %v57 = vld [vmem:[%s0 + $0x10] sm:$0xff]
    %v58 = vld [vmem:[%s0 + $0x18] sm:$0xff]
    %v59 = vld [vmem:[%s0 + $0x20] sm:$0xff]
    %v60 = vld [vmem:[%s0 + $0x28] sm:$0xff]
    %v61 = vld [vmem:[%s0 + $0x30] sm:$0xff]
    %v62 = vld [vmem:[%s0 + $0x38] sm:$0xff]
    %v63 = vld [vmem:[%s0 + $0x40] sm:$0xff]
    %v64 = vld [vmem:[%s0 + $0x48] sm:$0xff]
    %v65 = vld [vmem:[%s0 + $0x50] sm:$0xff]
    %v66 = vld [vmem:[%s0 + $0x58] sm:$0xff]
    %v67 = vld [vmem:[%s0 + $0x60] sm:$0xff]
    %v68 = vld [vmem:[%s0 + $0x68] sm:$0xff]
    %v69 = vld [vmem:[%s0 + $0x70] sm:$0xff]
    %v70 = vld [vmem:[%s0 + $0x78] sm:$0xff]
    %v71 = vld [vmem:[%s0 + $0x80] sm:$0xff]
    %v72 = vld [vmem:[%s0 + $0x88] sm:$0xff]
    %v73 = vld [vmem:[%s0 + $0x90] sm:$0xff]
    %v74 = vld [vmem:[%s0 + $0x98] sm:$0xff]
    %v75 = vld [vmem:[%s0 + $0xa0] sm:$0xff]
    %v76 = vld [vmem:[%s0 + $0xa8] sm:$0xff]
    %v77 = vld [vmem:[%s0 + $0xb0] sm:$0xff]
    %v78 = vld [vmem:[%s0 + $0xb8] sm:$0xff]
    %v79 = vld [vmem:[%s0 + $0xc0] sm:$0xff]
    %v80 = vld [vmem:[%s0 + $0xc8] sm:$0xff]
    %v81 = vld [vmem:[%s0 + $0xd0] sm:$0xff]
    %v82 = vld [vmem:[%s0 + $0xd8] sm:$0xff]
    %v83 = vld [vmem:[%s0 + $0xe0] sm:$0xff]
    %v84 = vld [vmem:[%s0 + $0xe8] sm:$0xff]
    %v85 = vld [vmem:[%s0 + $0xf0] sm:$0xff]
    %v86 = vld [vmem:[%s0 + $0xf8] sm:$0xff]
    %v87 = vld [vmem:[%s1] sm:$0xff]
    %v88 = vld [vmem:[%s1 + $0x8] sm:$0xff]
    %v89 = vld [vmem:[%s1 + $0x10] sm:$0xff]
    %v90 = vld [vmem:[%s1 + $0x18] sm:$0xff]
    %v91 = vld [vmem:[%s1 + $0x20] sm:$0xff]
    %v92 = vld [vmem:[%s1 + $0x28] sm:$0xff]
    %v93 = vld [vmem:[%s1 + $0x30] sm:$0xff]
    %v94 = vld [vmem:[%s1 + $0x38] sm:$0xff]
    %v95 = vld [vmem:[%s1 + $0x40] sm:$0xff]
    %v96 = vld [vmem:[%s1 + $0x48] sm:$0xff]
    %v97 = vld [vmem:[%s1 + $0x50] sm:$0xff]
    %v98 = vld [vmem:[%s1 + $0x58] sm:$0xff]
    %v99 = vld [vmem:[%s1 + $0x60] sm:$0xff]
    %v100 = vld [vmem:[%s1 + $0x68] sm:$0xff]
    %v101 = vld [vmem:[%s1 + $0x70] sm:$0xff]
    %v102 = vld [vmem:[%s1 + $0x78] sm:$0xff]
    %v103 = vld [vmem:[%s1 + $0x80] sm:$0xff]
    %v104 = vld [vmem:[%s1 + $0x88] sm:$0xff]
    %v105 = vld [vmem:[%s1 + $0x90] sm:$0xff]
    %v106 = vld [vmem:[%s1 + $0x98] sm:$0xff]
    %v107 = vld [vmem:[%s1 + $0xa0] sm:$0xff]
    %v108 = vld [vmem:[%s1 + $0xa8] sm:$0xff]
    %v109 = vld [vmem:[%s1 + $0xb0] sm:$0xff]
    %v110 = vld [vmem:[%s1 + $0xb8] sm:$0xff]
    %v111 = vld [vmem:[%s1 + $0xc0] sm:$0xff]
    %v112 = vld [vmem:[%s1 + $0xc8] sm:$0xff]
    %v113 = vld [vmem:[%s1 + $0xd0] sm:$0xff]
    %v114 = vld [vmem:[%s1 + $0xd8] sm:$0xff]
    %v115 = vld [vmem:[%s1 + $0xe0] sm:$0xff]
    %v116 = vld [vmem:[%s1 + $0xe8] sm:$0xff]
    %v117 = vld [vmem:[%s1 + $0xf0] sm:$0xff]
    %v118 = vld [vmem:[%s1 + $0xf8] sm:$0xff]
    %v119 = vpack.c.bf16 %v57, %v55
    %v120 = vpack.c.bf16 %v58, %v56
    %v121 = vpack.c.bf16 %v61, %v59
    %v122 = vpack.c.bf16 %v62, %v60
    %v123 = vpack.c.bf16 %v65, %v63
    %v124 = vpack.c.bf16 %v66, %v64
    %v125 = vpack.c.bf16 %v69, %v67
    %v126 = vpack.c.bf16 %v70, %v68
    %v127 = vpack.c.bf16 %v73, %v71
    %v128 = vpack.c.bf16 %v74, %v72
    %v129 = vpack.c.bf16 %v77, %v75
    %v130 = vpack.c.bf16 %v78, %v76
    %v131 = vpack.c.bf16 %v81, %v79
    %v132 = vpack.c.bf16 %v82, %v80
    %v133 = vpack.c.bf16 %v85, %v83
    %v134 = vpack.c.bf16 %v86, %v84
    %v135 = vpack.c.bf16 %v88, %v87
    %v136 = vpack.c.bf16 %v90, %v89
    %v137 = vpack.c.bf16 %v92, %v91
    %v138 = vpack.c.bf16 %v94, %v93
    %v139 = vpack.c.bf16 %v96, %v95
    %v140 = vpack.c.bf16 %v98, %v97
    %v141 = vpack.c.bf16 %v100, %v99
    %v142 = vpack.c.bf16 %v102, %v101
    %v143 = vpack.c.bf16 %v104, %v103
    %v144 = vpack.c.bf16 %v106, %v105
    %v145 = vpack.c.bf16 %v108, %v107
    %v146 = vpack.c.bf16 %v110, %v109
    %v147 = vpack.c.bf16 %v112, %v111
    %v148 = vpack.c.bf16 %v114, %v113
    %v149 = vpack.c.bf16 %v116, %v115
    %v150 = vpack.c.bf16 %v118, %v117
    %151 = vmatprep.subr.bf16.mxu0 0
    %152 = vmatpush1.bf16.msra.mxu0 %v142
    %153 = vmatprep.subr.bf16.mxu0 0
    %154 = vmatpush1.bf16.msra.mxu0 %v141
    %155 = vmatprep.subr.bf16.mxu0 0
    %156 = vmatpush1.bf16.msra.mxu0 %v140
    %157 = vmatprep.subr.bf16.mxu0 0
    %158 = vmatpush1.bf16.msra.mxu0 %v139
    %159 = vmatprep.subr.bf16.mxu0 0
    %160 = vmatpush1.bf16.msra.mxu0 %v138
    %161 = vmatprep.subr.bf16.mxu0 0
    %162 = vmatpush1.bf16.msra.mxu0 %v137
    %163 = vmatprep.subr.bf16.mxu0 0
    %164 = vmatpush1.bf16.msra.mxu0 %v136
    %165 = vmatprep.subr.bf16.mxu0 0
    %166 = vmatpush1.bf16.msra.mxu0 %v135
    %167 = vmatprep.subr.bf16.mxu0 0
    %168 = vmatpush2.bf16.msra.mxu0 %v150
    %169 = vmatprep.subr.bf16.mxu0 0
    %170 = vmatpush2.bf16.msra.mxu0 %v149
    %171 = vmatprep.subr.bf16.mxu0 0
    %172 = vmatpush2.bf16.msra.mxu0 %v148
    %173 = vmatprep.subr.bf16.mxu0 0
    %174 = vmatpush2.bf16.msra.mxu0 %v147
    %175 = vmatprep.subr.bf16.mxu0 0
    %176 = vmatpush2.bf16.msra.mxu0 %v146
    %177 = vmatprep.subr.bf16.mxu0 0
    %178 = vmatpush2.bf16.msra.mxu0 %v145
    %179 = vmatprep.subr.bf16.mxu0 0
    %180 = vmatpush2.bf16.msra.mxu0 %v144
    %181 = vmatprep.subr.bf16.mxu0 0
    %182 = vmatpush2.bf16.msra.mxu0 %v143
    %183 = vmatprep.mubr.bf16.mxu0 %v120
    %184 = vmatmul.mubr.bf16.gmra.mxu0 %v119
    %v185 = vpop.f32.mrf.mxu0
    %v186 = vadd.f32 0.0, %v185
    %v187 = vpop.f32.mrf.mxu0
    %v188 = vpop.f32.mrf.mxu0
    %v189 = vadd.f32 0.0, %v188
    %v190 = vpop.f32.mrf.mxu0
    %191 = vmatprep.mubr.bf16.mxu0 %v122
    %192 = vmatmul.mubr.bf16.gmra.mxu0 %v121
    %v193 = vpop.f32.mrf.mxu0
    %v194 = vadd.f32 0.0, %v193
    %v195 = vpop.f32.mrf.mxu0
    %v196 = vpop.f32.mrf.mxu0
    %v197 = vadd.f32 0.0, %v196
    %v198 = vpop.f32.mrf.mxu0
    %199 = vmatprep.mubr.bf16.mxu0 %v124
    %200 = vmatmul.mubr.bf16.gmra.mxu0 %v123
    %v201 = vpop.f32.mrf.mxu0
    %v202 = vadd.f32 0.0, %v201
    %v203 = vpop.f32.mrf.mxu0
    %v204 = vpop.f32.mrf.mxu0
    %v205 = vadd.f32 0.0, %v204
    %v206 = vpop.f32.mrf.mxu0
    %207 = vmatprep.mubr.bf16.mxu0 %v126
    %208 = vmatmul.mubr.bf16.gmra.mxu0 %v125
    %v209 = vpop.f32.mrf.mxu0
    %v210 = vadd.f32 0.0, %v209
    %v211 = vpop.f32.mrf.mxu0
    %v212 = vpop.f32.mrf.mxu0
    %v213 = vadd.f32 0.0, %v212
    %v214 = vpop.f32.mrf.mxu0
    %215 = vmatprep.mubr.bf16.mxu0 %v128
    %216 = vmatmul.mubr.bf16.gmra.mxu0 %v127
    %v217 = vpop.f32.mrf.mxu0
    %v218 = vadd.f32 0.0, %v217
    %v219 = vpop.f32.mrf.mxu0
    %v220 = vpop.f32.mrf.mxu0
    %v221 = vadd.f32 0.0, %v220
    %v222 = vpop.f32.mrf.mxu0
    %223 = vmatprep.mubr.bf16.mxu0 %v130
    %224 = vmatmul.mubr.bf16.gmra.mxu0 %v129
    %v225 = vpop.f32.mrf.mxu0
    %v226 = vadd.f32 0.0, %v225
    %v227 = vpop.f32.mrf.mxu0
    %v228 = vpop.f32.mrf.mxu0
    %v229 = vadd.f32 0.0, %v228
    %v230 = vpop.f32.mrf.mxu0
    %231 = vmatprep.mubr.bf16.mxu0 %v132
    %232 = vmatmul.mubr.bf16.gmra.mxu0 %v131
    %v233 = vpop.f32.mrf.mxu0
    %v234 = vadd.f32 0.0, %v233
    %v235 = vpop.f32.mrf.mxu0
    %v236 = vpop.f32.mrf.mxu0
    %v237 = vadd.f32 0.0, %v236
    %v238 = vpop.f32.mrf.mxu0
    %239 = vmatprep.mubr.bf16.mxu0 %v134
    %240 = vmatmul.mubr.bf16.gmra.mxu0 %v133
    %v241 = vpop.f32.mrf.mxu0
    %v242 = vadd.f32 0.0, %v241
    %v243 = vpop.f32.mrf.mxu0
    %v244 = vpop.f32.mrf.mxu0
    %v245 = vadd.f32 0.0, %v244
    %v246 = vpop.f32.mrf.mxu0
    %247 = vdwg.mxu0
    %v248 = vld [vmem:[%s2] sm:$0x1]
    %v249 = vld [vmem:[%s3] sm:$0x1]
    %vm250 = vcmask 261120
    %v251 = vsel %vm250, %v186, 0.0
    %v252 = vsel %vm250, %v189, 0.0
    %v253 = vadd.f32 %v251, %v252
    %v254 = vsel %vm250, %v194, 0.0
    %v255 = vadd.f32 %v253, %v254
    %v256 = vsel %vm250, %v197, 0.0
    %v257 = vadd.f32 %v255, %v256
    %v258 = vsel %vm250, %v202, 0.0
    %v259 = vadd.f32 %v257, %v258
    %v260 = vsel %vm250, %v205, 0.0
    %v261 = vadd.f32 %v259, %v260
    %v262 = vsel %vm250, %v210, 0.0
    %v263 = vadd.f32 %v261, %v262
    %v264 = vsel %vm250, %v213, 0.0
    %v265 = vadd.f32 %v263, %v264
    %v266 = vsel %vm250, %v218, 0.0
    %v267 = vadd.f32 %v265, %v266
    %v268 = vsel %vm250, %v221, 0.0
    %v269 = vadd.f32 %v267, %v268
    %v270 = vsel %vm250, %v226, 0.0
    %v271 = vadd.f32 %v269, %v270
    %v272 = vsel %vm250, %v229, 0.0
    %v273 = vadd.f32 %v271, %v272
    %v274 = vsel %vm250, %v234, 0.0
    %v275 = vadd.f32 %v273, %v274
    %v276 = vsel %vm250, %v237, 0.0
    %v277 = vadd.f32 %v275, %v276
    %v278 = vsel %vm250, %v242, 0.0
    %v279 = vadd.f32 %v277, %v278
    %v280 = vsel %vm250, %v245, 0.0
    %v281 = vadd.f32 %v279, %v280
    %v282 = vrot.slane %v281, 4
    %v283 = vadd.f32 %v281, %v282
    %v284 = vrot.slane %v283, 2
    %v285 = vadd.f32 %v283, %v284
    %v286 = vrot.slane %v285, 1
    %v287 = vadd.f32 %v285, %v286
    %v288 = vrcp.pop 128.0
    %v289 = vmul.f32 %v287, %v288
    %v290 = vmul.f32 %v186, %v186
    %v291 = vmul.f32 %v189, %v189
    %v292 = vmul.f32 %v194, %v194
    %v293 = vmul.f32 %v197, %v197
    %v294 = vmul.f32 %v202, %v202
    %v295 = vmul.f32 %v205, %v205
    %v296 = vmul.f32 %v210, %v210
    %v297 = vmul.f32 %v213, %v213
    %v298 = vmul.f32 %v218, %v218
    %v299 = vmul.f32 %v221, %v221
    %v300 = vmul.f32 %v226, %v226
    %v301 = vmul.f32 %v229, %v229
    %v302 = vmul.f32 %v234, %v234
    %v303 = vmul.f32 %v237, %v237
    %v304 = vmul.f32 %v242, %v242
    %v305 = vmul.f32 %v245, %v245
    %v306 = vsel %vm250, %v290, 0.0
    %v307 = vsel %vm250, %v291, 0.0
    %v308 = vadd.f32 %v306, %v307
    %v309 = vsel %vm250, %v292, 0.0
    %v310 = vadd.f32 %v308, %v309
    %v311 = vsel %vm250, %v293, 0.0
    %v312 = vadd.f32 %v310, %v311
    %v313 = vsel %vm250, %v294, 0.0
    %v314 = vadd.f32 %v312, %v313
    %v315 = vsel %vm250, %v295, 0.0
    %v316 = vadd.f32 %v314, %v315
    %v317 = vsel %vm250, %v296, 0.0
    %v318 = vadd.f32 %v316, %v317
    %v319 = vsel %vm250, %v297, 0.0
    %v320 = vadd.f32 %v318, %v319
    %v321 = vsel %vm250, %v298, 0.0
    %v322 = vadd.f32 %v320, %v321
    %v323 = vsel %vm250, %v299, 0.0
    %v324 = vadd.f32 %v322, %v323
    %v325 = vsel %vm250, %v300, 0.0
    %v326 = vadd.f32 %v324, %v325
    %v327 = vsel %vm250, %v301, 0.0
    %v328 = vadd.f32 %v326, %v327
    %v329 = vsel %vm250, %v302, 0.0
    %v330 = vadd.f32 %v328, %v329
    %v331 = vsel %vm250, %v303, 0.0
    %v332 = vadd.f32 %v330, %v331
    %v333 = vsel %vm250, %v304, 0.0
    %v334 = vadd.f32 %v332, %v333
    %v335 = vsel %vm250, %v305, 0.0
    %v336 = vadd.f32 %v334, %v335
    %v337 = vrot.slane %v336, 4
    %v338 = vadd.f32 %v336, %v337
    %v339 = vrot.slane %v338, 2
    %v340 = vadd.f32 %v338, %v339
    %v341 = vrot.slane %v340, 1
    %v342 = vadd.f32 %v340, %v341
    %v343 = vmul.f32 %v342, %v288
    %v344 = vmul.f32 %v289, %v289
    %v345 = vsub.f32 %v343, %v344
    %v346 = vmax.f32 %v345, 0.0
    %v347 = vsub.f32 %v186, %v289
    %v348 = vsub.f32 %v189, %v289
    %v349 = vsub.f32 %v194, %v289
    %v350 = vsub.f32 %v197, %v289
    %v351 = vsub.f32 %v202, %v289
    %v352 = vsub.f32 %v205, %v289
    %v353 = vsub.f32 %v210, %v289
    %v354 = vsub.f32 %v213, %v289
    %v355 = vsub.f32 %v218, %v289
    %v356 = vsub.f32 %v221, %v289
    %v357 = vsub.f32 %v226, %v289
    %v358 = vsub.f32 %v229, %v289
    %v359 = vsub.f32 %v234, %v289
    %v360 = vsub.f32 %v237, %v289
    %v361 = vsub.f32 %v242, %v289
    %v362 = vsub.f32 %v245, %v289
    %v363 = vadd.f32 %v346, 1e-05
    %v364 = vrsqrt.pop %v363
    %v365 = vmul.f32 %v364, %v248
    %v366 = vlaneseq
    %v367 = vshrl.u32 %v366, 7
    %v368 = vsub.s32 0, %v367
    %v369 = vrot.slane %v365, %v368
    %v370 = vmul.f32 %v347, %v369
    %v371 = vmul.f32 %v348, %v369
    %v372 = vmul.f32 %v349, %v369
    %v373 = vmul.f32 %v350, %v369
    %v374 = vmul.f32 %v351, %v369
    %v375 = vmul.f32 %v352, %v369
    %v376 = vmul.f32 %v353, %v369
    %v377 = vmul.f32 %v354, %v369
    %v378 = vmul.f32 %v355, %v369
    %v379 = vmul.f32 %v356, %v369
    %v380 = vmul.f32 %v357, %v369
    %v381 = vmul.f32 %v358, %v369
    %v382 = vmul.f32 %v359, %v369
    %v383 = vmul.f32 %v360, %v369
    %v384 = vmul.f32 %v361, %v369
    %v385 = vmul.f32 %v362, %v369
    %v387 = vlaneseq
    %v388 = vshrl.u32 %v387, 7
    %v389 = vsub.s32 0, %v388
    %v390 = vrot.slane %v249, %v389
    %v392 = vadd.f32 %v370, %v390
    %v393 = vadd.f32 %v371, %v390
    %v394 = vadd.f32 %v372, %v390
    %v395 = vadd.f32 %v373, %v390
    %v396 = vadd.f32 %v374, %v390
    %v397 = vadd.f32 %v375, %v390
    %v398 = vadd.f32 %v376, %v390
    %v399 = vadd.f32 %v377, %v390
    %v400 = vadd.f32 %v378, %v390
    %v401 = vadd.f32 %v379, %v390
    %v402 = vadd.f32 %v380, %v390
    %v403 = vadd.f32 %v381, %v390
    %v404 = vadd.f32 %v382, %v390
    %v405 = vadd.f32 %v383, %v390
    %v406 = vadd.f32 %v384, %v390
    %v407 = vadd.f32 %v385, %v390
    %v408 = vmax.f32 %v392, 0.0
    %v409 = vmax.f32 %v393, 0.0
    %v410 = vmax.f32 %v394, 0.0
    %v411 = vmax.f32 %v395, 0.0
    %v412 = vmax.f32 %v396, 0.0
    %v413 = vmax.f32 %v397, 0.0
    %v414 = vmax.f32 %v398, 0.0
    %v415 = vmax.f32 %v399, 0.0
    %v416 = vmax.f32 %v400, 0.0
    %v417 = vmax.f32 %v401, 0.0
    %v418 = vmax.f32 %v402, 0.0
    %v419 = vmax.f32 %v403, 0.0
    %v420 = vmax.f32 %v404, 0.0
    %v421 = vmax.f32 %v405, 0.0
    %v422 = vmax.f32 %v406, 0.0
    %v423 = vmax.f32 %v407, 0.0
    %v424 = vld [vmem:[%s4] sm:$0xff]
    %v425 = vld [vmem:[%s4 + $0x8] sm:$0xff]
    %v426 = vld [vmem:[%s4 + $0x10] sm:$0x3]
    %v427 = vpack.c.bf16 %v425, %v424
    %v428 = vpack.c.bf16 %v426, %v426
    %v429 = vpack.c.bf16 %v409, %v408
    %v430 = vpack.c.bf16 %v411, %v410
    %v431 = vpack.c.bf16 %v413, %v412
    %v432 = vpack.c.bf16 %v415, %v414
    %v433 = vpack.c.bf16 %v417, %v416
    %v434 = vpack.c.bf16 %v419, %v418
    %v435 = vpack.c.bf16 %v421, %v420
    %v436 = vpack.c.bf16 %v423, %v422
    %437 = vmatprep.subr.bf16.mxu0 0
    %438 = vmatpush1.bf16.msra.mxu0 %v436
    %439 = vmatprep.subr.bf16.mxu0 0
    %440 = vmatpush1.bf16.msra.mxu0 %v435
    %441 = vmatprep.subr.bf16.mxu0 0
    %442 = vmatpush1.bf16.msra.mxu0 %v434
    %443 = vmatprep.subr.bf16.mxu0 0
    %444 = vmatpush1.bf16.msra.mxu0 %v433
    %445 = vmatprep.subr.bf16.mxu0 0
    %446 = vmatpush1.bf16.msra.mxu0 %v432
    %447 = vmatprep.subr.bf16.mxu0 0
    %448 = vmatpush1.bf16.msra.mxu0 %v431
    %449 = vmatprep.subr.bf16.mxu0 0
    %450 = vmatpush1.bf16.msra.mxu0 %v430
    %451 = vmatprep.subr.bf16.mxu0 0
    %452 = vmatpush1.bf16.msra.mxu0 %v429
    %453 = vmatprep.subr.bf16.mxu0 0
    %454 = vmatpush2.bf16.msra.mxu0 0
    %455 = vmatprep.subr.bf16.mxu0 0
    %456 = vmatpush2.bf16.msra.mxu0 0
    %457 = vmatprep.subr.bf16.mxu0 0
    %458 = vmatpush2.bf16.msra.mxu0 0
    %459 = vmatprep.subr.bf16.mxu0 0
    %460 = vmatpush2.bf16.msra.mxu0 0
    %461 = vmatprep.subr.bf16.mxu0 0
    %462 = vmatpush2.bf16.msra.mxu0 0
    %463 = vmatprep.subr.bf16.mxu0 0
    %464 = vmatpush2.bf16.msra.mxu0 0
    %465 = vmatprep.subr.bf16.mxu0 0
    %466 = vmatpush2.bf16.msra.mxu0 0
    %467 = vmatprep.subr.bf16.mxu0 0
    %468 = vmatpush2.bf16.msra.mxu0 0
    %469 = vmatprep.mubr.bf16.mxu0 0
    %470 = vmatmul.mubr.bf16.gmra.mxu0 %v427
    %v471 = vpop.f32.mrf.mxu0
    %v472 = vadd.f32 0.0, %v471
    %v473 = vpop.f32.mrf.mxu0
    %v474 = vpop.f32.mrf.mxu0
    %v475 = vadd.f32 0.0, %v474
    %v476 = vpop.f32.mrf.mxu0
    %477 = vmatprep.mubr.bf16.mxu0 0
    %478 = vmatmul.mubr.bf16.gmra.mxu0 %v428
    %v479 = vpop.f32.mrf.mxu0
    %v480 = vadd.f32 0.0, %v479
    %v481 = vpop.f32.mrf.mxu0
    %v482 = vpop.f32.mrf.mxu0
    %v483 = vpop.f32.mrf.mxu0
    %484 = vdwg.mxu0
    %v485 = vld [vmem:[%s5] sm:$0xff]
    %v486 = vld [vmem:[%s5 + $0x8] sm:$0xff]
    %v487 = vld [vmem:[%s5 + $0x10] sm:$0xff]
    %v488 = vld [vmem:[%s5 + $0x18] sm:$0xff]
    %v489 = vpack.c.bf16 %v475, %v472
    %v490 = vpack.c.bf16 %v480, %v480
    %v491 = vpack.c.bf16 %v486, %v485
    %v492 = vpack.c.bf16 %v488, %v487
    %s493 = scalar_lea.vmem %s4, 24
    %v494 = vld [vmem:[%s493] sm:$0xff]
    %v495 = vld [vmem:[%s493 + $0x8] sm:$0xff]
    %v496 = vld [vmem:[%s493 + $0x10] sm:$0x3]
    %v497 = vpack.c.bf16 %v495, %v494
    %v498 = vpack.c.bf16 %v496, %v496
    %499 = vmatprep.subr.bf16.mxu0 0
    %500 = vmatpush1.bf16.msra.mxu0 %v436
    %501 = vmatprep.subr.bf16.mxu0 0
    %502 = vmatpush1.bf16.msra.mxu0 %v435
    %503 = vmatprep.subr.bf16.mxu0 0
    %504 = vmatpush1.bf16.msra.mxu0 %v434
    %505 = vmatprep.subr.bf16.mxu0 0
    %506 = vmatpush1.bf16.msra.mxu0 %v433
    %507 = vmatprep.subr.bf16.mxu0 0
    %508 = vmatpush1.bf16.msra.mxu0 %v432
    %509 = vmatprep.subr.bf16.mxu0 0
    %510 = vmatpush1.bf16.msra.mxu0 %v431
    %511 = vmatprep.subr.bf16.mxu0 0
    %512 = vmatpush1.bf16.msra.mxu0 %v430
    %513 = vmatprep.subr.bf16.mxu0 0
    %514 = vmatpush1.bf16.msra.mxu0 %v429
    %515 = vmatprep.subr.bf16.mxu0 0
    %516 = vmatpush2.bf16.msra.mxu0 0
    %517 = vmatprep.subr.bf16.mxu0 0
    %518 = vmatpush2.bf16.msra.mxu0 0
    %519 = vmatprep.subr.bf16.mxu0 0
    %520 = vmatpush2.bf16.msra.mxu0 0
    %521 = vmatprep.subr.bf16.mxu0 0
    %522 = vmatpush2.bf16.msra.mxu0 0
    %523 = vmatprep.subr.bf16.mxu0 0
    %524 = vmatpush2.bf16.msra.mxu0 0
    %525 = vmatprep.subr.bf16.mxu0 0
    %526 = vmatpush2.bf16.msra.mxu0 0
    %527 = vmatprep.subr.bf16.mxu0 0
    %528 = vmatpush2.bf16.msra.mxu0 0
    %529 = vmatprep.subr.bf16.mxu0 0
    %530 = vmatpush2.bf16.msra.mxu0 0
    %531 = vmatprep.mubr.bf16.mxu0 0
    %532 = vmatmul.mubr.bf16.gmra.mxu0 %v497
    %v533 = vpop.f32.mrf.mxu0
    %v534 = vadd.f32 0.0, %v533
    %v535 = vpop.f32.mrf.mxu0
    %v536 = vpop.f32.mrf.mxu0
    %v537 = vadd.f32 0.0, %v536
    %v538 = vpop.f32.mrf.mxu0
    %539 = vmatprep.mubr.bf16.mxu0 0
    %540 = vmatmul.mubr.bf16.gmra.mxu0 %v498
    %v541 = vpop.f32.mrf.mxu0
    %v542 = vadd.f32 0.0, %v541
    %v543 = vpop.f32.mrf.mxu0
    %v544 = vpop.f32.mrf.mxu0
    %v545 = vpop.f32.mrf.mxu0
    %546 = vdwg.mxu0
    %s547 = scalar_lea.vmem %s5, 32
    %v548 = vld [vmem:[%s547] sm:$0xff]
    %v549 = vld [vmem:[%s547 + $0x8] sm:$0xff]
    %v550 = vld [vmem:[%s547 + $0x10] sm:$0xff]
    %v551 = vld [vmem:[%s547 + $0x18] sm:$0xff]
    %v552 = vpack.c.bf16 %v537, %v534
    %v553 = vpack.c.bf16 %v542, %v542
    %v554 = vpack.c.bf16 %v549, %v548
    %v555 = vpack.c.bf16 %v551, %v550
    %v557 = vsel %vm250, %v552, 0
    %v560 = vsel %vm250, %v553, 0
    %562 = vmatprep.subr.bf16.mxu0 0
    %563 = vmatpush1.bf16.msra.mxu0 0
    %564 = vmatprep.subr.bf16.mxu0 0
    %565 = vmatpush1.bf16.msra.mxu0 0
    %566 = vmatprep.subr.bf16.mxu0 0
    %567 = vmatpush1.bf16.msra.mxu0 0
    %568 = vmatprep.subr.bf16.mxu0 0
    %569 = vmatpush1.bf16.msra.mxu0 0
    %570 = vmatprep.subr.bf16.mxu0 0
    %571 = vmatpush1.bf16.msra.mxu0 0
    %572 = vmatprep.subr.bf16.mxu0 0
    %573 = vmatpush1.bf16.msra.mxu0 0
    %574 = vmatprep.subr.bf16.mxu0 0
    %575 = vmatpush1.bf16.msra.mxu0 %v555
    %576 = vmatprep.subr.bf16.mxu0 0
    %577 = vmatpush1.bf16.msra.mxu0 %v554
    %578 = vmatprep.subr.bf16.mxu0 0
    %579 = vmatpush2.bf16.msra.mxu0 0
    %580 = vmatprep.subr.bf16.mxu0 0
    %581 = vmatpush2.bf16.msra.mxu0 0
    %582 = vmatprep.subr.bf16.mxu0 0
    %583 = vmatpush2.bf16.msra.mxu0 0
    %584 = vmatprep.subr.bf16.mxu0 0
    %585 = vmatpush2.bf16.msra.mxu0 0
    %586 = vmatprep.subr.bf16.mxu0 0
    %587 = vmatpush2.bf16.msra.mxu0 0
    %588 = vmatprep.subr.bf16.mxu0 0
    %589 = vmatpush2.bf16.msra.mxu0 0
    %590 = vmatprep.subr.bf16.mxu0 0
    %591 = vmatpush2.bf16.msra.mxu0 0
    %592 = vmatprep.subr.bf16.mxu0 0
    %593 = vmatpush2.bf16.msra.mxu0 0
    %594 = vmatprep.mubr.bf16.mxu0 0
    %595 = vmatmul.mubr.bf16.gmra.mxu0 %v557
    %v596 = vpop.f32.mrf.mxu0
    %v597 = vadd.f32 0.0, %v596
    %v598 = vpop.f32.mrf.mxu0
    %v599 = vpop.f32.mrf.mxu0
    %v600 = vadd.f32 0.0, %v599
    %v601 = vpop.f32.mrf.mxu0
    %602 = vmatprep.mubr.bf16.mxu0 0
    %603 = vmatmul.mubr.bf16.gmra.mxu0 %v560
    %v604 = vpop.f32.mrf.mxu0
    %v605 = vadd.f32 0.0, %v604
    %v606 = vpop.f32.mrf.mxu0
    %v607 = vpop.f32.mrf.mxu0
    %v608 = vpop.f32.mrf.mxu0
    %609 = vdwg.mxu0
    %v611 = vsel %vm250, %v489, 0
    %v614 = vsel %vm250, %v490, 0
    %616 = vmatprep.subr.bf16.mxu0 0
    %617 = vmatpush1.bf16.msra.mxu0 0
    %618 = vmatprep.subr.bf16.mxu0 0
    %619 = vmatpush1.bf16.msra.mxu0 0
    %620 = vmatprep.subr.bf16.mxu0 0
    %621 = vmatpush1.bf16.msra.mxu0 0
    %622 = vmatprep.subr.bf16.mxu0 0
    %623 = vmatpush1.bf16.msra.mxu0 0
    %624 = vmatprep.subr.bf16.mxu0 0
    %625 = vmatpush1.bf16.msra.mxu0 0
    %626 = vmatprep.subr.bf16.mxu0 0
    %627 = vmatpush1.bf16.msra.mxu0 0
    %628 = vmatprep.subr.bf16.mxu0 0
    %629 = vmatpush1.bf16.msra.mxu0 %v492
    %630 = vmatprep.subr.bf16.mxu0 0
    %631 = vmatpush1.bf16.msra.mxu0 %v491
    %632 = vmatprep.subr.bf16.mxu0 0
    %633 = vmatpush2.bf16.msra.mxu0 0
    %634 = vmatprep.subr.bf16.mxu0 0
    %635 = vmatpush2.bf16.msra.mxu0 0
    %636 = vmatprep.subr.bf16.mxu0 0
    %637 = vmatpush2.bf16.msra.mxu0 0
    %638 = vmatprep.subr.bf16.mxu0 0
    %639 = vmatpush2.bf16.msra.mxu0 0
    %640 = vmatprep.subr.bf16.mxu0 0
    %641 = vmatpush2.bf16.msra.mxu0 0
    %642 = vmatprep.subr.bf16.mxu0 0
    %643 = vmatpush2.bf16.msra.mxu0 0
    %644 = vmatprep.subr.bf16.mxu0 0
    %645 = vmatpush2.bf16.msra.mxu0 0
    %646 = vmatprep.subr.bf16.mxu0 0
    %647 = vmatpush2.bf16.msra.mxu0 0
    %648 = vmatprep.mubr.bf16.mxu0 0
    %649 = vmatmul.mubr.bf16.gmra.mxu0 %v611
    %v650 = vpop.f32.mrf.mxu0
    %v651 = vadd.f32 %v597, %v650
    %v652 = vpop.f32.mrf.mxu0
    %v653 = vpop.f32.mrf.mxu0
    %v654 = vadd.f32 %v600, %v653
    %v655 = vpop.f32.mrf.mxu0
    %656 = vmatprep.mubr.bf16.mxu0 0
    %657 = vmatmul.mubr.bf16.gmra.mxu0 %v614
    %v658 = vpop.f32.mrf.mxu0
    %v659 = vadd.f32 %v605, %v658
    %v660 = vpop.f32.mrf.mxu0
    %v661 = vpop.f32.mrf.mxu0
    %v662 = vpop.f32.mrf.mxu0
    %663 = vdwg.mxu0
    %s664 = scalar_lea.vmem %s4, 48
    %v665 = vld [vmem:[%s664] sm:$0xff]
    %v666 = vld [vmem:[%s664 + $0x8] sm:$0xff]
    %v667 = vld [vmem:[%s664 + $0x10] sm:$0x3]
    %v668 = vpack.c.bf16 %v666, %v665
    %v669 = vpack.c.bf16 %v667, %v667
    %670 = vmatprep.subr.bf16.mxu0 0
    %671 = vmatpush1.bf16.msra.mxu0 %v436
    %672 = vmatprep.subr.bf16.mxu0 0
    %673 = vmatpush1.bf16.msra.mxu0 %v435
    %674 = vmatprep.subr.bf16.mxu0 0
    %675 = vmatpush1.bf16.msra.mxu0 %v434
    %676 = vmatprep.subr.bf16.mxu0 0
    %677 = vmatpush1.bf16.msra.mxu0 %v433
    %678 = vmatprep.subr.bf16.mxu0 0
    %679 = vmatpush1.bf16.msra.mxu0 %v432
    %680 = vmatprep.subr.bf16.mxu0 0
    %681 = vmatpush1.bf16.msra.mxu0 %v431
    %682 = vmatprep.subr.bf16.mxu0 0
    %683 = vmatpush1.bf16.msra.mxu0 %v430
    %684 = vmatprep.subr.bf16.mxu0 0
    %685 = vmatpush1.bf16.msra.mxu0 %v429
    %686 = vmatprep.subr.bf16.mxu0 0
    %687 = vmatpush2.bf16.msra.mxu0 0
    %688 = vmatprep.subr.bf16.mxu0 0
    %689 = vmatpush2.bf16.msra.mxu0 0
    %690 = vmatprep.subr.bf16.mxu0 0
    %691 = vmatpush2.bf16.msra.mxu0 0
    %692 = vmatprep.subr.bf16.mxu0 0
    %693 = vmatpush2.bf16.msra.mxu0 0
    %694 = vmatprep.subr.bf16.mxu0 0
    %695 = vmatpush2.bf16.msra.mxu0 0
    %696 = vmatprep.subr.bf16.mxu0 0
    %697 = vmatpush2.bf16.msra.mxu0 0
    %698 = vmatprep.subr.bf16.mxu0 0
    %699 = vmatpush2.bf16.msra.mxu0 0
    %700 = vmatprep.subr.bf16.mxu0 0
    %701 = vmatpush2.bf16.msra.mxu0 0
    %702 = vmatprep.mubr.bf16.mxu0 0
    %703 = vmatmul.mubr.bf16.gmra.mxu0 %v668
    %v704 = vpop.f32.mrf.mxu0
    %v705 = vadd.f32 0.0, %v704
    %v706 = vpop.f32.mrf.mxu0
    %v707 = vpop.f32.mrf.mxu0
    %v708 = vadd.f32 0.0, %v707
    %v709 = vpop.f32.mrf.mxu0
    %710 = vmatprep.mubr.bf16.mxu0 0
    %711 = vmatmul.mubr.bf16.gmra.mxu0 %v669
    %v712 = vpop.f32.mrf.mxu0
    %v713 = vadd.f32 0.0, %v712
    %v714 = vpop.f32.mrf.mxu0
    %v715 = vpop.f32.mrf.mxu0
    %v716 = vpop.f32.mrf.mxu0
    %717 = vdwg.mxu0
    %s718 = scalar_lea.vmem %s5, 64
    %v719 = vld [vmem:[%s718] sm:$0xff]
    %v720 = vld [vmem:[%s718 + $0x8] sm:$0xff]
    %v721 = vld [vmem:[%s718 + $0x10] sm:$0xff]
    %v722 = vld [vmem:[%s718 + $0x18] sm:$0xff]
    %v723 = vpack.c.bf16 %v708, %v705
    %v724 = vpack.c.bf16 %v713, %v713
    %v725 = vpack.c.bf16 %v720, %v719
    %v726 = vpack.c.bf16 %v722, %v721
    %v728 = vsel %vm250, %v723, 0
    %v731 = vsel %vm250, %v724, 0
    %733 = vmatprep.subr.bf16.mxu0 0
    %734 = vmatpush1.bf16.msra.mxu0 0
    %735 = vmatprep.subr.bf16.mxu0 0
    %736 = vmatpush1.bf16.msra.mxu0 0
    %737 = vmatprep.subr.bf16.mxu0 0
    %738 = vmatpush1.bf16.msra.mxu0 0
    %739 = vmatprep.subr.bf16.mxu0 0
    %740 = vmatpush1.bf16.msra.mxu0 0
    %741 = vmatprep.subr.bf16.mxu0 0
    %742 = vmatpush1.bf16.msra.mxu0 0
    %743 = vmatprep.subr.bf16.mxu0 0
    %744 = vmatpush1.bf16.msra.mxu0 0
    %745 = vmatprep.subr.bf16.mxu0 0
    %746 = vmatpush1.bf16.msra.mxu0 %v726
    %747 = vmatprep.subr.bf16.mxu0 0
    %748 = vmatpush1.bf16.msra.mxu0 %v725
    %749 = vmatprep.subr.bf16.mxu0 0
    %750 = vmatpush2.bf16.msra.mxu0 0
    %751 = vmatprep.subr.bf16.mxu0 0
    %752 = vmatpush2.bf16.msra.mxu0 0
    %753 = vmatprep.subr.bf16.mxu0 0
    %754 = vmatpush2.bf16.msra.mxu0 0
    %755 = vmatprep.subr.bf16.mxu0 0
    %756 = vmatpush2.bf16.msra.mxu0 0
    %757 = vmatprep.subr.bf16.mxu0 0
    %758 = vmatpush2.bf16.msra.mxu0 0
    %759 = vmatprep.subr.bf16.mxu0 0
    %760 = vmatpush2.bf16.msra.mxu0 0
    %761 = vmatprep.subr.bf16.mxu0 0
    %762 = vmatpush2.bf16.msra.mxu0 0
    %763 = vmatprep.subr.bf16.mxu0 0
    %764 = vmatpush2.bf16.msra.mxu0 0
    %765 = vmatprep.mubr.bf16.mxu0 0
    %766 = vmatmul.mubr.bf16.gmra.mxu0 %v728
    %v767 = vpop.f32.mrf.mxu0
    %v768 = vadd.f32 0.0, %v767
    %v769 = vpop.f32.mrf.mxu0
    %v770 = vpop.f32.mrf.mxu0
    %v771 = vadd.f32 0.0, %v770
    %v772 = vpop.f32.mrf.mxu0
    %773 = vmatprep.mubr.bf16.mxu0 0
    %774 = vmatmul.mubr.bf16.gmra.mxu0 %v731
    %v775 = vpop.f32.mrf.mxu0
    %v776 = vadd.f32 0.0, %v775
    %v777 = vpop.f32.mrf.mxu0
    %v778 = vpop.f32.mrf.mxu0
    %v779 = vpop.f32.mrf.mxu0
    %780 = vdwg.mxu0
    %v781 = vadd.f32 %v651, %v768
    %v782 = vadd.f32 %v654, %v771
    %v783 = vadd.f32 %v659, %v776
    %s784 = scalar_lea.vmem %s4, 72
    %v785 = vld [vmem:[%s784] sm:$0xff]
    %v786 = vld [vmem:[%s784 + $0x8] sm:$0xff]
    %v787 = vld [vmem:[%s784 + $0x10] sm:$0x3]
    %v788 = vpack.c.bf16 %v786, %v785
    %v789 = vpack.c.bf16 %v787, %v787
    %790 = vmatprep.subr.bf16.mxu0 0
    %791 = vmatpush1.bf16.msra.mxu0 %v436
    %792 = vmatprep.subr.bf16.mxu0 0
    %793 = vmatpush1.bf16.msra.mxu0 %v435
    %794 = vmatprep.subr.bf16.mxu0 0
    %795 = vmatpush1.bf16.msra.mxu0 %v434
    %796 = vmatprep.subr.bf16.mxu0 0
    %797 = vmatpush1.bf16.msra.mxu0 %v433
    %798 = vmatprep.subr.bf16.mxu0 0
    %799 = vmatpush1.bf16.msra.mxu0 %v432
    %800 = vmatprep.subr.bf16.mxu0 0
    %801 = vmatpush1.bf16.msra.mxu0 %v431
    %802 = vmatprep.subr.bf16.mxu0 0
    %803 = vmatpush1.bf16.msra.mxu0 %v430
    %804 = vmatprep.subr.bf16.mxu0 0
    %805 = vmatpush1.bf16.msra.mxu0 %v429
    %806 = vmatprep.subr.bf16.mxu0 0
    %807 = vmatpush2.bf16.msra.mxu0 0
    %808 = vmatprep.subr.bf16.mxu0 0
    %809 = vmatpush2.bf16.msra.mxu0 0
    %810 = vmatprep.subr.bf16.mxu0 0
    %811 = vmatpush2.bf16.msra.mxu0 0
    %812 = vmatprep.subr.bf16.mxu0 0
    %813 = vmatpush2.bf16.msra.mxu0 0
    %814 = vmatprep.subr.bf16.mxu0 0
    %815 = vmatpush2.bf16.msra.mxu0 0
    %816 = vmatprep.subr.bf16.mxu0 0
    %817 = vmatpush2.bf16.msra.mxu0 0
    %818 = vmatprep.subr.bf16.mxu0 0
    %819 = vmatpush2.bf16.msra.mxu0 0
    %820 = vmatprep.subr.bf16.mxu0 0
    %821 = vmatpush2.bf16.msra.mxu0 0
    %822 = vmatprep.mubr.bf16.mxu0 0
    %823 = vmatmul.mubr.bf16.gmra.mxu0 %v788
    %v824 = vpop.f32.mrf.mxu0
    %v825 = vadd.f32 0.0, %v824
    %v826 = vpop.f32.mrf.mxu0
    %v827 = vpop.f32.mrf.mxu0
    %v828 = vadd.f32 0.0, %v827
    %v829 = vpop.f32.mrf.mxu0
    %830 = vmatprep.mubr.bf16.mxu0 0
    %831 = vmatmul.mubr.bf16.gmra.mxu0 %v789
    %v832 = vpop.f32.mrf.mxu0
    %v833 = vadd.f32 0.0, %v832
    %v834 = vpop.f32.mrf.mxu0
    %v835 = vpop.f32.mrf.mxu0
    %v836 = vpop.f32.mrf.mxu0
    %837 = vdwg.mxu0
    %s838 = scalar_lea.vmem %s5, 96
    %v839 = vld [vmem:[%s838] sm:$0xff]
    %v840 = vld [vmem:[%s838 + $0x8] sm:$0xff]
    %v841 = vld [vmem:[%s838 + $0x10] sm:$0xff]
    %v842 = vld [vmem:[%s838 + $0x18] sm:$0xff]
    %v843 = vpack.c.bf16 %v828, %v825
    %v844 = vpack.c.bf16 %v833, %v833
    %v845 = vpack.c.bf16 %v840, %v839
    %v846 = vpack.c.bf16 %v842, %v841
    %v848 = vsel %vm250, %v843, 0
    %v851 = vsel %vm250, %v844, 0
    %853 = vmatprep.subr.bf16.mxu0 0
    %854 = vmatpush1.bf16.msra.mxu0 0
    %855 = vmatprep.subr.bf16.mxu0 0
    %856 = vmatpush1.bf16.msra.mxu0 0
    %857 = vmatprep.subr.bf16.mxu0 0
    %858 = vmatpush1.bf16.msra.mxu0 0
    %859 = vmatprep.subr.bf16.mxu0 0
    %860 = vmatpush1.bf16.msra.mxu0 0
    %861 = vmatprep.subr.bf16.mxu0 0
    %862 = vmatpush1.bf16.msra.mxu0 0
    %863 = vmatprep.subr.bf16.mxu0 0
    %864 = vmatpush1.bf16.msra.mxu0 0
    %865 = vmatprep.subr.bf16.mxu0 0
    %866 = vmatpush1.bf16.msra.mxu0 %v846
    %867 = vmatprep.subr.bf16.mxu0 0
    %868 = vmatpush1.bf16.msra.mxu0 %v845
    %869 = vmatprep.subr.bf16.mxu0 0
    %870 = vmatpush2.bf16.msra.mxu0 0
    %871 = vmatprep.subr.bf16.mxu0 0
    %872 = vmatpush2.bf16.msra.mxu0 0
    %873 = vmatprep.subr.bf16.mxu0 0
    %874 = vmatpush2.bf16.msra.mxu0 0
    %875 = vmatprep.subr.bf16.mxu0 0
    %876 = vmatpush2.bf16.msra.mxu0 0
    %877 = vmatprep.subr.bf16.mxu0 0
    %878 = vmatpush2.bf16.msra.mxu0 0
    %879 = vmatprep.subr.bf16.mxu0 0
    %880 = vmatpush2.bf16.msra.mxu0 0
    %881 = vmatprep.subr.bf16.mxu0 0
    %882 = vmatpush2.bf16.msra.mxu0 0
    %883 = vmatprep.subr.bf16.mxu0 0
    %884 = vmatpush2.bf16.msra.mxu0 0
    %885 = vmatprep.mubr.bf16.mxu0 0
    %886 = vmatmul.mubr.bf16.gmra.mxu0 %v848
    %v887 = vpop.f32.mrf.mxu0
    %v888 = vadd.f32 0.0, %v887
    %v889 = vpop.f32.mrf.mxu0
    %v890 = vpop.f32.mrf.mxu0
    %v891 = vadd.f32 0.0, %v890
    %v892 = vpop.f32.mrf.mxu0
    %893 = vmatprep.mubr.bf16.mxu0 0
    %894 = vmatmul.mubr.bf16.gmra.mxu0 %v851
    %v895 = vpop.f32.mrf.mxu0
    %v896 = vadd.f32 0.0, %v895
    %v897 = vpop.f32.mrf.mxu0
    %v898 = vpop.f32.mrf.mxu0
    %v899 = vpop.f32.mrf.mxu0
    %900 = vdwg.mxu0
    %v901 = vadd.f32 %v781, %v888
    %v902 = vadd.f32 %v782, %v891
    %v903 = vadd.f32 %v783, %v896
    %s904 = scalar_lea.vmem %s4, 96
    %v905 = vld [vmem:[%s904] sm:$0xff]
    %v906 = vld [vmem:[%s904 + $0x8] sm:$0xff]
    %v907 = vld [vmem:[%s904 + $0x10] sm:$0x3]
    %v908 = vpack.c.bf16 %v906, %v905
    %v909 = vpack.c.bf16 %v907, %v907
    %910 = vmatprep.subr.bf16.mxu0 0
    %911 = vmatpush1.bf16.msra.mxu0 %v436
    %912 = vmatprep.subr.bf16.mxu0 0
    %913 = vmatpush1.bf16.msra.mxu0 %v435
    %914 = vmatprep.subr.bf16.mxu0 0
    %915 = vmatpush1.bf16.msra.mxu0 %v434
    %916 = vmatprep.subr.bf16.mxu0 0
    %917 = vmatpush1.bf16.msra.mxu0 %v433
    %918 = vmatprep.subr.bf16.mxu0 0
    %919 = vmatpush1.bf16.msra.mxu0 %v432
    %920 = vmatprep.subr.bf16.mxu0 0
    %921 = vmatpush1.bf16.msra.mxu0 %v431
    %922 = vmatprep.subr.bf16.mxu0 0
    %923 = vmatpush1.bf16.msra.mxu0 %v430
    %924 = vmatprep.subr.bf16.mxu0 0
    %925 = vmatpush1.bf16.msra.mxu0 %v429
    %926 = vmatprep.subr.bf16.mxu0 0
    %927 = vmatpush2.bf16.msra.mxu0 0
    %928 = vmatprep.subr.bf16.mxu0 0
    %929 = vmatpush2.bf16.msra.mxu0 0
    %930 = vmatprep.subr.bf16.mxu0 0
    %931 = vmatpush2.bf16.msra.mxu0 0
    %932 = vmatprep.subr.bf16.mxu0 0
    %933 = vmatpush2.bf16.msra.mxu0 0
    %934 = vmatprep.subr.bf16.mxu0 0
    %935 = vmatpush2.bf16.msra.mxu0 0
    %936 = vmatprep.subr.bf16.mxu0 0
    %937 = vmatpush2.bf16.msra.mxu0 0
    %938 = vmatprep.subr.bf16.mxu0 0
    %939 = vmatpush2.bf16.msra.mxu0 0
    %940 = vmatprep.subr.bf16.mxu0 0
    %941 = vmatpush2.bf16.msra.mxu0 0
    %942 = vmatprep.mubr.bf16.mxu0 0
    %943 = vmatmul.mubr.bf16.gmra.mxu0 %v908
    %v944 = vpop.f32.mrf.mxu0
    %v945 = vadd.f32 0.0, %v944
    %v946 = vpop.f32.mrf.mxu0
    %v947 = vpop.f32.mrf.mxu0
    %v948 = vadd.f32 0.0, %v947
    %v949 = vpop.f32.mrf.mxu0
    %950 = vmatprep.mubr.bf16.mxu0 0
    %951 = vmatmul.mubr.bf16.gmra.mxu0 %v909
    %v952 = vpop.f32.mrf.mxu0
    %v953 = vadd.f32 0.0, %v952
    %v954 = vpop.f32.mrf.mxu0
    %v955 = vpop.f32.mrf.mxu0
    %v956 = vpop.f32.mrf.mxu0
    %957 = vdwg.mxu0
    %s958 = scalar_lea.vmem %s5, 128
    %v959 = vld [vmem:[%s958] sm:$0xff]
    %v960 = vld [vmem:[%s958 + $0x8] sm:$0xff]
    %v961 = vld [vmem:[%s958 + $0x10] sm:$0xff]
    %v962 = vld [vmem:[%s958 + $0x18] sm:$0xff]
    %v963 = vpack.c.bf16 %v948, %v945
    %v964 = vpack.c.bf16 %v953, %v953
    %v965 = vpack.c.bf16 %v960, %v959
    %v966 = vpack.c.bf16 %v962, %v961
    %v968 = vsel %vm250, %v963, 0
    %v971 = vsel %vm250, %v964, 0
    %973 = vmatprep.subr.bf16.mxu0 0
    %974 = vmatpush1.bf16.msra.mxu0 0
    %975 = vmatprep.subr.bf16.mxu0 0
    %976 = vmatpush1.bf16.msra.mxu0 0
    %977 = vmatprep.subr.bf16.mxu0 0
    %978 = vmatpush1.bf16.msra.mxu0 0
    %979 = vmatprep.subr.bf16.mxu0 0
    %980 = vmatpush1.bf16.msra.mxu0 0
    %981 = vmatprep.subr.bf16.mxu0 0
    %982 = vmatpush1.bf16.msra.mxu0 0
    %983 = vmatprep.subr.bf16.mxu0 0
    %984 = vmatpush1.bf16.msra.mxu0 0
    %985 = vmatprep.subr.bf16.mxu0 0
    %986 = vmatpush1.bf16.msra.mxu0 %v966
    %987 = vmatprep.subr.bf16.mxu0 0
    %988 = vmatpush1.bf16.msra.mxu0 %v965
    %989 = vmatprep.subr.bf16.mxu0 0
    %990 = vmatpush2.bf16.msra.mxu0 0
    %991 = vmatprep.subr.bf16.mxu0 0
    %992 = vmatpush2.bf16.msra.mxu0 0
    %993 = vmatprep.subr.bf16.mxu0 0
    %994 = vmatpush2.bf16.msra.mxu0 0
    %995 = vmatprep.subr.bf16.mxu0 0
    %996 = vmatpush2.bf16.msra.mxu0 0
    %997 = vmatprep.subr.bf16.mxu0 0
    %998 = vmatpush2.bf16.msra.mxu0 0
    %999 = vmatprep.subr.bf16.mxu0 0
    %1000 = vmatpush2.bf16.msra.mxu0 0
    %1001 = vmatprep.subr.bf16.mxu0 0
    %1002 = vmatpush2.bf16.msra.mxu0 0
    %1003 = vmatprep.subr.bf16.mxu0 0
    %1004 = vmatpush2.bf16.msra.mxu0 0
    %1005 = vmatprep.mubr.bf16.mxu0 0
    %1006 = vmatmul.mubr.bf16.gmra.mxu0 %v968
    %v1007 = vpop.f32.mrf.mxu0
    %v1008 = vadd.f32 0.0, %v1007
    %v1009 = vpop.f32.mrf.mxu0
    %v1010 = vpop.f32.mrf.mxu0
    %v1011 = vadd.f32 0.0, %v1010
    %v1012 = vpop.f32.mrf.mxu0
    %1013 = vmatprep.mubr.bf16.mxu0 0
    %1014 = vmatmul.mubr.bf16.gmra.mxu0 %v971
    %v1015 = vpop.f32.mrf.mxu0
    %v1016 = vadd.f32 0.0, %v1015
    %v1017 = vpop.f32.mrf.mxu0
    %v1018 = vpop.f32.mrf.mxu0
    %v1019 = vpop.f32.mrf.mxu0
    %1020 = vdwg.mxu0
    %v1021 = vadd.f32 %v901, %v1008
    %v1022 = vadd.f32 %v902, %v1011
    %v1023 = vadd.f32 %v903, %v1016
    %s1024 = scalar_lea.vmem %s4, 120
    %v1025 = vld [vmem:[%s1024] sm:$0xff]
    %v1026 = vld [vmem:[%s1024 + $0x8] sm:$0xff]
    %v1027 = vld [vmem:[%s1024 + $0x10] sm:$0x3]
    %v1028 = vpack.c.bf16 %v1026, %v1025
    %v1029 = vpack.c.bf16 %v1027, %v1027
    %1030 = vmatprep.subr.bf16.mxu0 0
    %1031 = vmatpush1.bf16.msra.mxu0 %v436
    %1032 = vmatprep.subr.bf16.mxu0 0
    %1033 = vmatpush1.bf16.msra.mxu0 %v435
    %1034 = vmatprep.subr.bf16.mxu0 0
    %1035 = vmatpush1.bf16.msra.mxu0 %v434
    %1036 = vmatprep.subr.bf16.mxu0 0
    %1037 = vmatpush1.bf16.msra.mxu0 %v433
    %1038 = vmatprep.subr.bf16.mxu0 0
    %1039 = vmatpush1.bf16.msra.mxu0 %v432
    %1040 = vmatprep.subr.bf16.mxu0 0
    %1041 = vmatpush1.bf16.msra.mxu0 %v431
    %1042 = vmatprep.subr.bf16.mxu0 0
    %1043 = vmatpush1.bf16.msra.mxu0 %v430
    %1044 = vmatprep.subr.bf16.mxu0 0
    %1045 = vmatpush1.bf16.msra.mxu0 %v429
    %1046 = vmatprep.subr.bf16.mxu0 0
    %1047 = vmatpush2.bf16.msra.mxu0 0
    %1048 = vmatprep.subr.bf16.mxu0 0
    %1049 = vmatpush2.bf16.msra.mxu0 0
    %1050 = vmatprep.subr.bf16.mxu0 0
    %1051 = vmatpush2.bf16.msra.mxu0 0
    %1052 = vmatprep.subr.bf16.mxu0 0
    %1053 = vmatpush2.bf16.msra.mxu0 0
    %1054 = vmatprep.subr.bf16.mxu0 0
    %1055 = vmatpush2.bf16.msra.mxu0 0
    %1056 = vmatprep.subr.bf16.mxu0 0
    %1057 = vmatpush2.bf16.msra.mxu0 0
    %1058 = vmatprep.subr.bf16.mxu0 0
    %1059 = vmatpush2.bf16.msra.mxu0 0
    %1060 = vmatprep.subr.bf16.mxu0 0
    %1061 = vmatpush2.bf16.msra.mxu0 0
    %1062 = vmatprep.mubr.bf16.mxu0 0
    %1063 = vmatmul.mubr.bf16.gmra.mxu0 %v1028
    %v1064 = vpop.f32.mrf.mxu0
    %v1065 = vadd.f32 0.0, %v1064
    %v1066 = vpop.f32.mrf.mxu0
    %v1067 = vpop.f32.mrf.mxu0
    %v1068 = vadd.f32 0.0, %v1067
    %v1069 = vpop.f32.mrf.mxu0
    %1070 = vmatprep.mubr.bf16.mxu0 0
    %1071 = vmatmul.mubr.bf16.gmra.mxu0 %v1029
    %v1072 = vpop.f32.mrf.mxu0
    %v1073 = vadd.f32 0.0, %v1072
    %v1074 = vpop.f32.mrf.mxu0
    %v1075 = vpop.f32.mrf.mxu0
    %v1076 = vpop.f32.mrf.mxu0
    %1077 = vdwg.mxu0
    %s1078 = scalar_lea.vmem %s5, 160
    %v1079 = vld [vmem:[%s1078] sm:$0xff]
    %v1080 = vld [vmem:[%s1078 + $0x8] sm:$0xff]
    %v1081 = vld [vmem:[%s1078 + $0x10] sm:$0xff]
    %v1082 = vld [vmem:[%s1078 + $0x18] sm:$0xff]
    %v1083 = vpack.c.bf16 %v1068, %v1065
    %v1084 = vpack.c.bf16 %v1073, %v1073
    %v1085 = vpack.c.bf16 %v1080, %v1079
    %v1086 = vpack.c.bf16 %v1082, %v1081
    %v1088 = vsel %vm250, %v1083, 0
    %v1091 = vsel %vm250, %v1084, 0
    %1093 = vmatprep.subr.bf16.mxu0 0
    %1094 = vmatpush1.bf16.msra.mxu0 0
    %1095 = vmatprep.subr.bf16.mxu0 0
    %1096 = vmatpush1.bf16.msra.mxu0 0
    %1097 = vmatprep.subr.bf16.mxu0 0
    %1098 = vmatpush1.bf16.msra.mxu0 0
    %1099 = vmatprep.subr.bf16.mxu0 0
    %1100 = vmatpush1.bf16.msra.mxu0 0
    %1101 = vmatprep.subr.bf16.mxu0 0
    %1102 = vmatpush1.bf16.msra.mxu0 0
    %1103 = vmatprep.subr.bf16.mxu0 0
    %1104 = vmatpush1.bf16.msra.mxu0 0
    %1105 = vmatprep.subr.bf16.mxu0 0
    %1106 = vmatpush1.bf16.msra.mxu0 %v1086
    %1107 = vmatprep.subr.bf16.mxu0 0
    %1108 = vmatpush1.bf16.msra.mxu0 %v1085
    %1109 = vmatprep.subr.bf16.mxu0 0
    %1110 = vmatpush2.bf16.msra.mxu0 0
    %1111 = vmatprep.subr.bf16.mxu0 0
    %1112 = vmatpush2.bf16.msra.mxu0 0
    %1113 = vmatprep.subr.bf16.mxu0 0
    %1114 = vmatpush2.bf16.msra.mxu0 0
    %1115 = vmatprep.subr.bf16.mxu0 0
    %1116 = vmatpush2.bf16.msra.mxu0 0
    %1117 = vmatprep.subr.bf16.mxu0 0
    %1118 = vmatpush2.bf16.msra.mxu0 0
    %1119 = vmatprep.subr.bf16.mxu0 0
    %1120 = vmatpush2.bf16.msra.mxu0 0
    %1121 = vmatprep.subr.bf16.mxu0 0
    %1122 = vmatpush2.bf16.msra.mxu0 0
    %1123 = vmatprep.subr.bf16.mxu0 0
    %1124 = vmatpush2.bf16.msra.mxu0 0
    %1125 = vmatprep.mubr.bf16.mxu0 0
    %1126 = vmatmul.mubr.bf16.gmra.mxu0 %v1088
    %v1127 = vpop.f32.mrf.mxu0
    %v1128 = vadd.f32 0.0, %v1127
    %v1129 = vpop.f32.mrf.mxu0
    %v1130 = vpop.f32.mrf.mxu0
    %v1131 = vadd.f32 0.0, %v1130
    %v1132 = vpop.f32.mrf.mxu0
    %1133 = vmatprep.mubr.bf16.mxu0 0
    %1134 = vmatmul.mubr.bf16.gmra.mxu0 %v1091
    %v1135 = vpop.f32.mrf.mxu0
    %v1136 = vadd.f32 0.0, %v1135
    %v1137 = vpop.f32.mrf.mxu0
    %v1138 = vpop.f32.mrf.mxu0
    %v1139 = vpop.f32.mrf.mxu0
    %1140 = vdwg.mxu0
    %v1141 = vadd.f32 %v1021, %v1128
    %v1142 = vadd.f32 %v1022, %v1131
    %v1143 = vadd.f32 %v1023, %v1136
    %s1144 = scalar_lea.vmem %s4, 144
    %v1145 = vld [vmem:[%s1144] sm:$0xff]
    %v1146 = vld [vmem:[%s1144 + $0x8] sm:$0xff]
    %v1147 = vld [vmem:[%s1144 + $0x10] sm:$0x3]
    %v1148 = vpack.c.bf16 %v1146, %v1145
    %v1149 = vpack.c.bf16 %v1147, %v1147
    %1150 = vmatprep.subr.bf16.mxu0 0
    %1151 = vmatpush1.bf16.msra.mxu0 %v436
    %1152 = vmatprep.subr.bf16.mxu0 0
    %1153 = vmatpush1.bf16.msra.mxu0 %v435
    %1154 = vmatprep.subr.bf16.mxu0 0
    %1155 = vmatpush1.bf16.msra.mxu0 %v434
    %1156 = vmatprep.subr.bf16.mxu0 0
    %1157 = vmatpush1.bf16.msra.mxu0 %v433
    %1158 = vmatprep.subr.bf16.mxu0 0
    %1159 = vmatpush1.bf16.msra.mxu0 %v432
    %1160 = vmatprep.subr.bf16.mxu0 0
    %1161 = vmatpush1.bf16.msra.mxu0 %v431
    %1162 = vmatprep.subr.bf16.mxu0 0
    %1163 = vmatpush1.bf16.msra.mxu0 %v430
    %1164 = vmatprep.subr.bf16.mxu0 0
    %1165 = vmatpush1.bf16.msra.mxu0 %v429
    %1166 = vmatprep.subr.bf16.mxu0 0
    %1167 = vmatpush2.bf16.msra.mxu0 0
    %1168 = vmatprep.subr.bf16.mxu0 0
    %1169 = vmatpush2.bf16.msra.mxu0 0
    %1170 = vmatprep.subr.bf16.mxu0 0
    %1171 = vmatpush2.bf16.msra.mxu0 0
    %1172 = vmatprep.subr.bf16.mxu0 0
    %1173 = vmatpush2.bf16.msra.mxu0 0
    %1174 = vmatprep.subr.bf16.mxu0 0
    %1175 = vmatpush2.bf16.msra.mxu0 0
    %1176 = vmatprep.subr.bf16.mxu0 0
    %1177 = vmatpush2.bf16.msra.mxu0 0
    %1178 = vmatprep.subr.bf16.mxu0 0
    %1179 = vmatpush2.bf16.msra.mxu0 0
    %1180 = vmatprep.subr.bf16.mxu0 0
    %1181 = vmatpush2.bf16.msra.mxu0 0
    %1182 = vmatprep.mubr.bf16.mxu0 0
    %1183 = vmatmul.mubr.bf16.gmra.mxu0 %v1148
    %v1184 = vpop.f32.mrf.mxu0
    %v1185 = vadd.f32 0.0, %v1184
    %v1186 = vpop.f32.mrf.mxu0
    %v1187 = vpop.f32.mrf.mxu0
    %v1188 = vadd.f32 0.0, %v1187
    %v1189 = vpop.f32.mrf.mxu0
    %1190 = vmatprep.mubr.bf16.mxu0 0
    %1191 = vmatmul.mubr.bf16.gmra.mxu0 %v1149
    %v1192 = vpop.f32.mrf.mxu0
    %v1193 = vadd.f32 0.0, %v1192
    %v1194 = vpop.f32.mrf.mxu0
    %v1195 = vpop.f32.mrf.mxu0
    %v1196 = vpop.f32.mrf.mxu0
    %1197 = vdwg.mxu0
    %s1198 = scalar_lea.vmem %s5, 192
    %v1199 = vld [vmem:[%s1198] sm:$0xff]
    %v1200 = vld [vmem:[%s1198 + $0x8] sm:$0xff]
    %v1201 = vld [vmem:[%s1198 + $0x10] sm:$0xff]
    %v1202 = vld [vmem:[%s1198 + $0x18] sm:$0xff]
    %v1203 = vpack.c.bf16 %v1188, %v1185
    %v1204 = vpack.c.bf16 %v1193, %v1193
    %v1205 = vpack.c.bf16 %v1200, %v1199
    %v1206 = vpack.c.bf16 %v1202, %v1201
    %v1208 = vsel %vm250, %v1203, 0
    %v1211 = vsel %vm250, %v1204, 0
    %1213 = vmatprep.subr.bf16.mxu0 0
    %1214 = vmatpush1.bf16.msra.mxu0 0
    %1215 = vmatprep.subr.bf16.mxu0 0
    %1216 = vmatpush1.bf16.msra.mxu0 0
    %1217 = vmatprep.subr.bf16.mxu0 0
    %1218 = vmatpush1.bf16.msra.mxu0 0
    %1219 = vmatprep.subr.bf16.mxu0 0
    %1220 = vmatpush1.bf16.msra.mxu0 0
    %1221 = vmatprep.subr.bf16.mxu0 0
    %1222 = vmatpush1.bf16.msra.mxu0 0
    %1223 = vmatprep.subr.bf16.mxu0 0
    %1224 = vmatpush1.bf16.msra.mxu0 0
    %1225 = vmatprep.subr.bf16.mxu0 0
    %1226 = vmatpush1.bf16.msra.mxu0 %v1206
    %1227 = vmatprep.subr.bf16.mxu0 0
    %1228 = vmatpush1.bf16.msra.mxu0 %v1205
    %1229 = vmatprep.subr.bf16.mxu0 0
    %1230 = vmatpush2.bf16.msra.mxu0 0
    %1231 = vmatprep.subr.bf16.mxu0 0
    %1232 = vmatpush2.bf16.msra.mxu0 0
    %1233 = vmatprep.subr.bf16.mxu0 0
    %1234 = vmatpush2.bf16.msra.mxu0 0
    %1235 = vmatprep.subr.bf16.mxu0 0
    %1236 = vmatpush2.bf16.msra.mxu0 0
    %1237 = vmatprep.subr.bf16.mxu0 0
    %1238 = vmatpush2.bf16.msra.mxu0 0
    %1239 = vmatprep.subr.bf16.mxu0 0
    %1240 = vmatpush2.bf16.msra.mxu0 0
    %1241 = vmatprep.subr.bf16.mxu0 0
    %1242 = vmatpush2.bf16.msra.mxu0 0
    %1243 = vmatprep.subr.bf16.mxu0 0
    %1244 = vmatpush2.bf16.msra.mxu0 0
    %1245 = vmatprep.mubr.bf16.mxu0 0
    %1246 = vmatmul.mubr.bf16.gmra.mxu0 %v1208
    %v1247 = vpop.f32.mrf.mxu0
    %v1248 = vadd.f32 0.0, %v1247
    %v1249 = vpop.f32.mrf.mxu0
    %v1250 = vpop.f32.mrf.mxu0
    %v1251 = vadd.f32 0.0, %v1250
    %v1252 = vpop.f32.mrf.mxu0
    %1253 = vmatprep.mubr.bf16.mxu0 0
    %1254 = vmatmul.mubr.bf16.gmra.mxu0 %v1211
    %v1255 = vpop.f32.mrf.mxu0
    %v1256 = vadd.f32 0.0, %v1255
    %v1257 = vpop.f32.mrf.mxu0
    %v1258 = vpop.f32.mrf.mxu0
    %v1259 = vpop.f32.mrf.mxu0
    %1260 = vdwg.mxu0
    %v1261 = vadd.f32 %v1141, %v1248
    %v1262 = vadd.f32 %v1142, %v1251
    %v1263 = vadd.f32 %v1143, %v1256
    %s1264 = scalar_lea.vmem %s4, 168
    %v1265 = vld [vmem:[%s1264] sm:$0xff]
    %v1266 = vld [vmem:[%s1264 + $0x8] sm:$0xff]
    %v1267 = vld [vmem:[%s1264 + $0x10] sm:$0x3]
    %v1268 = vpack.c.bf16 %v1266, %v1265
    %v1269 = vpack.c.bf16 %v1267, %v1267
    %1270 = vmatprep.subr.bf16.mxu0 0
    %1271 = vmatpush1.bf16.msra.mxu0 %v436
    %1272 = vmatprep.subr.bf16.mxu0 0
    %1273 = vmatpush1.bf16.msra.mxu0 %v435
    %1274 = vmatprep.subr.bf16.mxu0 0
    %1275 = vmatpush1.bf16.msra.mxu0 %v434
    %1276 = vmatprep.subr.bf16.mxu0 0
    %1277 = vmatpush1.bf16.msra.mxu0 %v433
    %1278 = vmatprep.subr.bf16.mxu0 0
    %1279 = vmatpush1.bf16.msra.mxu0 %v432
    %1280 = vmatprep.subr.bf16.mxu0 0
    %1281 = vmatpush1.bf16.msra.mxu0 %v431
    %1282 = vmatprep.subr.bf16.mxu0 0
    %1283 = vmatpush1.bf16.msra.mxu0 %v430
    %1284 = vmatprep.subr.bf16.mxu0 0
    %1285 = vmatpush1.bf16.msra.mxu0 %v429
    %1286 = vmatprep.subr.bf16.mxu0 0
    %1287 = vmatpush2.bf16.msra.mxu0 0
    %1288 = vmatprep.subr.bf16.mxu0 0
    %1289 = vmatpush2.bf16.msra.mxu0 0
    %1290 = vmatprep.subr.bf16.mxu0 0
    %1291 = vmatpush2.bf16.msra.mxu0 0
    %1292 = vmatprep.subr.bf16.mxu0 0
    %1293 = vmatpush2.bf16.msra.mxu0 0
    %1294 = vmatprep.subr.bf16.mxu0 0
    %1295 = vmatpush2.bf16.msra.mxu0 0
    %1296 = vmatprep.subr.bf16.mxu0 0
    %1297 = vmatpush2.bf16.msra.mxu0 0
    %1298 = vmatprep.subr.bf16.mxu0 0
    %1299 = vmatpush2.bf16.msra.mxu0 0
    %1300 = vmatprep.subr.bf16.mxu0 0
    %1301 = vmatpush2.bf16.msra.mxu0 0
    %1302 = vmatprep.mubr.bf16.mxu0 0
    %1303 = vmatmul.mubr.bf16.gmra.mxu0 %v1268
    %v1304 = vpop.f32.mrf.mxu0
    %v1305 = vadd.f32 0.0, %v1304
    %v1306 = vpop.f32.mrf.mxu0
    %v1307 = vpop.f32.mrf.mxu0
    %v1308 = vadd.f32 0.0, %v1307
    %v1309 = vpop.f32.mrf.mxu0
    %1310 = vmatprep.mubr.bf16.mxu0 0
    %1311 = vmatmul.mubr.bf16.gmra.mxu0 %v1269
    %v1312 = vpop.f32.mrf.mxu0
    %v1313 = vadd.f32 0.0, %v1312
    %v1314 = vpop.f32.mrf.mxu0
    %v1315 = vpop.f32.mrf.mxu0
    %v1316 = vpop.f32.mrf.mxu0
    %1317 = vdwg.mxu0
    %s1318 = scalar_lea.vmem %s5, 224
    %v1319 = vld [vmem:[%s1318] sm:$0xff]
    %v1320 = vld [vmem:[%s1318 + $0x8] sm:$0xff]
    %v1321 = vld [vmem:[%s1318 + $0x10] sm:$0xff]
    %v1322 = vld [vmem:[%s1318 + $0x18] sm:$0xff]
    %v1323 = vpack.c.bf16 %v1308, %v1305
    %v1324 = vpack.c.bf16 %v1313, %v1313
    %v1325 = vpack.c.bf16 %v1320, %v1319
    %v1326 = vpack.c.bf16 %v1322, %v1321
    %v1328 = vsel %vm250, %v1323, 0
    %v1331 = vsel %vm250, %v1324, 0
    %1333 = vmatprep.subr.bf16.mxu0 0
    %1334 = vmatpush1.bf16.msra.mxu0 0
    %1335 = vmatprep.subr.bf16.mxu0 0
    %1336 = vmatpush1.bf16.msra.mxu0 0
    %1337 = vmatprep.subr.bf16.mxu0 0
    %1338 = vmatpush1.bf16.msra.mxu0 0
    %1339 = vmatprep.subr.bf16.mxu0 0
    %1340 = vmatpush1.bf16.msra.mxu0 0
    %1341 = vmatprep.subr.bf16.mxu0 0
    %1342 = vmatpush1.bf16.msra.mxu0 0
    %1343 = vmatprep.subr.bf16.mxu0 0
    %1344 = vmatpush1.bf16.msra.mxu0 0
    %1345 = vmatprep.subr.bf16.mxu0 0
    %1346 = vmatpush1.bf16.msra.mxu0 %v1326
    %1347 = vmatprep.subr.bf16.mxu0 0
    %1348 = vmatpush1.bf16.msra.mxu0 %v1325
    %1349 = vmatprep.subr.bf16.mxu0 0
    %1350 = vmatpush2.bf16.msra.mxu0 0
    %1351 = vmatprep.subr.bf16.mxu0 0
    %1352 = vmatpush2.bf16.msra.mxu0 0
    %1353 = vmatprep.subr.bf16.mxu0 0
    %1354 = vmatpush2.bf16.msra.mxu0 0
    %1355 = vmatprep.subr.bf16.mxu0 0
    %1356 = vmatpush2.bf16.msra.mxu0 0
    %1357 = vmatprep.subr.bf16.mxu0 0
    %1358 = vmatpush2.bf16.msra.mxu0 0
    %1359 = vmatprep.subr.bf16.mxu0 0
    %1360 = vmatpush2.bf16.msra.mxu0 0
    %1361 = vmatprep.subr.bf16.mxu0 0
    %1362 = vmatpush2.bf16.msra.mxu0 0
    %1363 = vmatprep.subr.bf16.mxu0 0
    %1364 = vmatpush2.bf16.msra.mxu0 0
    %1365 = vmatprep.mubr.bf16.mxu0 0
    %1366 = vmatmul.mubr.bf16.gmra.mxu0 %v1328
    %v1367 = vpop.f32.mrf.mxu0
    %v1368 = vadd.f32 0.0, %v1367
    %v1369 = vpop.f32.mrf.mxu0
    %v1370 = vpop.f32.mrf.mxu0
    %v1371 = vadd.f32 0.0, %v1370
    %v1372 = vpop.f32.mrf.mxu0
    %1373 = vmatprep.mubr.bf16.mxu0 0
    %1374 = vmatmul.mubr.bf16.gmra.mxu0 %v1331
    %v1375 = vpop.f32.mrf.mxu0
    %v1376 = vadd.f32 0.0, %v1375
    %v1377 = vpop.f32.mrf.mxu0
    %v1378 = vpop.f32.mrf.mxu0
    %v1379 = vpop.f32.mrf.mxu0
    %1380 = vdwg.mxu0
    %v1381 = vadd.f32 %v1261, %v1368
    %v1382 = vadd.f32 %v1262, %v1371
    %v1383 = vadd.f32 %v1263, %v1376
    %s1384 = scalar_lea.vmem %s4, 192
    %v1385 = vld [vmem:[%s1384] sm:$0xff]
    %v1386 = vld [vmem:[%s1384 + $0x8] sm:$0xff]
    %v1387 = vld [vmem:[%s1384 + $0x10] sm:$0x3]
    %v1388 = vpack.c.bf16 %v1386, %v1385
    %v1389 = vpack.c.bf16 %v1387, %v1387
    %1390 = vmatprep.subr.bf16.mxu0 0
    %1391 = vmatpush1.bf16.msra.mxu0 %v436
    %1392 = vmatprep.subr.bf16.mxu0 0
    %1393 = vmatpush1.bf16.msra.mxu0 %v435
    %1394 = vmatprep.subr.bf16.mxu0 0
    %1395 = vmatpush1.bf16.msra.mxu0 %v434
    %1396 = vmatprep.subr.bf16.mxu0 0
    %1397 = vmatpush1.bf16.msra.mxu0 %v433
    %1398 = vmatprep.subr.bf16.mxu0 0
    %1399 = vmatpush1.bf16.msra.mxu0 %v432
    %1400 = vmatprep.subr.bf16.mxu0 0
    %1401 = vmatpush1.bf16.msra.mxu0 %v431
    %1402 = vmatprep.subr.bf16.mxu0 0
    %1403 = vmatpush1.bf16.msra.mxu0 %v430
    %1404 = vmatprep.subr.bf16.mxu0 0
    %1405 = vmatpush1.bf16.msra.mxu0 %v429
    %1406 = vmatprep.subr.bf16.mxu0 0
    %1407 = vmatpush2.bf16.msra.mxu0 0
    %1408 = vmatprep.subr.bf16.mxu0 0
    %1409 = vmatpush2.bf16.msra.mxu0 0
    %1410 = vmatprep.subr.bf16.mxu0 0
    %1411 = vmatpush2.bf16.msra.mxu0 0
    %1412 = vmatprep.subr.bf16.mxu0 0
    %1413 = vmatpush2.bf16.msra.mxu0 0
    %1414 = vmatprep.subr.bf16.mxu0 0
    %1415 = vmatpush2.bf16.msra.mxu0 0
    %1416 = vmatprep.subr.bf16.mxu0 0
    %1417 = vmatpush2.bf16.msra.mxu0 0
    %1418 = vmatprep.subr.bf16.mxu0 0
    %1419 = vmatpush2.bf16.msra.mxu0 0
    %1420 = vmatprep.subr.bf16.mxu0 0
    %1421 = vmatpush2.bf16.msra.mxu0 0
    %1422 = vmatprep.mubr.bf16.mxu0 0
    %1423 = vmatmul.mubr.bf16.gmra.mxu0 %v1388
    %v1424 = vpop.f32.mrf.mxu0
    %v1425 = vadd.f32 0.0, %v1424
    %v1426 = vpop.f32.mrf.mxu0
    %v1427 = vpop.f32.mrf.mxu0
    %v1428 = vadd.f32 0.0, %v1427
    %v1429 = vpop.f32.mrf.mxu0
    %1430 = vmatprep.mubr.bf16.mxu0 0
    %1431 = vmatmul.mubr.bf16.gmra.mxu0 %v1389
    %v1432 = vpop.f32.mrf.mxu0
    %v1433 = vadd.f32 0.0, %v1432
    %v1434 = vpop.f32.mrf.mxu0
    %v1435 = vpop.f32.mrf.mxu0
    %v1436 = vpop.f32.mrf.mxu0
    %1437 = vdwg.mxu0
    %s1438 = scalar_lea.vmem %s5, 256
    %v1439 = vld [vmem:[%s1438] sm:$0xff]
    %v1440 = vld [vmem:[%s1438 + $0x8] sm:$0xff]
    %v1441 = vld [vmem:[%s1438 + $0x10] sm:$0xff]
    %v1442 = vld [vmem:[%s1438 + $0x18] sm:$0xff]
    %v1443 = vpack.c.bf16 %v1428, %v1425
    %v1444 = vpack.c.bf16 %v1433, %v1433
    %v1445 = vpack.c.bf16 %v1440, %v1439
    %v1446 = vpack.c.bf16 %v1442, %v1441
    %v1448 = vsel %vm250, %v1443, 0
    %v1451 = vsel %vm250, %v1444, 0
    %1453 = vmatprep.subr.bf16.mxu0 0
    %1454 = vmatpush1.bf16.msra.mxu0 0
    %1455 = vmatprep.subr.bf16.mxu0 0
    %1456 = vmatpush1.bf16.msra.mxu0 0
    %1457 = vmatprep.subr.bf16.mxu0 0
    %1458 = vmatpush1.bf16.msra.mxu0 0
    %1459 = vmatprep.subr.bf16.mxu0 0
    %1460 = vmatpush1.bf16.msra.mxu0 0
    %1461 = vmatprep.subr.bf16.mxu0 0
    %1462 = vmatpush1.bf16.msra.mxu0 0
    %1463 = vmatprep.subr.bf16.mxu0 0
    %1464 = vmatpush1.bf16.msra.mxu0 0
    %1465 = vmatprep.subr.bf16.mxu0 0
    %1466 = vmatpush1.bf16.msra.mxu0 %v1446
    %1467 = vmatprep.subr.bf16.mxu0 0
    %1468 = vmatpush1.bf16.msra.mxu0 %v1445
    %1469 = vmatprep.subr.bf16.mxu0 0
    %1470 = vmatpush2.bf16.msra.mxu0 0
    %1471 = vmatprep.subr.bf16.mxu0 0
    %1472 = vmatpush2.bf16.msra.mxu0 0
    %1473 = vmatprep.subr.bf16.mxu0 0
    %1474 = vmatpush2.bf16.msra.mxu0 0
    %1475 = vmatprep.subr.bf16.mxu0 0
    %1476 = vmatpush2.bf16.msra.mxu0 0
    %1477 = vmatprep.subr.bf16.mxu0 0
    %1478 = vmatpush2.bf16.msra.mxu0 0
    %1479 = vmatprep.subr.bf16.mxu0 0
    %1480 = vmatpush2.bf16.msra.mxu0 0
    %1481 = vmatprep.subr.bf16.mxu0 0
    %1482 = vmatpush2.bf16.msra.mxu0 0
    %1483 = vmatprep.subr.bf16.mxu0 0
    %1484 = vmatpush2.bf16.msra.mxu0 0
    %1485 = vmatprep.mubr.bf16.mxu0 0
    %1486 = vmatmul.mubr.bf16.gmra.mxu0 %v1448
    %v1487 = vpop.f32.mrf.mxu0
    %v1488 = vadd.f32 0.0, %v1487
    %v1489 = vpop.f32.mrf.mxu0
    %v1490 = vpop.f32.mrf.mxu0
    %v1491 = vadd.f32 0.0, %v1490
    %v1492 = vpop.f32.mrf.mxu0
    %1493 = vmatprep.mubr.bf16.mxu0 0
    %1494 = vmatmul.mubr.bf16.gmra.mxu0 %v1451
    %v1495 = vpop.f32.mrf.mxu0
    %v1496 = vadd.f32 0.0, %v1495
    %v1497 = vpop.f32.mrf.mxu0
    %v1498 = vpop.f32.mrf.mxu0
    %v1499 = vpop.f32.mrf.mxu0
    %1500 = vdwg.mxu0
    %v1501 = vadd.f32 %v1381, %v1488
    %v1502 = vadd.f32 %v1382, %v1491
    %v1503 = vadd.f32 %v1383, %v1496
    %s1504 = scalar_lea.vmem %s4, 216
    %v1505 = vld [vmem:[%s1504] sm:$0xff]
    %v1506 = vld [vmem:[%s1504 + $0x8] sm:$0xff]
    %v1507 = vld [vmem:[%s1504 + $0x10] sm:$0x3]
    %v1508 = vpack.c.bf16 %v1506, %v1505
    %v1509 = vpack.c.bf16 %v1507, %v1507
    %1510 = vmatprep.subr.bf16.mxu0 0
    %1511 = vmatpush1.bf16.msra.mxu0 %v436
    %1512 = vmatprep.subr.bf16.mxu0 0
    %1513 = vmatpush1.bf16.msra.mxu0 %v435
    %1514 = vmatprep.subr.bf16.mxu0 0
    %1515 = vmatpush1.bf16.msra.mxu0 %v434
    %1516 = vmatprep.subr.bf16.mxu0 0
    %1517 = vmatpush1.bf16.msra.mxu0 %v433
    %1518 = vmatprep.subr.bf16.mxu0 0
    %1519 = vmatpush1.bf16.msra.mxu0 %v432
    %1520 = vmatprep.subr.bf16.mxu0 0
    %1521 = vmatpush1.bf16.msra.mxu0 %v431
    %1522 = vmatprep.subr.bf16.mxu0 0
    %1523 = vmatpush1.bf16.msra.mxu0 %v430
    %1524 = vmatprep.subr.bf16.mxu0 0
    %1525 = vmatpush1.bf16.msra.mxu0 %v429
    %1526 = vmatprep.subr.bf16.mxu0 0
    %1527 = vmatpush2.bf16.msra.mxu0 0
    %1528 = vmatprep.subr.bf16.mxu0 0
    %1529 = vmatpush2.bf16.msra.mxu0 0
    %1530 = vmatprep.subr.bf16.mxu0 0
    %1531 = vmatpush2.bf16.msra.mxu0 0
    %1532 = vmatprep.subr.bf16.mxu0 0
    %1533 = vmatpush2.bf16.msra.mxu0 0
    %1534 = vmatprep.subr.bf16.mxu0 0
    %1535 = vmatpush2.bf16.msra.mxu0 0
    %1536 = vmatprep.subr.bf16.mxu0 0
    %1537 = vmatpush2.bf16.msra.mxu0 0
    %1538 = vmatprep.subr.bf16.mxu0 0
    %1539 = vmatpush2.bf16.msra.mxu0 0
    %1540 = vmatprep.subr.bf16.mxu0 0
    %1541 = vmatpush2.bf16.msra.mxu0 0
    %1542 = vmatprep.mubr.bf16.mxu0 0
    %1543 = vmatmul.mubr.bf16.gmra.mxu0 %v1508
    %v1544 = vpop.f32.mrf.mxu0
    %v1545 = vadd.f32 0.0, %v1544
    %v1546 = vpop.f32.mrf.mxu0
    %v1547 = vpop.f32.mrf.mxu0
    %v1548 = vadd.f32 0.0, %v1547
    %v1549 = vpop.f32.mrf.mxu0
    %1550 = vmatprep.mubr.bf16.mxu0 0
    %1551 = vmatmul.mubr.bf16.gmra.mxu0 %v1509
    %v1552 = vpop.f32.mrf.mxu0
    %v1553 = vadd.f32 0.0, %v1552
    %v1554 = vpop.f32.mrf.mxu0
    %v1555 = vpop.f32.mrf.mxu0
    %v1556 = vpop.f32.mrf.mxu0
    %1557 = vdwg.mxu0
    %s1558 = scalar_lea.vmem %s5, 288
    %v1559 = vld [vmem:[%s1558] sm:$0xff]
    %v1560 = vld [vmem:[%s1558 + $0x8] sm:$0xff]
    %v1561 = vld [vmem:[%s1558 + $0x10] sm:$0xff]
    %v1562 = vld [vmem:[%s1558 + $0x18] sm:$0xff]
    %v1563 = vpack.c.bf16 %v1548, %v1545
    %v1564 = vpack.c.bf16 %v1553, %v1553
    %v1565 = vpack.c.bf16 %v1560, %v1559
    %v1566 = vpack.c.bf16 %v1562, %v1561
    %v1568 = vsel %vm250, %v1563, 0
    %v1571 = vsel %vm250, %v1564, 0
    %1573 = vmatprep.subr.bf16.mxu0 0
    %1574 = vmatpush1.bf16.msra.mxu0 0
    %1575 = vmatprep.subr.bf16.mxu0 0
    %1576 = vmatpush1.bf16.msra.mxu0 0
    %1577 = vmatprep.subr.bf16.mxu0 0
    %1578 = vmatpush1.bf16.msra.mxu0 0
    %1579 = vmatprep.subr.bf16.mxu0 0
    %1580 = vmatpush1.bf16.msra.mxu0 0
    %1581 = vmatprep.subr.bf16.mxu0 0
    %1582 = vmatpush1.bf16.msra.mxu0 0
    %1583 = vmatprep.subr.bf16.mxu0 0
    %1584 = vmatpush1.bf16.msra.mxu0 0
    %1585 = vmatprep.subr.bf16.mxu0 0
    %1586 = vmatpush1.bf16.msra.mxu0 %v1566
    %1587 = vmatprep.subr.bf16.mxu0 0
    %1588 = vmatpush1.bf16.msra.mxu0 %v1565
    %1589 = vmatprep.subr.bf16.mxu0 0
    %1590 = vmatpush2.bf16.msra.mxu0 0
    %1591 = vmatprep.subr.bf16.mxu0 0
    %1592 = vmatpush2.bf16.msra.mxu0 0
    %1593 = vmatprep.subr.bf16.mxu0 0
    %1594 = vmatpush2.bf16.msra.mxu0 0
    %1595 = vmatprep.subr.bf16.mxu0 0
    %1596 = vmatpush2.bf16.msra.mxu0 0
    %1597 = vmatprep.subr.bf16.mxu0 0
    %1598 = vmatpush2.bf16.msra.mxu0 0
    %1599 = vmatprep.subr.bf16.mxu0 0
    %1600 = vmatpush2.bf16.msra.mxu0 0
    %1601 = vmatprep.subr.bf16.mxu0 0
    %1602 = vmatpush2.bf16.msra.mxu0 0
    %1603 = vmatprep.subr.bf16.mxu0 0
    %1604 = vmatpush2.bf16.msra.mxu0 0
    %1605 = vmatprep.mubr.bf16.mxu0 0
    %1606 = vmatmul.mubr.bf16.gmra.mxu0 %v1568
    %v1607 = vpop.f32.mrf.mxu0
    %v1608 = vadd.f32 0.0, %v1607
    %v1609 = vpop.f32.mrf.mxu0
    %v1610 = vpop.f32.mrf.mxu0
    %v1611 = vadd.f32 0.0, %v1610
    %v1612 = vpop.f32.mrf.mxu0
    %1613 = vmatprep.mubr.bf16.mxu0 0
    %1614 = vmatmul.mubr.bf16.gmra.mxu0 %v1571
    %v1615 = vpop.f32.mrf.mxu0
    %v1616 = vadd.f32 0.0, %v1615
    %v1617 = vpop.f32.mrf.mxu0
    %v1618 = vpop.f32.mrf.mxu0
    %v1619 = vpop.f32.mrf.mxu0
    %1620 = vdwg.mxu0
    %v1621 = vadd.f32 %v1501, %v1608
    %v1622 = vadd.f32 %v1502, %v1611
    %v1623 = vadd.f32 %v1503, %v1616
    %s1624 = scalar_lea.vmem %s4, 240
    %v1625 = vld [vmem:[%s1624] sm:$0xff]
    %v1626 = vld [vmem:[%s1624 + $0x8] sm:$0xff]
    %v1627 = vld [vmem:[%s1624 + $0x10] sm:$0x3]
    %v1628 = vpack.c.bf16 %v1626, %v1625
    %v1629 = vpack.c.bf16 %v1627, %v1627
    %1630 = vmatprep.subr.bf16.mxu0 0
    %1631 = vmatpush1.bf16.msra.mxu0 %v436
    %1632 = vmatprep.subr.bf16.mxu0 0
    %1633 = vmatpush1.bf16.msra.mxu0 %v435
    %1634 = vmatprep.subr.bf16.mxu0 0
    %1635 = vmatpush1.bf16.msra.mxu0 %v434
    %1636 = vmatprep.subr.bf16.mxu0 0
    %1637 = vmatpush1.bf16.msra.mxu0 %v433
    %1638 = vmatprep.subr.bf16.mxu0 0
    %1639 = vmatpush1.bf16.msra.mxu0 %v432
    %1640 = vmatprep.subr.bf16.mxu0 0
    %1641 = vmatpush1.bf16.msra.mxu0 %v431
    %1642 = vmatprep.subr.bf16.mxu0 0
    %1643 = vmatpush1.bf16.msra.mxu0 %v430
    %1644 = vmatprep.subr.bf16.mxu0 0
    %1645 = vmatpush1.bf16.msra.mxu0 %v429
    %1646 = vmatprep.subr.bf16.mxu0 0
    %1647 = vmatpush2.bf16.msra.mxu0 0
    %1648 = vmatprep.subr.bf16.mxu0 0
    %1649 = vmatpush2.bf16.msra.mxu0 0
    %1650 = vmatprep.subr.bf16.mxu0 0
    %1651 = vmatpush2.bf16.msra.mxu0 0
    %1652 = vmatprep.subr.bf16.mxu0 0
    %1653 = vmatpush2.bf16.msra.mxu0 0
    %1654 = vmatprep.subr.bf16.mxu0 0
    %1655 = vmatpush2.bf16.msra.mxu0 0
    %1656 = vmatprep.subr.bf16.mxu0 0
    %1657 = vmatpush2.bf16.msra.mxu0 0
    %1658 = vmatprep.subr.bf16.mxu0 0
    %1659 = vmatpush2.bf16.msra.mxu0 0
    %1660 = vmatprep.subr.bf16.mxu0 0
    %1661 = vmatpush2.bf16.msra.mxu0 0
    %1662 = vmatprep.mubr.bf16.mxu0 0
    %1663 = vmatmul.mubr.bf16.gmra.mxu0 %v1628
    %v1664 = vpop.f32.mrf.mxu0
    %v1665 = vadd.f32 0.0, %v1664
    %v1666 = vpop.f32.mrf.mxu0
    %v1667 = vpop.f32.mrf.mxu0
    %v1668 = vadd.f32 0.0, %v1667
    %v1669 = vpop.f32.mrf.mxu0
    %1670 = vmatprep.mubr.bf16.mxu0 0
    %1671 = vmatmul.mubr.bf16.gmra.mxu0 %v1629
    %v1672 = vpop.f32.mrf.mxu0
    %v1673 = vadd.f32 0.0, %v1672
    %v1674 = vpop.f32.mrf.mxu0
    %v1675 = vpop.f32.mrf.mxu0
    %v1676 = vpop.f32.mrf.mxu0
    %1677 = vdwg.mxu0
    %s1678 = scalar_lea.vmem %s5, 320
    %v1679 = vld [vmem:[%s1678] sm:$0xff]
    %v1680 = vld [vmem:[%s1678 + $0x8] sm:$0xff]
    %v1681 = vld [vmem:[%s1678 + $0x10] sm:$0xff]
    %v1682 = vld [vmem:[%s1678 + $0x18] sm:$0xff]
    %v1683 = vpack.c.bf16 %v1668, %v1665
    %v1684 = vpack.c.bf16 %v1673, %v1673
    %v1685 = vpack.c.bf16 %v1680, %v1679
    %v1686 = vpack.c.bf16 %v1682, %v1681
    %v1688 = vsel %vm250, %v1683, 0
    %v1691 = vsel %vm250, %v1684, 0
    %1693 = vmatprep.subr.bf16.mxu0 0
    %1694 = vmatpush1.bf16.msra.mxu0 0
    %1695 = vmatprep.subr.bf16.mxu0 0
    %1696 = vmatpush1.bf16.msra.mxu0 0
    %1697 = vmatprep.subr.bf16.mxu0 0
    %1698 = vmatpush1.bf16.msra.mxu0 0
    %1699 = vmatprep.subr.bf16.mxu0 0
    %1700 = vmatpush1.bf16.msra.mxu0 0
    %1701 = vmatprep.subr.bf16.mxu0 0
    %1702 = vmatpush1.bf16.msra.mxu0 0
    %1703 = vmatprep.subr.bf16.mxu0 0
    %1704 = vmatpush1.bf16.msra.mxu0 0
    %1705 = vmatprep.subr.bf16.mxu0 0
    %1706 = vmatpush1.bf16.msra.mxu0 %v1686
    %1707 = vmatprep.subr.bf16.mxu0 0
    %1708 = vmatpush1.bf16.msra.mxu0 %v1685
    %1709 = vmatprep.subr.bf16.mxu0 0
    %1710 = vmatpush2.bf16.msra.mxu0 0
    %1711 = vmatprep.subr.bf16.mxu0 0
    %1712 = vmatpush2.bf16.msra.mxu0 0
    %1713 = vmatprep.subr.bf16.mxu0 0
    %1714 = vmatpush2.bf16.msra.mxu0 0
    %1715 = vmatprep.subr.bf16.mxu0 0
    %1716 = vmatpush2.bf16.msra.mxu0 0
    %1717 = vmatprep.subr.bf16.mxu0 0
    %1718 = vmatpush2.bf16.msra.mxu0 0
    %1719 = vmatprep.subr.bf16.mxu0 0
    %1720 = vmatpush2.bf16.msra.mxu0 0
    %1721 = vmatprep.subr.bf16.mxu0 0
    %1722 = vmatpush2.bf16.msra.mxu0 0
    %1723 = vmatprep.subr.bf16.mxu0 0
    %1724 = vmatpush2.bf16.msra.mxu0 0
    %1725 = vmatprep.mubr.bf16.mxu0 0
    %1726 = vmatmul.mubr.bf16.gmra.mxu0 %v1688
    %v1727 = vpop.f32.mrf.mxu0
    %v1728 = vadd.f32 0.0, %v1727
    %v1729 = vpop.f32.mrf.mxu0
    %v1730 = vpop.f32.mrf.mxu0
    %v1731 = vadd.f32 0.0, %v1730
    %v1732 = vpop.f32.mrf.mxu0
    %1733 = vmatprep.mubr.bf16.mxu0 0
    %1734 = vmatmul.mubr.bf16.gmra.mxu0 %v1691
    %v1735 = vpop.f32.mrf.mxu0
    %v1736 = vadd.f32 0.0, %v1735
    %v1737 = vpop.f32.mrf.mxu0
    %v1738 = vpop.f32.mrf.mxu0
    %v1739 = vpop.f32.mrf.mxu0
    %1740 = vdwg.mxu0
    %v1741 = vadd.f32 %v1621, %v1728
    %v1742 = vadd.f32 %v1622, %v1731
    %v1743 = vadd.f32 %v1623, %v1736
    %s1744 = scalar_lea.vmem %s4, 264
    %v1745 = vld [vmem:[%s1744] sm:$0xff]
    %v1746 = vld [vmem:[%s1744 + $0x8] sm:$0xff]
    %v1747 = vld [vmem:[%s1744 + $0x10] sm:$0x3]
    %v1748 = vpack.c.bf16 %v1746, %v1745
    %v1749 = vpack.c.bf16 %v1747, %v1747
    %1750 = vmatprep.subr.bf16.mxu0 0
    %1751 = vmatpush1.bf16.msra.mxu0 %v436
    %1752 = vmatprep.subr.bf16.mxu0 0
    %1753 = vmatpush1.bf16.msra.mxu0 %v435
    %1754 = vmatprep.subr.bf16.mxu0 0
    %1755 = vmatpush1.bf16.msra.mxu0 %v434
    %1756 = vmatprep.subr.bf16.mxu0 0
    %1757 = vmatpush1.bf16.msra.mxu0 %v433
    %1758 = vmatprep.subr.bf16.mxu0 0
    %1759 = vmatpush1.bf16.msra.mxu0 %v432
    %1760 = vmatprep.subr.bf16.mxu0 0
    %1761 = vmatpush1.bf16.msra.mxu0 %v431
    %1762 = vmatprep.subr.bf16.mxu0 0
    %1763 = vmatpush1.bf16.msra.mxu0 %v430
    %1764 = vmatprep.subr.bf16.mxu0 0
    %1765 = vmatpush1.bf16.msra.mxu0 %v429
    %1766 = vmatprep.subr.bf16.mxu0 0
    %1767 = vmatpush2.bf16.msra.mxu0 0
    %1768 = vmatprep.subr.bf16.mxu0 0
    %1769 = vmatpush2.bf16.msra.mxu0 0
    %1770 = vmatprep.subr.bf16.mxu0 0
    %1771 = vmatpush2.bf16.msra.mxu0 0
    %1772 = vmatprep.subr.bf16.mxu0 0
    %1773 = vmatpush2.bf16.msra.mxu0 0
    %1774 = vmatprep.subr.bf16.mxu0 0
    %1775 = vmatpush2.bf16.msra.mxu0 0
    %1776 = vmatprep.subr.bf16.mxu0 0
    %1777 = vmatpush2.bf16.msra.mxu0 0
    %1778 = vmatprep.subr.bf16.mxu0 0
    %1779 = vmatpush2.bf16.msra.mxu0 0
    %1780 = vmatprep.subr.bf16.mxu0 0
    %1781 = vmatpush2.bf16.msra.mxu0 0
    %1782 = vmatprep.mubr.bf16.mxu0 0
    %1783 = vmatmul.mubr.bf16.gmra.mxu0 %v1748
    %v1784 = vpop.f32.mrf.mxu0
    %v1785 = vadd.f32 0.0, %v1784
    %v1786 = vpop.f32.mrf.mxu0
    %v1787 = vpop.f32.mrf.mxu0
    %v1788 = vadd.f32 0.0, %v1787
    %v1789 = vpop.f32.mrf.mxu0
    %1790 = vmatprep.mubr.bf16.mxu0 0
    %1791 = vmatmul.mubr.bf16.gmra.mxu0 %v1749
    %v1792 = vpop.f32.mrf.mxu0
    %v1793 = vadd.f32 0.0, %v1792
    %v1794 = vpop.f32.mrf.mxu0
    %v1795 = vpop.f32.mrf.mxu0
    %v1796 = vpop.f32.mrf.mxu0
    %1797 = vdwg.mxu0
    %s1798 = scalar_lea.vmem %s5, 352
    %v1799 = vld [vmem:[%s1798] sm:$0xff]
    %v1800 = vld [vmem:[%s1798 + $0x8] sm:$0xff]
    %v1801 = vld [vmem:[%s1798 + $0x10] sm:$0xff]
    %v1802 = vld [vmem:[%s1798 + $0x18] sm:$0xff]
    %v1803 = vpack.c.bf16 %v1788, %v1785
    %v1804 = vpack.c.bf16 %v1793, %v1793
    %v1805 = vpack.c.bf16 %v1800, %v1799
    %v1806 = vpack.c.bf16 %v1802, %v1801
    %v1808 = vsel %vm250, %v1803, 0
    %v1811 = vsel %vm250, %v1804, 0
    %1813 = vmatprep.subr.bf16.mxu0 0
    %1814 = vmatpush1.bf16.msra.mxu0 0
    %1815 = vmatprep.subr.bf16.mxu0 0
    %1816 = vmatpush1.bf16.msra.mxu0 0
    %1817 = vmatprep.subr.bf16.mxu0 0
    %1818 = vmatpush1.bf16.msra.mxu0 0
    %1819 = vmatprep.subr.bf16.mxu0 0
    %1820 = vmatpush1.bf16.msra.mxu0 0
    %1821 = vmatprep.subr.bf16.mxu0 0
    %1822 = vmatpush1.bf16.msra.mxu0 0
    %1823 = vmatprep.subr.bf16.mxu0 0
    %1824 = vmatpush1.bf16.msra.mxu0 0
    %1825 = vmatprep.subr.bf16.mxu0 0
    %1826 = vmatpush1.bf16.msra.mxu0 %v1806
    %1827 = vmatprep.subr.bf16.mxu0 0
    %1828 = vmatpush1.bf16.msra.mxu0 %v1805
    %1829 = vmatprep.subr.bf16.mxu0 0
    %1830 = vmatpush2.bf16.msra.mxu0 0
    %1831 = vmatprep.subr.bf16.mxu0 0
    %1832 = vmatpush2.bf16.msra.mxu0 0
    %1833 = vmatprep.subr.bf16.mxu0 0
    %1834 = vmatpush2.bf16.msra.mxu0 0
    %1835 = vmatprep.subr.bf16.mxu0 0
    %1836 = vmatpush2.bf16.msra.mxu0 0
    %1837 = vmatprep.subr.bf16.mxu0 0
    %1838 = vmatpush2.bf16.msra.mxu0 0
    %1839 = vmatprep.subr.bf16.mxu0 0
    %1840 = vmatpush2.bf16.msra.mxu0 0
    %1841 = vmatprep.subr.bf16.mxu0 0
    %1842 = vmatpush2.bf16.msra.mxu0 0
    %1843 = vmatprep.subr.bf16.mxu0 0
    %1844 = vmatpush2.bf16.msra.mxu0 0
    %1845 = vmatprep.mubr.bf16.mxu0 0
    %1846 = vmatmul.mubr.bf16.gmra.mxu0 %v1808
    %v1847 = vpop.f32.mrf.mxu0
    %v1848 = vadd.f32 0.0, %v1847
    %v1849 = vpop.f32.mrf.mxu0
    %v1850 = vpop.f32.mrf.mxu0
    %v1851 = vadd.f32 0.0, %v1850
    %v1852 = vpop.f32.mrf.mxu0
    %1853 = vmatprep.mubr.bf16.mxu0 0
    %1854 = vmatmul.mubr.bf16.gmra.mxu0 %v1811
    %v1855 = vpop.f32.mrf.mxu0
    %v1856 = vadd.f32 0.0, %v1855
    %v1857 = vpop.f32.mrf.mxu0
    %v1858 = vpop.f32.mrf.mxu0
    %v1859 = vpop.f32.mrf.mxu0
    %1860 = vdwg.mxu0
    %v1861 = vadd.f32 %v1741, %v1848
    %v1862 = vadd.f32 %v1742, %v1851
    %v1863 = vadd.f32 %v1743, %v1856
    %s1864 = scalar_lea.vmem %s4, 288
    %v1865 = vld [vmem:[%s1864] sm:$0xff]
    %v1866 = vld [vmem:[%s1864 + $0x8] sm:$0xff]
    %v1867 = vld [vmem:[%s1864 + $0x10] sm:$0x3]
    %v1868 = vpack.c.bf16 %v1866, %v1865
    %v1869 = vpack.c.bf16 %v1867, %v1867
    %1870 = vmatprep.subr.bf16.mxu0 0
    %1871 = vmatpush1.bf16.msra.mxu0 %v436
    %1872 = vmatprep.subr.bf16.mxu0 0
    %1873 = vmatpush1.bf16.msra.mxu0 %v435
    %1874 = vmatprep.subr.bf16.mxu0 0
    %1875 = vmatpush1.bf16.msra.mxu0 %v434
    %1876 = vmatprep.subr.bf16.mxu0 0
    %1877 = vmatpush1.bf16.msra.mxu0 %v433
    %1878 = vmatprep.subr.bf16.mxu0 0
    %1879 = vmatpush1.bf16.msra.mxu0 %v432
    %1880 = vmatprep.subr.bf16.mxu0 0
    %1881 = vmatpush1.bf16.msra.mxu0 %v431
    %1882 = vmatprep.subr.bf16.mxu0 0
    %1883 = vmatpush1.bf16.msra.mxu0 %v430
    %1884 = vmatprep.subr.bf16.mxu0 0
    %1885 = vmatpush1.bf16.msra.mxu0 %v429
    %1886 = vmatprep.subr.bf16.mxu0 0
    %1887 = vmatpush2.bf16.msra.mxu0 0
    %1888 = vmatprep.subr.bf16.mxu0 0
    %1889 = vmatpush2.bf16.msra.mxu0 0
    %1890 = vmatprep.subr.bf16.mxu0 0
    %1891 = vmatpush2.bf16.msra.mxu0 0
    %1892 = vmatprep.subr.bf16.mxu0 0
    %1893 = vmatpush2.bf16.msra.mxu0 0
    %1894 = vmatprep.subr.bf16.mxu0 0
    %1895 = vmatpush2.bf16.msra.mxu0 0
    %1896 = vmatprep.subr.bf16.mxu0 0
    %1897 = vmatpush2.bf16.msra.mxu0 0
    %1898 = vmatprep.subr.bf16.mxu0 0
    %1899 = vmatpush2.bf16.msra.mxu0 0
    %1900 = vmatprep.subr.bf16.mxu0 0
    %1901 = vmatpush2.bf16.msra.mxu0 0
    %1902 = vmatprep.mubr.bf16.mxu0 0
    %1903 = vmatmul.mubr.bf16.gmra.mxu0 %v1868
    %v1904 = vpop.f32.mrf.mxu0
    %v1905 = vadd.f32 0.0, %v1904
    %v1906 = vpop.f32.mrf.mxu0
    %v1907 = vpop.f32.mrf.mxu0
    %v1908 = vadd.f32 0.0, %v1907
    %v1909 = vpop.f32.mrf.mxu0
    %1910 = vmatprep.mubr.bf16.mxu0 0
    %1911 = vmatmul.mubr.bf16.gmra.mxu0 %v1869
    %v1912 = vpop.f32.mrf.mxu0
    %v1913 = vadd.f32 0.0, %v1912
    %v1914 = vpop.f32.mrf.mxu0
    %v1915 = vpop.f32.mrf.mxu0
    %v1916 = vpop.f32.mrf.mxu0
    %1917 = vdwg.mxu0
    %s1918 = scalar_lea.vmem %s5, 384
    %v1919 = vld [vmem:[%s1918] sm:$0xff]
    %v1920 = vld [vmem:[%s1918 + $0x8] sm:$0xff]
    %v1921 = vld [vmem:[%s1918 + $0x10] sm:$0xff]
    %v1922 = vld [vmem:[%s1918 + $0x18] sm:$0xff]
    %v1923 = vpack.c.bf16 %v1908, %v1905
    %v1924 = vpack.c.bf16 %v1913, %v1913
    %v1925 = vpack.c.bf16 %v1920, %v1919
    %v1926 = vpack.c.bf16 %v1922, %v1921
    %v1928 = vsel %vm250, %v1923, 0
    %v1931 = vsel %vm250, %v1924, 0
    %1933 = vmatprep.subr.bf16.mxu0 0
    %1934 = vmatpush1.bf16.msra.mxu0 0
    %1935 = vmatprep.subr.bf16.mxu0 0
    %1936 = vmatpush1.bf16.msra.mxu0 0
    %1937 = vmatprep.subr.bf16.mxu0 0
    %1938 = vmatpush1.bf16.msra.mxu0 0
    %1939 = vmatprep.subr.bf16.mxu0 0
    %1940 = vmatpush1.bf16.msra.mxu0 0
    %1941 = vmatprep.subr.bf16.mxu0 0
    %1942 = vmatpush1.bf16.msra.mxu0 0
    %1943 = vmatprep.subr.bf16.mxu0 0
    %1944 = vmatpush1.bf16.msra.mxu0 0
    %1945 = vmatprep.subr.bf16.mxu0 0
    %1946 = vmatpush1.bf16.msra.mxu0 %v1926
    %1947 = vmatprep.subr.bf16.mxu0 0
    %1948 = vmatpush1.bf16.msra.mxu0 %v1925
    %1949 = vmatprep.subr.bf16.mxu0 0
    %1950 = vmatpush2.bf16.msra.mxu0 0
    %1951 = vmatprep.subr.bf16.mxu0 0
    %1952 = vmatpush2.bf16.msra.mxu0 0
    %1953 = vmatprep.subr.bf16.mxu0 0
    %1954 = vmatpush2.bf16.msra.mxu0 0
    %1955 = vmatprep.subr.bf16.mxu0 0
    %1956 = vmatpush2.bf16.msra.mxu0 0
    %1957 = vmatprep.subr.bf16.mxu0 0
    %1958 = vmatpush2.bf16.msra.mxu0 0
    %1959 = vmatprep.subr.bf16.mxu0 0
    %1960 = vmatpush2.bf16.msra.mxu0 0
    %1961 = vmatprep.subr.bf16.mxu0 0
    %1962 = vmatpush2.bf16.msra.mxu0 0
    %1963 = vmatprep.subr.bf16.mxu0 0
    %1964 = vmatpush2.bf16.msra.mxu0 0
    %1965 = vmatprep.mubr.bf16.mxu0 0
    %1966 = vmatmul.mubr.bf16.gmra.mxu0 %v1928
    %v1967 = vpop.f32.mrf.mxu0
    %v1968 = vadd.f32 0.0, %v1967
    %v1969 = vpop.f32.mrf.mxu0
    %v1970 = vpop.f32.mrf.mxu0
    %v1971 = vadd.f32 0.0, %v1970
    %v1972 = vpop.f32.mrf.mxu0
    %1973 = vmatprep.mubr.bf16.mxu0 0
    %1974 = vmatmul.mubr.bf16.gmra.mxu0 %v1931
    %v1975 = vpop.f32.mrf.mxu0
    %v1976 = vadd.f32 0.0, %v1975
    %v1977 = vpop.f32.mrf.mxu0
    %v1978 = vpop.f32.mrf.mxu0
    %v1979 = vpop.f32.mrf.mxu0
    %1980 = vdwg.mxu0
    %v1981 = vadd.f32 %v1861, %v1968
    %v1982 = vadd.f32 %v1862, %v1971
    %v1983 = vadd.f32 %v1863, %v1976
    %s1984 = scalar_lea.vmem %s4, 312
    %v1985 = vld [vmem:[%s1984] sm:$0xff]
    %v1986 = vld [vmem:[%s1984 + $0x8] sm:$0xff]
    %v1987 = vld [vmem:[%s1984 + $0x10] sm:$0x3]
    %v1988 = vpack.c.bf16 %v1986, %v1985
    %v1989 = vpack.c.bf16 %v1987, %v1987
    %1990 = vmatprep.subr.bf16.mxu0 0
    %1991 = vmatpush1.bf16.msra.mxu0 %v436
    %1992 = vmatprep.subr.bf16.mxu0 0
    %1993 = vmatpush1.bf16.msra.mxu0 %v435
    %1994 = vmatprep.subr.bf16.mxu0 0
    %1995 = vmatpush1.bf16.msra.mxu0 %v434
    %1996 = vmatprep.subr.bf16.mxu0 0
    %1997 = vmatpush1.bf16.msra.mxu0 %v433
    %1998 = vmatprep.subr.bf16.mxu0 0
    %1999 = vmatpush1.bf16.msra.mxu0 %v432
    %2000 = vmatprep.subr.bf16.mxu0 0
    %2001 = vmatpush1.bf16.msra.mxu0 %v431
    %2002 = vmatprep.subr.bf16.mxu0 0
    %2003 = vmatpush1.bf16.msra.mxu0 %v430
    %2004 = vmatprep.subr.bf16.mxu0 0
    %2005 = vmatpush1.bf16.msra.mxu0 %v429
    %2006 = vmatprep.subr.bf16.mxu0 0
    %2007 = vmatpush2.bf16.msra.mxu0 0
    %2008 = vmatprep.subr.bf16.mxu0 0
    %2009 = vmatpush2.bf16.msra.mxu0 0
    %2010 = vmatprep.subr.bf16.mxu0 0
    %2011 = vmatpush2.bf16.msra.mxu0 0
    %2012 = vmatprep.subr.bf16.mxu0 0
    %2013 = vmatpush2.bf16.msra.mxu0 0
    %2014 = vmatprep.subr.bf16.mxu0 0
    %2015 = vmatpush2.bf16.msra.mxu0 0
    %2016 = vmatprep.subr.bf16.mxu0 0
    %2017 = vmatpush2.bf16.msra.mxu0 0
    %2018 = vmatprep.subr.bf16.mxu0 0
    %2019 = vmatpush2.bf16.msra.mxu0 0
    %2020 = vmatprep.subr.bf16.mxu0 0
    %2021 = vmatpush2.bf16.msra.mxu0 0
    %2022 = vmatprep.mubr.bf16.mxu0 0
    %2023 = vmatmul.mubr.bf16.gmra.mxu0 %v1988
    %v2024 = vpop.f32.mrf.mxu0
    %v2025 = vadd.f32 0.0, %v2024
    %v2026 = vpop.f32.mrf.mxu0
    %v2027 = vpop.f32.mrf.mxu0
    %v2028 = vadd.f32 0.0, %v2027
    %v2029 = vpop.f32.mrf.mxu0
    %2030 = vmatprep.mubr.bf16.mxu0 0
    %2031 = vmatmul.mubr.bf16.gmra.mxu0 %v1989
    %v2032 = vpop.f32.mrf.mxu0
    %v2033 = vadd.f32 0.0, %v2032
    %v2034 = vpop.f32.mrf.mxu0
    %v2035 = vpop.f32.mrf.mxu0
    %v2036 = vpop.f32.mrf.mxu0
    %2037 = vdwg.mxu0
    %s2038 = scalar_lea.vmem %s5, 416
    %v2039 = vld [vmem:[%s2038] sm:$0xff]
    %v2040 = vld [vmem:[%s2038 + $0x8] sm:$0xff]
    %v2041 = vld [vmem:[%s2038 + $0x10] sm:$0xff]
    %v2042 = vld [vmem:[%s2038 + $0x18] sm:$0xff]
    %v2043 = vpack.c.bf16 %v2028, %v2025
    %v2044 = vpack.c.bf16 %v2033, %v2033
    %v2045 = vpack.c.bf16 %v2040, %v2039
    %v2046 = vpack.c.bf16 %v2042, %v2041
    %v2048 = vsel %vm250, %v2043, 0
    %v2051 = vsel %vm250, %v2044, 0
    %2053 = vmatprep.subr.bf16.mxu0 0
    %2054 = vmatpush1.bf16.msra.mxu0 0
    %2055 = vmatprep.subr.bf16.mxu0 0
    %2056 = vmatpush1.bf16.msra.mxu0 0
    %2057 = vmatprep.subr.bf16.mxu0 0
    %2058 = vmatpush1.bf16.msra.mxu0 0
    %2059 = vmatprep.subr.bf16.mxu0 0
    %2060 = vmatpush1.bf16.msra.mxu0 0
    %2061 = vmatprep.subr.bf16.mxu0 0
    %2062 = vmatpush1.bf16.msra.mxu0 0
    %2063 = vmatprep.subr.bf16.mxu0 0
    %2064 = vmatpush1.bf16.msra.mxu0 0
    %2065 = vmatprep.subr.bf16.mxu0 0
    %2066 = vmatpush1.bf16.msra.mxu0 %v2046
    %2067 = vmatprep.subr.bf16.mxu0 0
    %2068 = vmatpush1.bf16.msra.mxu0 %v2045
    %2069 = vmatprep.subr.bf16.mxu0 0
    %2070 = vmatpush2.bf16.msra.mxu0 0
    %2071 = vmatprep.subr.bf16.mxu0 0
    %2072 = vmatpush2.bf16.msra.mxu0 0
    %2073 = vmatprep.subr.bf16.mxu0 0
    %2074 = vmatpush2.bf16.msra.mxu0 0
    %2075 = vmatprep.subr.bf16.mxu0 0
    %2076 = vmatpush2.bf16.msra.mxu0 0
    %2077 = vmatprep.subr.bf16.mxu0 0
    %2078 = vmatpush2.bf16.msra.mxu0 0
    %2079 = vmatprep.subr.bf16.mxu0 0
    %2080 = vmatpush2.bf16.msra.mxu0 0
    %2081 = vmatprep.subr.bf16.mxu0 0
    %2082 = vmatpush2.bf16.msra.mxu0 0
    %2083 = vmatprep.subr.bf16.mxu0 0
    %2084 = vmatpush2.bf16.msra.mxu0 0
    %2085 = vmatprep.mubr.bf16.mxu0 0
    %2086 = vmatmul.mubr.bf16.gmra.mxu0 %v2048
    %v2087 = vpop.f32.mrf.mxu0
    %v2088 = vadd.f32 0.0, %v2087
    %v2089 = vpop.f32.mrf.mxu0
    %v2090 = vpop.f32.mrf.mxu0
    %v2091 = vadd.f32 0.0, %v2090
    %v2092 = vpop.f32.mrf.mxu0
    %2093 = vmatprep.mubr.bf16.mxu0 0
    %2094 = vmatmul.mubr.bf16.gmra.mxu0 %v2051
    %v2095 = vpop.f32.mrf.mxu0
    %v2096 = vadd.f32 0.0, %v2095
    %v2097 = vpop.f32.mrf.mxu0
    %v2098 = vpop.f32.mrf.mxu0
    %v2099 = vpop.f32.mrf.mxu0
    %2100 = vdwg.mxu0
    %v2101 = vadd.f32 %v1981, %v2088
    %v2102 = vadd.f32 %v1982, %v2091
    %v2103 = vadd.f32 %v1983, %v2096
    %s2104 = scalar_lea.vmem %s4, 336
    %v2105 = vld [vmem:[%s2104] sm:$0xff]
    %v2106 = vld [vmem:[%s2104 + $0x8] sm:$0xff]
    %v2107 = vld [vmem:[%s2104 + $0x10] sm:$0x3]
    %v2108 = vpack.c.bf16 %v2106, %v2105
    %v2109 = vpack.c.bf16 %v2107, %v2107
    %2110 = vmatprep.subr.bf16.mxu0 0
    %2111 = vmatpush1.bf16.msra.mxu0 %v436
    %2112 = vmatprep.subr.bf16.mxu0 0
    %2113 = vmatpush1.bf16.msra.mxu0 %v435
    %2114 = vmatprep.subr.bf16.mxu0 0
    %2115 = vmatpush1.bf16.msra.mxu0 %v434
    %2116 = vmatprep.subr.bf16.mxu0 0
    %2117 = vmatpush1.bf16.msra.mxu0 %v433
    %2118 = vmatprep.subr.bf16.mxu0 0
    %2119 = vmatpush1.bf16.msra.mxu0 %v432
    %2120 = vmatprep.subr.bf16.mxu0 0
    %2121 = vmatpush1.bf16.msra.mxu0 %v431
    %2122 = vmatprep.subr.bf16.mxu0 0
    %2123 = vmatpush1.bf16.msra.mxu0 %v430
    %2124 = vmatprep.subr.bf16.mxu0 0
    %2125 = vmatpush1.bf16.msra.mxu0 %v429
    %2126 = vmatprep.subr.bf16.mxu0 0
    %2127 = vmatpush2.bf16.msra.mxu0 0
    %2128 = vmatprep.subr.bf16.mxu0 0
    %2129 = vmatpush2.bf16.msra.mxu0 0
    %2130 = vmatprep.subr.bf16.mxu0 0
    %2131 = vmatpush2.bf16.msra.mxu0 0
    %2132 = vmatprep.subr.bf16.mxu0 0
    %2133 = vmatpush2.bf16.msra.mxu0 0
    %2134 = vmatprep.subr.bf16.mxu0 0
    %2135 = vmatpush2.bf16.msra.mxu0 0
    %2136 = vmatprep.subr.bf16.mxu0 0
    %2137 = vmatpush2.bf16.msra.mxu0 0
    %2138 = vmatprep.subr.bf16.mxu0 0
    %2139 = vmatpush2.bf16.msra.mxu0 0
    %2140 = vmatprep.subr.bf16.mxu0 0
    %2141 = vmatpush2.bf16.msra.mxu0 0
    %2142 = vmatprep.mubr.bf16.mxu0 0
    %2143 = vmatmul.mubr.bf16.gmra.mxu0 %v2108
    %v2144 = vpop.f32.mrf.mxu0
    %v2145 = vadd.f32 0.0, %v2144
    %v2146 = vpop.f32.mrf.mxu0
    %v2147 = vpop.f32.mrf.mxu0
    %v2148 = vadd.f32 0.0, %v2147
    %v2149 = vpop.f32.mrf.mxu0
    %2150 = vmatprep.mubr.bf16.mxu0 0
    %2151 = vmatmul.mubr.bf16.gmra.mxu0 %v2109
    %v2152 = vpop.f32.mrf.mxu0
    %v2153 = vadd.f32 0.0, %v2152
    %v2154 = vpop.f32.mrf.mxu0
    %v2155 = vpop.f32.mrf.mxu0
    %v2156 = vpop.f32.mrf.mxu0
    %2157 = vdwg.mxu0
    %s2158 = scalar_lea.vmem %s5, 448
    %v2159 = vld [vmem:[%s2158] sm:$0xff]
    %v2160 = vld [vmem:[%s2158 + $0x8] sm:$0xff]
    %v2161 = vld [vmem:[%s2158 + $0x10] sm:$0xff]
    %v2162 = vld [vmem:[%s2158 + $0x18] sm:$0xff]
    %v2163 = vpack.c.bf16 %v2148, %v2145
    %v2164 = vpack.c.bf16 %v2153, %v2153
    %v2165 = vpack.c.bf16 %v2160, %v2159
    %v2166 = vpack.c.bf16 %v2162, %v2161
    %v2168 = vsel %vm250, %v2163, 0
    %v2171 = vsel %vm250, %v2164, 0
    %2173 = vmatprep.subr.bf16.mxu0 0
    %2174 = vmatpush1.bf16.msra.mxu0 0
    %2175 = vmatprep.subr.bf16.mxu0 0
    %2176 = vmatpush1.bf16.msra.mxu0 0
    %2177 = vmatprep.subr.bf16.mxu0 0
    %2178 = vmatpush1.bf16.msra.mxu0 0
    %2179 = vmatprep.subr.bf16.mxu0 0
    %2180 = vmatpush1.bf16.msra.mxu0 0
    %2181 = vmatprep.subr.bf16.mxu0 0
    %2182 = vmatpush1.bf16.msra.mxu0 0
    %2183 = vmatprep.subr.bf16.mxu0 0
    %2184 = vmatpush1.bf16.msra.mxu0 0
    %2185 = vmatprep.subr.bf16.mxu0 0
    %2186 = vmatpush1.bf16.msra.mxu0 %v2166
    %2187 = vmatprep.subr.bf16.mxu0 0
    %2188 = vmatpush1.bf16.msra.mxu0 %v2165
    %2189 = vmatprep.subr.bf16.mxu0 0
    %2190 = vmatpush2.bf16.msra.mxu0 0
    %2191 = vmatprep.subr.bf16.mxu0 0
    %2192 = vmatpush2.bf16.msra.mxu0 0
    %2193 = vmatprep.subr.bf16.mxu0 0
    %2194 = vmatpush2.bf16.msra.mxu0 0
    %2195 = vmatprep.subr.bf16.mxu0 0
    %2196 = vmatpush2.bf16.msra.mxu0 0
    %2197 = vmatprep.subr.bf16.mxu0 0
    %2198 = vmatpush2.bf16.msra.mxu0 0
    %2199 = vmatprep.subr.bf16.mxu0 0
    %2200 = vmatpush2.bf16.msra.mxu0 0
    %2201 = vmatprep.subr.bf16.mxu0 0
    %2202 = vmatpush2.bf16.msra.mxu0 0
    %2203 = vmatprep.subr.bf16.mxu0 0
    %2204 = vmatpush2.bf16.msra.mxu0 0
    %2205 = vmatprep.mubr.bf16.mxu0 0
    %2206 = vmatmul.mubr.bf16.gmra.mxu0 %v2168
    %v2207 = vpop.f32.mrf.mxu0
    %v2208 = vadd.f32 0.0, %v2207
    %v2209 = vpop.f32.mrf.mxu0
    %v2210 = vpop.f32.mrf.mxu0
    %v2211 = vadd.f32 0.0, %v2210
    %v2212 = vpop.f32.mrf.mxu0
    %2213 = vmatprep.mubr.bf16.mxu0 0
    %2214 = vmatmul.mubr.bf16.gmra.mxu0 %v2171
    %v2215 = vpop.f32.mrf.mxu0
    %v2216 = vadd.f32 0.0, %v2215
    %v2217 = vpop.f32.mrf.mxu0
    %v2218 = vpop.f32.mrf.mxu0
    %v2219 = vpop.f32.mrf.mxu0
    %2220 = vdwg.mxu0
    %v2221 = vadd.f32 %v2101, %v2208
    %v2222 = vadd.f32 %v2102, %v2211
    %v2223 = vadd.f32 %v2103, %v2216
    %s2224 = scalar_lea.vmem %s4, 360
    %v2225 = vld [vmem:[%s2224] sm:$0xff]
    %v2226 = vld [vmem:[%s2224 + $0x8] sm:$0xff]
    %v2227 = vld [vmem:[%s2224 + $0x10] sm:$0x3]
    %v2228 = vpack.c.bf16 %v2226, %v2225
    %v2229 = vpack.c.bf16 %v2227, %v2227
    %2230 = vmatprep.subr.bf16.mxu0 0
    %2231 = vmatpush1.bf16.msra.mxu0 %v436
    %2232 = vmatprep.subr.bf16.mxu0 0
    %2233 = vmatpush1.bf16.msra.mxu0 %v435
    %2234 = vmatprep.subr.bf16.mxu0 0
    %2235 = vmatpush1.bf16.msra.mxu0 %v434
    %2236 = vmatprep.subr.bf16.mxu0 0
    %2237 = vmatpush1.bf16.msra.mxu0 %v433
    %2238 = vmatprep.subr.bf16.mxu0 0
    %2239 = vmatpush1.bf16.msra.mxu0 %v432
    %2240 = vmatprep.subr.bf16.mxu0 0
    %2241 = vmatpush1.bf16.msra.mxu0 %v431
    %2242 = vmatprep.subr.bf16.mxu0 0
    %2243 = vmatpush1.bf16.msra.mxu0 %v430
    %2244 = vmatprep.subr.bf16.mxu0 0
    %2245 = vmatpush1.bf16.msra.mxu0 %v429
    %2246 = vmatprep.subr.bf16.mxu0 0
    %2247 = vmatpush2.bf16.msra.mxu0 0
    %2248 = vmatprep.subr.bf16.mxu0 0
    %2249 = vmatpush2.bf16.msra.mxu0 0
    %2250 = vmatprep.subr.bf16.mxu0 0
    %2251 = vmatpush2.bf16.msra.mxu0 0
    %2252 = vmatprep.subr.bf16.mxu0 0
    %2253 = vmatpush2.bf16.msra.mxu0 0
    %2254 = vmatprep.subr.bf16.mxu0 0
    %2255 = vmatpush2.bf16.msra.mxu0 0
    %2256 = vmatprep.subr.bf16.mxu0 0
    %2257 = vmatpush2.bf16.msra.mxu0 0
    %2258 = vmatprep.subr.bf16.mxu0 0
    %2259 = vmatpush2.bf16.msra.mxu0 0
    %2260 = vmatprep.subr.bf16.mxu0 0
    %2261 = vmatpush2.bf16.msra.mxu0 0
    %2262 = vmatprep.mubr.bf16.mxu0 0
    %2263 = vmatmul.mubr.bf16.gmra.mxu0 %v2228
    %v2264 = vpop.f32.mrf.mxu0
    %v2265 = vadd.f32 0.0, %v2264
    %v2266 = vpop.f32.mrf.mxu0
    %v2267 = vpop.f32.mrf.mxu0
    %v2268 = vadd.f32 0.0, %v2267
    %v2269 = vpop.f32.mrf.mxu0
    %2270 = vmatprep.mubr.bf16.mxu0 0
    %2271 = vmatmul.mubr.bf16.gmra.mxu0 %v2229
    %v2272 = vpop.f32.mrf.mxu0
    %v2273 = vadd.f32 0.0, %v2272
    %v2274 = vpop.f32.mrf.mxu0
    %v2275 = vpop.f32.mrf.mxu0
    %v2276 = vpop.f32.mrf.mxu0
    %2277 = vdwg.mxu0
    %s2278 = scalar_lea.vmem %s5, 480
    %v2279 = vld [vmem:[%s2278] sm:$0xff]
    %v2280 = vld [vmem:[%s2278 + $0x8] sm:$0xff]
    %v2281 = vld [vmem:[%s2278 + $0x10] sm:$0xff]
    %v2282 = vld [vmem:[%s2278 + $0x18] sm:$0xff]
    %v2283 = vpack.c.bf16 %v2268, %v2265
    %v2284 = vpack.c.bf16 %v2273, %v2273
    %v2285 = vpack.c.bf16 %v2280, %v2279
    %v2286 = vpack.c.bf16 %v2282, %v2281
    %v2288 = vsel %vm250, %v2283, 0
    %v2291 = vsel %vm250, %v2284, 0
    %2293 = vmatprep.subr.bf16.mxu0 0
    %2294 = vmatpush1.bf16.msra.mxu0 0
    %2295 = vmatprep.subr.bf16.mxu0 0
    %2296 = vmatpush1.bf16.msra.mxu0 0
    %2297 = vmatprep.subr.bf16.mxu0 0
    %2298 = vmatpush1.bf16.msra.mxu0 0
    %2299 = vmatprep.subr.bf16.mxu0 0
    %2300 = vmatpush1.bf16.msra.mxu0 0
    %2301 = vmatprep.subr.bf16.mxu0 0
    %2302 = vmatpush1.bf16.msra.mxu0 0
    %2303 = vmatprep.subr.bf16.mxu0 0
    %2304 = vmatpush1.bf16.msra.mxu0 0
    %2305 = vmatprep.subr.bf16.mxu0 0
    %2306 = vmatpush1.bf16.msra.mxu0 %v2286
    %2307 = vmatprep.subr.bf16.mxu0 0
    %2308 = vmatpush1.bf16.msra.mxu0 %v2285
    %2309 = vmatprep.subr.bf16.mxu0 0
    %2310 = vmatpush2.bf16.msra.mxu0 0
    %2311 = vmatprep.subr.bf16.mxu0 0
    %2312 = vmatpush2.bf16.msra.mxu0 0
    %2313 = vmatprep.subr.bf16.mxu0 0
    %2314 = vmatpush2.bf16.msra.mxu0 0
    %2315 = vmatprep.subr.bf16.mxu0 0
    %2316 = vmatpush2.bf16.msra.mxu0 0
    %2317 = vmatprep.subr.bf16.mxu0 0
    %2318 = vmatpush2.bf16.msra.mxu0 0
    %2319 = vmatprep.subr.bf16.mxu0 0
    %2320 = vmatpush2.bf16.msra.mxu0 0
    %2321 = vmatprep.subr.bf16.mxu0 0
    %2322 = vmatpush2.bf16.msra.mxu0 0
    %2323 = vmatprep.subr.bf16.mxu0 0
    %2324 = vmatpush2.bf16.msra.mxu0 0
    %2325 = vmatprep.mubr.bf16.mxu0 0
    %2326 = vmatmul.mubr.bf16.gmra.mxu0 %v2288
    %v2327 = vpop.f32.mrf.mxu0
    %v2328 = vadd.f32 0.0, %v2327
    %v2329 = vpop.f32.mrf.mxu0
    %v2330 = vpop.f32.mrf.mxu0
    %v2331 = vadd.f32 0.0, %v2330
    %v2332 = vpop.f32.mrf.mxu0
    %2333 = vmatprep.mubr.bf16.mxu0 0
    %2334 = vmatmul.mubr.bf16.gmra.mxu0 %v2291
    %v2335 = vpop.f32.mrf.mxu0
    %v2336 = vadd.f32 0.0, %v2335
    %v2337 = vpop.f32.mrf.mxu0
    %v2338 = vpop.f32.mrf.mxu0
    %v2339 = vpop.f32.mrf.mxu0
    %2340 = vdwg.mxu0
    %v2341 = vadd.f32 %v2221, %v2328
    %v2342 = vadd.f32 %v2222, %v2331
    %v2343 = vadd.f32 %v2223, %v2336
    %v2344 = vld [vmem:[%s6] sm:$0x1]
    %v2345 = vld [vmem:[%s7] sm:$0x1]
    %vm2346 = vcmask 523264
    %v2347 = vsel %vm2346, %v2341, 0.0
    %v2348 = vsel %vm2346, %v2342, 0.0
    %v2349 = vadd.f32 %v2347, %v2348
    %vm2350 = vcmask 517120
    %v2351 = vsel %vm2350, %v2343, 0.0
    %v2352 = vadd.f32 %v2349, %v2351
    %v2353 = vrot.slane %v2352, 4
    %v2354 = vadd.f32 %v2352, %v2353
    %v2355 = vrot.slane %v2354, 2
    %v2356 = vadd.f32 %v2354, %v2355
    %v2357 = vrot.slane %v2356, 1
    %v2358 = vadd.f32 %v2356, %v2357
    %v2359 = vrcp.pop 18.0
    %v2360 = vmul.f32 %v2358, %v2359
    %v2361 = vmul.f32 %v2341, %v2341
    %v2362 = vmul.f32 %v2342, %v2342
    %v2363 = vmul.f32 %v2343, %v2343
    %v2364 = vsel %vm2346, %v2361, 0.0
    %v2365 = vsel %vm2346, %v2362, 0.0
    %v2366 = vadd.f32 %v2364, %v2365
    %v2367 = vsel %vm2350, %v2363, 0.0
    %v2368 = vadd.f32 %v2366, %v2367
    %v2369 = vrot.slane %v2368, 4
    %v2370 = vadd.f32 %v2368, %v2369
    %v2371 = vrot.slane %v2370, 2
    %v2372 = vadd.f32 %v2370, %v2371
    %v2373 = vrot.slane %v2372, 1
    %v2374 = vadd.f32 %v2372, %v2373
    %v2375 = vmul.f32 %v2374, %v2359
    %v2376 = vmul.f32 %v2360, %v2360
    %v2377 = vsub.f32 %v2375, %v2376
    %v2378 = vmax.f32 %v2377, 0.0
    %v2379 = vsub.f32 %v2341, %v2360
    %v2380 = vsub.f32 %v2342, %v2360
    %v2381 = vsub.f32 %v2343, %v2360
    %v2382 = vadd.f32 %v2378, 1e-05
    %v2383 = vrsqrt.pop %v2382
    %v2384 = vmul.f32 %v2383, %v2344
    %v2385 = vlaneseq
    %v2386 = vshrl.u32 %v2385, 7
    %v2387 = vsub.s32 0, %v2386
    %v2388 = vrot.slane %v2384, %v2387
    %v2389 = vmul.f32 %v2379, %v2388
    %v2390 = vmul.f32 %v2380, %v2388
    %v2391 = vmul.f32 %v2381, %v2388
    %v2393 = vlaneseq
    %v2394 = vshrl.u32 %v2393, 7
    %v2395 = vsub.s32 0, %v2394
    %v2396 = vrot.slane %v2345, %v2395
    %v2398 = vadd.f32 %v2389, %v2396
    %v2399 = vadd.f32 %v2390, %v2396
    %v2400 = vadd.f32 %v2391, %v2396
    %v2401 = vmax.f32 %v2398, 0.0
    %v2402 = vmax.f32 %v2399, 0.0
    %v2403 = vmax.f32 %v2400, 0.0
    %v2404 = vld [vmem:[%s8] sm:$0x3]
    %v2405 = vpack.c.bf16 %v2404, %v2404
    %v2406 = vpack.c.bf16 %v2402, %v2401
    %v2407 = vpack.c.bf16 %v2403, %v2403
    %vm2408 = vcmask 146432
    %v2410 = vsel %vm2408, %v2405, 0
    %vm2412 = vcmask 1040384
    %v2414 = vsel %vm2412, %v2407, 0
    %2416 = vmatprep.subr.bf16.mxu0 0
    %2417 = vmatpush1.bf16.msra.mxu0 0
    %2418 = vmatprep.subr.bf16.mxu0 0
    %2419 = vmatpush1.bf16.msra.mxu0 0
    %2420 = vmatprep.subr.bf16.mxu0 0
    %2421 = vmatpush1.bf16.msra.mxu0 0
    %2422 = vmatprep.subr.bf16.mxu0 0
    %2423 = vmatpush1.bf16.msra.mxu0 0
    %2424 = vmatprep.subr.bf16.mxu0 0
    %2425 = vmatpush1.bf16.msra.mxu0 0
    %2426 = vmatprep.subr.bf16.mxu0 0
    %2427 = vmatpush1.bf16.msra.mxu0 0
    %2428 = vmatprep.subr.bf16.mxu0 0
    %2429 = vmatpush1.bf16.msra.mxu0 %v2414
    %2430 = vmatprep.subr.bf16.mxu0 0
    %2431 = vmatpush1.bf16.msra.mxu0 %v2406
    %2432 = vmatprep.subr.bf16.mxu0 0
    %2433 = vmatpush2.bf16.msra.mxu0 0
    %2434 = vmatprep.subr.bf16.mxu0 0
    %2435 = vmatpush2.bf16.msra.mxu0 0
    %2436 = vmatprep.subr.bf16.mxu0 0
    %2437 = vmatpush2.bf16.msra.mxu0 0
    %2438 = vmatprep.subr.bf16.mxu0 0
    %2439 = vmatpush2.bf16.msra.mxu0 0
    %2440 = vmatprep.subr.bf16.mxu0 0
    %2441 = vmatpush2.bf16.msra.mxu0 0
    %2442 = vmatprep.subr.bf16.mxu0 0
    %2443 = vmatpush2.bf16.msra.mxu0 0
    %2444 = vmatprep.subr.bf16.mxu0 0
    %2445 = vmatpush2.bf16.msra.mxu0 0
    %2446 = vmatprep.subr.bf16.mxu0 0
    %2447 = vmatpush2.bf16.msra.mxu0 0
    %2448 = vmatprep.mubr.bf16.mxu0 0
    %2449 = vmatmul.mubr.bf16.gmra.mxu0 %v2410
    %v2450 = vpop.f32.mrf.mxu0
    %v2451 = vadd.f32 0.0, %v2450
    %v2452 = vpop.f32.mrf.mxu0
    %v2453 = vpop.f32.mrf.mxu0
    %v2454 = vpop.f32.mrf.mxu0
    %2455 = vdwg.mxu0
    %v2456 = vld [vmem:[%s9] sm:$0xff]
    %v2457 = vld [vmem:[%s9 + $0x8] sm:$0xff]
    %v2458 = vld [vmem:[%s9 + $0x10] sm:$0xff]
    %v2459 = vld [vmem:[%s9 + $0x18] sm:$0xff]
    %v2460 = vld [vmem:[%s9 + $0x20] sm:$0xff]
    %v2461 = vld [vmem:[%s9 + $0x28] sm:$0xff]
    %v2462 = vld [vmem:[%s9 + $0x30] sm:$0xff]
    %v2463 = vld [vmem:[%s9 + $0x38] sm:$0xff]
    %v2464 = vpack.c.bf16 %v2451, %v2451
    %v2465 = vpack.c.bf16 %v2457, %v2456
    %v2466 = vpack.c.bf16 %v2459, %v2458
    %v2467 = vpack.c.bf16 %v2461, %v2460
    %v2468 = vpack.c.bf16 %v2463, %v2462
    %s2469 = scalar_lea.vmem %s8, 2
    %v2470 = vld [vmem:[%s2469] sm:$0x3]
    %v2471 = vpack.c.bf16 %v2470, %v2470
    %v2473 = vsel %vm2408, %v2471, 0
    %2475 = vmatprep.subr.bf16.mxu0 0
    %2476 = vmatpush1.bf16.msra.mxu0 0
    %2477 = vmatprep.subr.bf16.mxu0 0
    %2478 = vmatpush1.bf16.msra.mxu0 0
    %2479 = vmatprep.subr.bf16.mxu0 0
    %2480 = vmatpush1.bf16.msra.mxu0 0
    %2481 = vmatprep.subr.bf16.mxu0 0
    %2482 = vmatpush1.bf16.msra.mxu0 0
    %2483 = vmatprep.subr.bf16.mxu0 0
    %2484 = vmatpush1.bf16.msra.mxu0 0
    %2485 = vmatprep.subr.bf16.mxu0 0
    %2486 = vmatpush1.bf16.msra.mxu0 0
    %2487 = vmatprep.subr.bf16.mxu0 0
    %2488 = vmatpush1.bf16.msra.mxu0 %v2414
    %2489 = vmatprep.subr.bf16.mxu0 0
    %2490 = vmatpush1.bf16.msra.mxu0 %v2406
    %2491 = vmatprep.subr.bf16.mxu0 0
    %2492 = vmatpush2.bf16.msra.mxu0 0
    %2493 = vmatprep.subr.bf16.mxu0 0
    %2494 = vmatpush2.bf16.msra.mxu0 0
    %2495 = vmatprep.subr.bf16.mxu0 0
    %2496 = vmatpush2.bf16.msra.mxu0 0
    %2497 = vmatprep.subr.bf16.mxu0 0
    %2498 = vmatpush2.bf16.msra.mxu0 0
    %2499 = vmatprep.subr.bf16.mxu0 0
    %2500 = vmatpush2.bf16.msra.mxu0 0
    %2501 = vmatprep.subr.bf16.mxu0 0
    %2502 = vmatpush2.bf16.msra.mxu0 0
    %2503 = vmatprep.subr.bf16.mxu0 0
    %2504 = vmatpush2.bf16.msra.mxu0 0
    %2505 = vmatprep.subr.bf16.mxu0 0
    %2506 = vmatpush2.bf16.msra.mxu0 0
    %2507 = vmatprep.mubr.bf16.mxu0 0
    %2508 = vmatmul.mubr.bf16.gmra.mxu0 %v2473
    %v2509 = vpop.f32.mrf.mxu0
    %v2510 = vadd.f32 0.0, %v2509
    %v2511 = vpop.f32.mrf.mxu0
    %v2512 = vpop.f32.mrf.mxu0
    %v2513 = vpop.f32.mrf.mxu0
    %2514 = vdwg.mxu0
    %s2515 = scalar_lea.vmem %s9, 64
    %v2516 = vld [vmem:[%s2515] sm:$0xff]
    %v2517 = vld [vmem:[%s2515 + $0x8] sm:$0xff]
    %v2518 = vld [vmem:[%s2515 + $0x10] sm:$0xff]
    %v2519 = vld [vmem:[%s2515 + $0x18] sm:$0xff]
    %v2520 = vld [vmem:[%s2515 + $0x20] sm:$0xff]
    %v2521 = vld [vmem:[%s2515 + $0x28] sm:$0xff]
    %v2522 = vld [vmem:[%s2515 + $0x30] sm:$0xff]
    %v2523 = vld [vmem:[%s2515 + $0x38] sm:$0xff]
    %v2524 = vpack.c.bf16 %v2510, %v2510
    %v2525 = vpack.c.bf16 %v2517, %v2516
    %v2526 = vpack.c.bf16 %v2519, %v2518
    %v2527 = vpack.c.bf16 %v2521, %v2520
    %v2528 = vpack.c.bf16 %v2523, %v2522
    %v2530 = vsel %vm2346, %v2524, 0
    %2532 = vmatprep.subr.bf16.mxu0 0
    %2533 = vmatpush1.bf16.msra.mxu0 0
    %2534 = vmatprep.subr.bf16.mxu0 0
    %2535 = vmatpush1.bf16.msra.mxu0 0
    %2536 = vmatprep.subr.bf16.mxu0 0
    %2537 = vmatpush1.bf16.msra.mxu0 0
    %2538 = vmatprep.subr.bf16.mxu0 0
    %2539 = vmatpush1.bf16.msra.mxu0 0
    %2540 = vmatprep.subr.bf16.mxu0 0
    %2541 = vmatpush1.bf16.msra.mxu0 %v2528
    %2542 = vmatprep.subr.bf16.mxu0 0
    %2543 = vmatpush1.bf16.msra.mxu0 %v2527
    %2544 = vmatprep.subr.bf16.mxu0 0
    %2545 = vmatpush1.bf16.msra.mxu0 %v2526
    %2546 = vmatprep.subr.bf16.mxu0 0
    %2547 = vmatpush1.bf16.msra.mxu0 %v2525
    %2548 = vmatprep.subr.bf16.mxu0 0
    %2549 = vmatpush2.bf16.msra.mxu0 0
    %2550 = vmatprep.subr.bf16.mxu0 0
    %2551 = vmatpush2.bf16.msra.mxu0 0
    %2552 = vmatprep.subr.bf16.mxu0 0
    %2553 = vmatpush2.bf16.msra.mxu0 0
    %2554 = vmatprep.subr.bf16.mxu0 0
    %2555 = vmatpush2.bf16.msra.mxu0 0
    %2556 = vmatprep.subr.bf16.mxu0 0
    %2557 = vmatpush2.bf16.msra.mxu0 0
    %2558 = vmatprep.subr.bf16.mxu0 0
    %2559 = vmatpush2.bf16.msra.mxu0 0
    %2560 = vmatprep.subr.bf16.mxu0 0
    %2561 = vmatpush2.bf16.msra.mxu0 0
    %2562 = vmatprep.subr.bf16.mxu0 0
    %2563 = vmatpush2.bf16.msra.mxu0 0
    %2564 = vmatprep.mubr.bf16.mxu0 0
    %2565 = vmatmul.mubr.bf16.gmra.mxu0 %v2530
    %v2566 = vpop.f32.mrf.mxu0
    %v2567 = vadd.f32 0.0, %v2566
    %v2568 = vpop.f32.mrf.mxu0
    %v2569 = vpop.f32.mrf.mxu0
    %v2570 = vpop.f32.mrf.mxu0
    %2571 = vdwg.mxu0
    %v2573 = vsel %vm2346, %v2464, 0
    %2575 = vmatprep.subr.bf16.mxu0 0
    %2576 = vmatpush1.bf16.msra.mxu0 0
    %2577 = vmatprep.subr.bf16.mxu0 0
    %2578 = vmatpush1.bf16.msra.mxu0 0
    %2579 = vmatprep.subr.bf16.mxu0 0
    %2580 = vmatpush1.bf16.msra.mxu0 0
    %2581 = vmatprep.subr.bf16.mxu0 0
    %2582 = vmatpush1.bf16.msra.mxu0 0
    %2583 = vmatprep.subr.bf16.mxu0 0
    %2584 = vmatpush1.bf16.msra.mxu0 %v2468
    %2585 = vmatprep.subr.bf16.mxu0 0
    %2586 = vmatpush1.bf16.msra.mxu0 %v2467
    %2587 = vmatprep.subr.bf16.mxu0 0
    %2588 = vmatpush1.bf16.msra.mxu0 %v2466
    %2589 = vmatprep.subr.bf16.mxu0 0
    %2590 = vmatpush1.bf16.msra.mxu0 %v2465
    %2591 = vmatprep.subr.bf16.mxu0 0
    %2592 = vmatpush2.bf16.msra.mxu0 0
    %2593 = vmatprep.subr.bf16.mxu0 0
    %2594 = vmatpush2.bf16.msra.mxu0 0
    %2595 = vmatprep.subr.bf16.mxu0 0
    %2596 = vmatpush2.bf16.msra.mxu0 0
    %2597 = vmatprep.subr.bf16.mxu0 0
    %2598 = vmatpush2.bf16.msra.mxu0 0
    %2599 = vmatprep.subr.bf16.mxu0 0
    %2600 = vmatpush2.bf16.msra.mxu0 0
    %2601 = vmatprep.subr.bf16.mxu0 0
    %2602 = vmatpush2.bf16.msra.mxu0 0
    %2603 = vmatprep.subr.bf16.mxu0 0
    %2604 = vmatpush2.bf16.msra.mxu0 0
    %2605 = vmatprep.subr.bf16.mxu0 0
    %2606 = vmatpush2.bf16.msra.mxu0 0
    %2607 = vmatprep.mubr.bf16.mxu0 0
    %2608 = vmatmul.mubr.bf16.gmra.mxu0 %v2573
    %v2609 = vpop.f32.mrf.mxu0
    %v2610 = vadd.f32 %v2567, %v2609
    %v2611 = vpop.f32.mrf.mxu0
    %v2612 = vpop.f32.mrf.mxu0
    %v2613 = vpop.f32.mrf.mxu0
    %2614 = vdwg.mxu0
    %s2615 = scalar_lea.vmem %s8, 4
    %v2616 = vld [vmem:[%s2615] sm:$0x3]
    %v2617 = vpack.c.bf16 %v2616, %v2616
    %v2619 = vsel %vm2408, %v2617, 0
    %2621 = vmatprep.subr.bf16.mxu0 0
    %2622 = vmatpush1.bf16.msra.mxu0 0
    %2623 = vmatprep.subr.bf16.mxu0 0
    %2624 = vmatpush1.bf16.msra.mxu0 0
    %2625 = vmatprep.subr.bf16.mxu0 0
    %2626 = vmatpush1.bf16.msra.mxu0 0
    %2627 = vmatprep.subr.bf16.mxu0 0
    %2628 = vmatpush1.bf16.msra.mxu0 0
    %2629 = vmatprep.subr.bf16.mxu0 0
    %2630 = vmatpush1.bf16.msra.mxu0 0
    %2631 = vmatprep.subr.bf16.mxu0 0
    %2632 = vmatpush1.bf16.msra.mxu0 0
    %2633 = vmatprep.subr.bf16.mxu0 0
    %2634 = vmatpush1.bf16.msra.mxu0 %v2414
    %2635 = vmatprep.subr.bf16.mxu0 0
    %2636 = vmatpush1.bf16.msra.mxu0 %v2406
    %2637 = vmatprep.subr.bf16.mxu0 0
    %2638 = vmatpush2.bf16.msra.mxu0 0
    %2639 = vmatprep.subr.bf16.mxu0 0
    %2640 = vmatpush2.bf16.msra.mxu0 0
    %2641 = vmatprep.subr.bf16.mxu0 0
    %2642 = vmatpush2.bf16.msra.mxu0 0
    %2643 = vmatprep.subr.bf16.mxu0 0
    %2644 = vmatpush2.bf16.msra.mxu0 0
    %2645 = vmatprep.subr.bf16.mxu0 0
    %2646 = vmatpush2.bf16.msra.mxu0 0
    %2647 = vmatprep.subr.bf16.mxu0 0
    %2648 = vmatpush2.bf16.msra.mxu0 0
    %2649 = vmatprep.subr.bf16.mxu0 0
    %2650 = vmatpush2.bf16.msra.mxu0 0
    %2651 = vmatprep.subr.bf16.mxu0 0
    %2652 = vmatpush2.bf16.msra.mxu0 0
    %2653 = vmatprep.mubr.bf16.mxu0 0
    %2654 = vmatmul.mubr.bf16.gmra.mxu0 %v2619
    %v2655 = vpop.f32.mrf.mxu0
    %v2656 = vadd.f32 0.0, %v2655
    %v2657 = vpop.f32.mrf.mxu0
    %v2658 = vpop.f32.mrf.mxu0
    %v2659 = vpop.f32.mrf.mxu0
    %2660 = vdwg.mxu0
    %s2661 = scalar_lea.vmem %s9, 128
    %v2662 = vld [vmem:[%s2661] sm:$0xff]
    %v2663 = vld [vmem:[%s2661 + $0x8] sm:$0xff]
    %v2664 = vld [vmem:[%s2661 + $0x10] sm:$0xff]
    %v2665 = vld [vmem:[%s2661 + $0x18] sm:$0xff]
    %v2666 = vld [vmem:[%s2661 + $0x20] sm:$0xff]
    %v2667 = vld [vmem:[%s2661 + $0x28] sm:$0xff]
    %v2668 = vld [vmem:[%s2661 + $0x30] sm:$0xff]
    %v2669 = vld [vmem:[%s2661 + $0x38] sm:$0xff]
    %v2670 = vpack.c.bf16 %v2656, %v2656
    %v2671 = vpack.c.bf16 %v2663, %v2662
    %v2672 = vpack.c.bf16 %v2665, %v2664
    %v2673 = vpack.c.bf16 %v2667, %v2666
    %v2674 = vpack.c.bf16 %v2669, %v2668
    %v2676 = vsel %vm2346, %v2670, 0
    %2678 = vmatprep.subr.bf16.mxu0 0
    %2679 = vmatpush1.bf16.msra.mxu0 0
    %2680 = vmatprep.subr.bf16.mxu0 0
    %2681 = vmatpush1.bf16.msra.mxu0 0
    %2682 = vmatprep.subr.bf16.mxu0 0
    %2683 = vmatpush1.bf16.msra.mxu0 0
    %2684 = vmatprep.subr.bf16.mxu0 0
    %2685 = vmatpush1.bf16.msra.mxu0 0
    %2686 = vmatprep.subr.bf16.mxu0 0
    %2687 = vmatpush1.bf16.msra.mxu0 %v2674
    %2688 = vmatprep.subr.bf16.mxu0 0
    %2689 = vmatpush1.bf16.msra.mxu0 %v2673
    %2690 = vmatprep.subr.bf16.mxu0 0
    %2691 = vmatpush1.bf16.msra.mxu0 %v2672
    %2692 = vmatprep.subr.bf16.mxu0 0
    %2693 = vmatpush1.bf16.msra.mxu0 %v2671
    %2694 = vmatprep.subr.bf16.mxu0 0
    %2695 = vmatpush2.bf16.msra.mxu0 0
    %2696 = vmatprep.subr.bf16.mxu0 0
    %2697 = vmatpush2.bf16.msra.mxu0 0
    %2698 = vmatprep.subr.bf16.mxu0 0
    %2699 = vmatpush2.bf16.msra.mxu0 0
    %2700 = vmatprep.subr.bf16.mxu0 0
    %2701 = vmatpush2.bf16.msra.mxu0 0
    %2702 = vmatprep.subr.bf16.mxu0 0
    %2703 = vmatpush2.bf16.msra.mxu0 0
    %2704 = vmatprep.subr.bf16.mxu0 0
    %2705 = vmatpush2.bf16.msra.mxu0 0
    %2706 = vmatprep.subr.bf16.mxu0 0
    %2707 = vmatpush2.bf16.msra.mxu0 0
    %2708 = vmatprep.subr.bf16.mxu0 0
    %2709 = vmatpush2.bf16.msra.mxu0 0
    %2710 = vmatprep.mubr.bf16.mxu0 0
    %2711 = vmatmul.mubr.bf16.gmra.mxu0 %v2676
    %v2712 = vpop.f32.mrf.mxu0
    %v2713 = vadd.f32 0.0, %v2712
    %v2714 = vpop.f32.mrf.mxu0
    %v2715 = vpop.f32.mrf.mxu0
    %v2716 = vpop.f32.mrf.mxu0
    %2717 = vdwg.mxu0
    %v2718 = vadd.f32 %v2610, %v2713
    %s2719 = scalar_lea.vmem %s8, 6
    %v2720 = vld [vmem:[%s2719] sm:$0x3]
    %v2721 = vpack.c.bf16 %v2720, %v2720
    %v2723 = vsel %vm2408, %v2721, 0
    %2725 = vmatprep.subr.bf16.mxu0 0
    %2726 = vmatpush1.bf16.msra.mxu0 0
    %2727 = vmatprep.subr.bf16.mxu0 0
    %2728 = vmatpush1.bf16.msra.mxu0 0
    %2729 = vmatprep.subr.bf16.mxu0 0
    %2730 = vmatpush1.bf16.msra.mxu0 0
    %2731 = vmatprep.subr.bf16.mxu0 0
    %2732 = vmatpush1.bf16.msra.mxu0 0
    %2733 = vmatprep.subr.bf16.mxu0 0
    %2734 = vmatpush1.bf16.msra.mxu0 0
    %2735 = vmatprep.subr.bf16.mxu0 0
    %2736 = vmatpush1.bf16.msra.mxu0 0
    %2737 = vmatprep.subr.bf16.mxu0 0
    %2738 = vmatpush1.bf16.msra.mxu0 %v2414
    %2739 = vmatprep.subr.bf16.mxu0 0
    %2740 = vmatpush1.bf16.msra.mxu0 %v2406
    %2741 = vmatprep.subr.bf16.mxu0 0
    %2742 = vmatpush2.bf16.msra.mxu0 0
    %2743 = vmatprep.subr.bf16.mxu0 0
    %2744 = vmatpush2.bf16.msra.mxu0 0
    %2745 = vmatprep.subr.bf16.mxu0 0
    %2746 = vmatpush2.bf16.msra.mxu0 0
    %2747 = vmatprep.subr.bf16.mxu0 0
    %2748 = vmatpush2.bf16.msra.mxu0 0
    %2749 = vmatprep.subr.bf16.mxu0 0
    %2750 = vmatpush2.bf16.msra.mxu0 0
    %2751 = vmatprep.subr.bf16.mxu0 0
    %2752 = vmatpush2.bf16.msra.mxu0 0
    %2753 = vmatprep.subr.bf16.mxu0 0
    %2754 = vmatpush2.bf16.msra.mxu0 0
    %2755 = vmatprep.subr.bf16.mxu0 0
    %2756 = vmatpush2.bf16.msra.mxu0 0
    %2757 = vmatprep.mubr.bf16.mxu0 0
    %2758 = vmatmul.mubr.bf16.gmra.mxu0 %v2723
    %v2759 = vpop.f32.mrf.mxu0
    %v2760 = vadd.f32 0.0, %v2759
    %v2761 = vpop.f32.mrf.mxu0
    %v2762 = vpop.f32.mrf.mxu0
    %v2763 = vpop.f32.mrf.mxu0
    %2764 = vdwg.mxu0
    %s2765 = scalar_lea.vmem %s9, 192
    %v2766 = vld [vmem:[%s2765] sm:$0xff]
    %v2767 = vld [vmem:[%s2765 + $0x8] sm:$0xff]
    %v2768 = vld [vmem:[%s2765 + $0x10] sm:$0xff]
    %v2769 = vld [vmem:[%s2765 + $0x18] sm:$0xff]
    %v2770 = vld [vmem:[%s2765 + $0x20] sm:$0xff]
    %v2771 = vld [vmem:[%s2765 + $0x28] sm:$0xff]
    %v2772 = vld [vmem:[%s2765 + $0x30] sm:$0xff]
    %v2773 = vld [vmem:[%s2765 + $0x38] sm:$0xff]
    %v2774 = vpack.c.bf16 %v2760, %v2760
    %v2775 = vpack.c.bf16 %v2767, %v2766
    %v2776 = vpack.c.bf16 %v2769, %v2768
    %v2777 = vpack.c.bf16 %v2771, %v2770
    %v2778 = vpack.c.bf16 %v2773, %v2772
    %v2780 = vsel %vm2346, %v2774, 0
    %2782 = vmatprep.subr.bf16.mxu0 0
    %2783 = vmatpush1.bf16.msra.mxu0 0
    %2784 = vmatprep.subr.bf16.mxu0 0
    %2785 = vmatpush1.bf16.msra.mxu0 0
    %2786 = vmatprep.subr.bf16.mxu0 0
    %2787 = vmatpush1.bf16.msra.mxu0 0
    %2788 = vmatprep.subr.bf16.mxu0 0
    %2789 = vmatpush1.bf16.msra.mxu0 0
    %2790 = vmatprep.subr.bf16.mxu0 0
    %2791 = vmatpush1.bf16.msra.mxu0 %v2778
    %2792 = vmatprep.subr.bf16.mxu0 0
    %2793 = vmatpush1.bf16.msra.mxu0 %v2777
    %2794 = vmatprep.subr.bf16.mxu0 0
    %2795 = vmatpush1.bf16.msra.mxu0 %v2776
    %2796 = vmatprep.subr.bf16.mxu0 0
    %2797 = vmatpush1.bf16.msra.mxu0 %v2775
    %2798 = vmatprep.subr.bf16.mxu0 0
    %2799 = vmatpush2.bf16.msra.mxu0 0
    %2800 = vmatprep.subr.bf16.mxu0 0
    %2801 = vmatpush2.bf16.msra.mxu0 0
    %2802 = vmatprep.subr.bf16.mxu0 0
    %2803 = vmatpush2.bf16.msra.mxu0 0
    %2804 = vmatprep.subr.bf16.mxu0 0
    %2805 = vmatpush2.bf16.msra.mxu0 0
    %2806 = vmatprep.subr.bf16.mxu0 0
    %2807 = vmatpush2.bf16.msra.mxu0 0
    %2808 = vmatprep.subr.bf16.mxu0 0
    %2809 = vmatpush2.bf16.msra.mxu0 0
    %2810 = vmatprep.subr.bf16.mxu0 0
    %2811 = vmatpush2.bf16.msra.mxu0 0
    %2812 = vmatprep.subr.bf16.mxu0 0
    %2813 = vmatpush2.bf16.msra.mxu0 0
    %2814 = vmatprep.mubr.bf16.mxu0 0
    %2815 = vmatmul.mubr.bf16.gmra.mxu0 %v2780
    %v2816 = vpop.f32.mrf.mxu0
    %v2817 = vadd.f32 0.0, %v2816
    %v2818 = vpop.f32.mrf.mxu0
    %v2819 = vpop.f32.mrf.mxu0
    %v2820 = vpop.f32.mrf.mxu0
    %2821 = vdwg.mxu0
    %v2822 = vadd.f32 %v2718, %v2817
    %s2823 = scalar_lea.vmem %s8, 8
    %v2824 = vld [vmem:[%s2823] sm:$0x3]
    %v2825 = vpack.c.bf16 %v2824, %v2824
    %v2827 = vsel %vm2408, %v2825, 0
    %2829 = vmatprep.subr.bf16.mxu0 0
    %2830 = vmatpush1.bf16.msra.mxu0 0
    %2831 = vmatprep.subr.bf16.mxu0 0
    %2832 = vmatpush1.bf16.msra.mxu0 0
    %2833 = vmatprep.subr.bf16.mxu0 0
    %2834 = vmatpush1.bf16.msra.mxu0 0
    %2835 = vmatprep.subr.bf16.mxu0 0
    %2836 = vmatpush1.bf16.msra.mxu0 0
    %2837 = vmatprep.subr.bf16.mxu0 0
    %2838 = vmatpush1.bf16.msra.mxu0 0
    %2839 = vmatprep.subr.bf16.mxu0 0
    %2840 = vmatpush1.bf16.msra.mxu0 0
    %2841 = vmatprep.subr.bf16.mxu0 0
    %2842 = vmatpush1.bf16.msra.mxu0 %v2414
    %2843 = vmatprep.subr.bf16.mxu0 0
    %2844 = vmatpush1.bf16.msra.mxu0 %v2406
    %2845 = vmatprep.subr.bf16.mxu0 0
    %2846 = vmatpush2.bf16.msra.mxu0 0
    %2847 = vmatprep.subr.bf16.mxu0 0
    %2848 = vmatpush2.bf16.msra.mxu0 0
    %2849 = vmatprep.subr.bf16.mxu0 0
    %2850 = vmatpush2.bf16.msra.mxu0 0
    %2851 = vmatprep.subr.bf16.mxu0 0
    %2852 = vmatpush2.bf16.msra.mxu0 0
    %2853 = vmatprep.subr.bf16.mxu0 0
    %2854 = vmatpush2.bf16.msra.mxu0 0
    %2855 = vmatprep.subr.bf16.mxu0 0
    %2856 = vmatpush2.bf16.msra.mxu0 0
    %2857 = vmatprep.subr.bf16.mxu0 0
    %2858 = vmatpush2.bf16.msra.mxu0 0
    %2859 = vmatprep.subr.bf16.mxu0 0
    %2860 = vmatpush2.bf16.msra.mxu0 0
    %2861 = vmatprep.mubr.bf16.mxu0 0
    %2862 = vmatmul.mubr.bf16.gmra.mxu0 %v2827
    %v2863 = vpop.f32.mrf.mxu0
    %v2864 = vadd.f32 0.0, %v2863
    %v2865 = vpop.f32.mrf.mxu0
    %v2866 = vpop.f32.mrf.mxu0
    %v2867 = vpop.f32.mrf.mxu0
    %2868 = vdwg.mxu0
    %s2869 = scalar_lea.vmem %s9, 256
    %v2870 = vld [vmem:[%s2869] sm:$0xff]
    %v2871 = vld [vmem:[%s2869 + $0x8] sm:$0xff]
    %v2872 = vld [vmem:[%s2869 + $0x10] sm:$0xff]
    %v2873 = vld [vmem:[%s2869 + $0x18] sm:$0xff]
    %v2874 = vld [vmem:[%s2869 + $0x20] sm:$0xff]
    %v2875 = vld [vmem:[%s2869 + $0x28] sm:$0xff]
    %v2876 = vld [vmem:[%s2869 + $0x30] sm:$0xff]
    %v2877 = vld [vmem:[%s2869 + $0x38] sm:$0xff]
    %v2878 = vpack.c.bf16 %v2864, %v2864
    %v2879 = vpack.c.bf16 %v2871, %v2870
    %v2880 = vpack.c.bf16 %v2873, %v2872
    %v2881 = vpack.c.bf16 %v2875, %v2874
    %v2882 = vpack.c.bf16 %v2877, %v2876
    %v2884 = vsel %vm2346, %v2878, 0
    %2886 = vmatprep.subr.bf16.mxu0 0
    %2887 = vmatpush1.bf16.msra.mxu0 0
    %2888 = vmatprep.subr.bf16.mxu0 0
    %2889 = vmatpush1.bf16.msra.mxu0 0
    %2890 = vmatprep.subr.bf16.mxu0 0
    %2891 = vmatpush1.bf16.msra.mxu0 0
    %2892 = vmatprep.subr.bf16.mxu0 0
    %2893 = vmatpush1.bf16.msra.mxu0 0
    %2894 = vmatprep.subr.bf16.mxu0 0
    %2895 = vmatpush1.bf16.msra.mxu0 %v2882
    %2896 = vmatprep.subr.bf16.mxu0 0
    %2897 = vmatpush1.bf16.msra.mxu0 %v2881
    %2898 = vmatprep.subr.bf16.mxu0 0
    %2899 = vmatpush1.bf16.msra.mxu0 %v2880
    %2900 = vmatprep.subr.bf16.mxu0 0
    %2901 = vmatpush1.bf16.msra.mxu0 %v2879
    %2902 = vmatprep.subr.bf16.mxu0 0
    %2903 = vmatpush2.bf16.msra.mxu0 0
    %2904 = vmatprep.subr.bf16.mxu0 0
    %2905 = vmatpush2.bf16.msra.mxu0 0
    %2906 = vmatprep.subr.bf16.mxu0 0
    %2907 = vmatpush2.bf16.msra.mxu0 0
    %2908 = vmatprep.subr.bf16.mxu0 0
    %2909 = vmatpush2.bf16.msra.mxu0 0
    %2910 = vmatprep.subr.bf16.mxu0 0
    %2911 = vmatpush2.bf16.msra.mxu0 0
    %2912 = vmatprep.subr.bf16.mxu0 0
    %2913 = vmatpush2.bf16.msra.mxu0 0
    %2914 = vmatprep.subr.bf16.mxu0 0
    %2915 = vmatpush2.bf16.msra.mxu0 0
    %2916 = vmatprep.subr.bf16.mxu0 0
    %2917 = vmatpush2.bf16.msra.mxu0 0
    %2918 = vmatprep.mubr.bf16.mxu0 0
    %2919 = vmatmul.mubr.bf16.gmra.mxu0 %v2884
    %v2920 = vpop.f32.mrf.mxu0
    %v2921 = vadd.f32 0.0, %v2920
    %v2922 = vpop.f32.mrf.mxu0
    %v2923 = vpop.f32.mrf.mxu0
    %v2924 = vpop.f32.mrf.mxu0
    %2925 = vdwg.mxu0
    %v2926 = vadd.f32 %v2822, %v2921
    %s2927 = scalar_lea.vmem %s8, 10
    %v2928 = vld [vmem:[%s2927] sm:$0x3]
    %v2929 = vpack.c.bf16 %v2928, %v2928
    %v2931 = vsel %vm2408, %v2929, 0
    %2933 = vmatprep.subr.bf16.mxu0 0
    %2934 = vmatpush1.bf16.msra.mxu0 0
    %2935 = vmatprep.subr.bf16.mxu0 0
    %2936 = vmatpush1.bf16.msra.mxu0 0
    %2937 = vmatprep.subr.bf16.mxu0 0
    %2938 = vmatpush1.bf16.msra.mxu0 0
    %2939 = vmatprep.subr.bf16.mxu0 0
    %2940 = vmatpush1.bf16.msra.mxu0 0
    %2941 = vmatprep.subr.bf16.mxu0 0
    %2942 = vmatpush1.bf16.msra.mxu0 0
    %2943 = vmatprep.subr.bf16.mxu0 0
    %2944 = vmatpush1.bf16.msra.mxu0 0
    %2945 = vmatprep.subr.bf16.mxu0 0
    %2946 = vmatpush1.bf16.msra.mxu0 %v2414
    %2947 = vmatprep.subr.bf16.mxu0 0
    %2948 = vmatpush1.bf16.msra.mxu0 %v2406
    %2949 = vmatprep.subr.bf16.mxu0 0
    %2950 = vmatpush2.bf16.msra.mxu0 0
    %2951 = vmatprep.subr.bf16.mxu0 0
    %2952 = vmatpush2.bf16.msra.mxu0 0
    %2953 = vmatprep.subr.bf16.mxu0 0
    %2954 = vmatpush2.bf16.msra.mxu0 0
    %2955 = vmatprep.subr.bf16.mxu0 0
    %2956 = vmatpush2.bf16.msra.mxu0 0
    %2957 = vmatprep.subr.bf16.mxu0 0
    %2958 = vmatpush2.bf16.msra.mxu0 0
    %2959 = vmatprep.subr.bf16.mxu0 0
    %2960 = vmatpush2.bf16.msra.mxu0 0
    %2961 = vmatprep.subr.bf16.mxu0 0
    %2962 = vmatpush2.bf16.msra.mxu0 0
    %2963 = vmatprep.subr.bf16.mxu0 0
    %2964 = vmatpush2.bf16.msra.mxu0 0
    %2965 = vmatprep.mubr.bf16.mxu0 0
    %2966 = vmatmul.mubr.bf16.gmra.mxu0 %v2931
    %v2967 = vpop.f32.mrf.mxu0
    %v2968 = vadd.f32 0.0, %v2967
    %v2969 = vpop.f32.mrf.mxu0
    %v2970 = vpop.f32.mrf.mxu0
    %v2971 = vpop.f32.mrf.mxu0
    %2972 = vdwg.mxu0
    %s2973 = scalar_lea.vmem %s9, 320
    %v2974 = vld [vmem:[%s2973] sm:$0xff]
    %v2975 = vld [vmem:[%s2973 + $0x8] sm:$0xff]
    %v2976 = vld [vmem:[%s2973 + $0x10] sm:$0xff]
    %v2977 = vld [vmem:[%s2973 + $0x18] sm:$0xff]
    %v2978 = vld [vmem:[%s2973 + $0x20] sm:$0xff]
    %v2979 = vld [vmem:[%s2973 + $0x28] sm:$0xff]
    %v2980 = vld [vmem:[%s2973 + $0x30] sm:$0xff]
    %v2981 = vld [vmem:[%s2973 + $0x38] sm:$0xff]
    %v2982 = vpack.c.bf16 %v2968, %v2968
    %v2983 = vpack.c.bf16 %v2975, %v2974
    %v2984 = vpack.c.bf16 %v2977, %v2976
    %v2985 = vpack.c.bf16 %v2979, %v2978
    %v2986 = vpack.c.bf16 %v2981, %v2980
    %v2988 = vsel %vm2346, %v2982, 0
    %2990 = vmatprep.subr.bf16.mxu0 0
    %2991 = vmatpush1.bf16.msra.mxu0 0
    %2992 = vmatprep.subr.bf16.mxu0 0
    %2993 = vmatpush1.bf16.msra.mxu0 0
    %2994 = vmatprep.subr.bf16.mxu0 0
    %2995 = vmatpush1.bf16.msra.mxu0 0
    %2996 = vmatprep.subr.bf16.mxu0 0
    %2997 = vmatpush1.bf16.msra.mxu0 0
    %2998 = vmatprep.subr.bf16.mxu0 0
    %2999 = vmatpush1.bf16.msra.mxu0 %v2986
    %3000 = vmatprep.subr.bf16.mxu0 0
    %3001 = vmatpush1.bf16.msra.mxu0 %v2985
    %3002 = vmatprep.subr.bf16.mxu0 0
    %3003 = vmatpush1.bf16.msra.mxu0 %v2984
    %3004 = vmatprep.subr.bf16.mxu0 0
    %3005 = vmatpush1.bf16.msra.mxu0 %v2983
    %3006 = vmatprep.subr.bf16.mxu0 0
    %3007 = vmatpush2.bf16.msra.mxu0 0
    %3008 = vmatprep.subr.bf16.mxu0 0
    %3009 = vmatpush2.bf16.msra.mxu0 0
    %3010 = vmatprep.subr.bf16.mxu0 0
    %3011 = vmatpush2.bf16.msra.mxu0 0
    %3012 = vmatprep.subr.bf16.mxu0 0
    %3013 = vmatpush2.bf16.msra.mxu0 0
    %3014 = vmatprep.subr.bf16.mxu0 0
    %3015 = vmatpush2.bf16.msra.mxu0 0
    %3016 = vmatprep.subr.bf16.mxu0 0
    %3017 = vmatpush2.bf16.msra.mxu0 0
    %3018 = vmatprep.subr.bf16.mxu0 0
    %3019 = vmatpush2.bf16.msra.mxu0 0
    %3020 = vmatprep.subr.bf16.mxu0 0
    %3021 = vmatpush2.bf16.msra.mxu0 0
    %3022 = vmatprep.mubr.bf16.mxu0 0
    %3023 = vmatmul.mubr.bf16.gmra.mxu0 %v2988
    %v3024 = vpop.f32.mrf.mxu0
    %v3025 = vadd.f32 0.0, %v3024
    %v3026 = vpop.f32.mrf.mxu0
    %v3027 = vpop.f32.mrf.mxu0
    %v3028 = vpop.f32.mrf.mxu0
    %3029 = vdwg.mxu0
    %v3030 = vadd.f32 %v2926, %v3025
    %s3031 = scalar_lea.vmem %s8, 12
    %v3032 = vld [vmem:[%s3031] sm:$0x3]
    %v3033 = vpack.c.bf16 %v3032, %v3032
    %v3035 = vsel %vm2408, %v3033, 0
    %3037 = vmatprep.subr.bf16.mxu0 0
    %3038 = vmatpush1.bf16.msra.mxu0 0
    %3039 = vmatprep.subr.bf16.mxu0 0
    %3040 = vmatpush1.bf16.msra.mxu0 0
    %3041 = vmatprep.subr.bf16.mxu0 0
    %3042 = vmatpush1.bf16.msra.mxu0 0
    %3043 = vmatprep.subr.bf16.mxu0 0
    %3044 = vmatpush1.bf16.msra.mxu0 0
    %3045 = vmatprep.subr.bf16.mxu0 0
    %3046 = vmatpush1.bf16.msra.mxu0 0
    %3047 = vmatprep.subr.bf16.mxu0 0
    %3048 = vmatpush1.bf16.msra.mxu0 0
    %3049 = vmatprep.subr.bf16.mxu0 0
    %3050 = vmatpush1.bf16.msra.mxu0 %v2414
    %3051 = vmatprep.subr.bf16.mxu0 0
    %3052 = vmatpush1.bf16.msra.mxu0 %v2406
    %3053 = vmatprep.subr.bf16.mxu0 0
    %3054 = vmatpush2.bf16.msra.mxu0 0
    %3055 = vmatprep.subr.bf16.mxu0 0
    %3056 = vmatpush2.bf16.msra.mxu0 0
    %3057 = vmatprep.subr.bf16.mxu0 0
    %3058 = vmatpush2.bf16.msra.mxu0 0
    %3059 = vmatprep.subr.bf16.mxu0 0
    %3060 = vmatpush2.bf16.msra.mxu0 0
    %3061 = vmatprep.subr.bf16.mxu0 0
    %3062 = vmatpush2.bf16.msra.mxu0 0
    %3063 = vmatprep.subr.bf16.mxu0 0
    %3064 = vmatpush2.bf16.msra.mxu0 0
    %3065 = vmatprep.subr.bf16.mxu0 0
    %3066 = vmatpush2.bf16.msra.mxu0 0
    %3067 = vmatprep.subr.bf16.mxu0 0
    %3068 = vmatpush2.bf16.msra.mxu0 0
    %3069 = vmatprep.mubr.bf16.mxu0 0
    %3070 = vmatmul.mubr.bf16.gmra.mxu0 %v3035
    %v3071 = vpop.f32.mrf.mxu0
    %v3072 = vadd.f32 0.0, %v3071
    %v3073 = vpop.f32.mrf.mxu0
    %v3074 = vpop.f32.mrf.mxu0
    %v3075 = vpop.f32.mrf.mxu0
    %3076 = vdwg.mxu0
    %s3077 = scalar_lea.vmem %s9, 384
    %v3078 = vld [vmem:[%s3077] sm:$0xff]
    %v3079 = vld [vmem:[%s3077 + $0x8] sm:$0xff]
    %v3080 = vld [vmem:[%s3077 + $0x10] sm:$0xff]
    %v3081 = vld [vmem:[%s3077 + $0x18] sm:$0xff]
    %v3082 = vld [vmem:[%s3077 + $0x20] sm:$0xff]
    %v3083 = vld [vmem:[%s3077 + $0x28] sm:$0xff]
    %v3084 = vld [vmem:[%s3077 + $0x30] sm:$0xff]
    %v3085 = vld [vmem:[%s3077 + $0x38] sm:$0xff]
    %v3086 = vpack.c.bf16 %v3072, %v3072
    %v3087 = vpack.c.bf16 %v3079, %v3078
    %v3088 = vpack.c.bf16 %v3081, %v3080
    %v3089 = vpack.c.bf16 %v3083, %v3082
    %v3090 = vpack.c.bf16 %v3085, %v3084
    %v3092 = vsel %vm2346, %v3086, 0
    %3094 = vmatprep.subr.bf16.mxu0 0
    %3095 = vmatpush1.bf16.msra.mxu0 0
    %3096 = vmatprep.subr.bf16.mxu0 0
    %3097 = vmatpush1.bf16.msra.mxu0 0
    %3098 = vmatprep.subr.bf16.mxu0 0
    %3099 = vmatpush1.bf16.msra.mxu0 0
    %3100 = vmatprep.subr.bf16.mxu0 0
    %3101 = vmatpush1.bf16.msra.mxu0 0
    %3102 = vmatprep.subr.bf16.mxu0 0
    %3103 = vmatpush1.bf16.msra.mxu0 %v3090
    %3104 = vmatprep.subr.bf16.mxu0 0
    %3105 = vmatpush1.bf16.msra.mxu0 %v3089
    %3106 = vmatprep.subr.bf16.mxu0 0
    %3107 = vmatpush1.bf16.msra.mxu0 %v3088
    %3108 = vmatprep.subr.bf16.mxu0 0
    %3109 = vmatpush1.bf16.msra.mxu0 %v3087
    %3110 = vmatprep.subr.bf16.mxu0 0
    %3111 = vmatpush2.bf16.msra.mxu0 0
    %3112 = vmatprep.subr.bf16.mxu0 0
    %3113 = vmatpush2.bf16.msra.mxu0 0
    %3114 = vmatprep.subr.bf16.mxu0 0
    %3115 = vmatpush2.bf16.msra.mxu0 0
    %3116 = vmatprep.subr.bf16.mxu0 0
    %3117 = vmatpush2.bf16.msra.mxu0 0
    %3118 = vmatprep.subr.bf16.mxu0 0
    %3119 = vmatpush2.bf16.msra.mxu0 0
    %3120 = vmatprep.subr.bf16.mxu0 0
    %3121 = vmatpush2.bf16.msra.mxu0 0
    %3122 = vmatprep.subr.bf16.mxu0 0
    %3123 = vmatpush2.bf16.msra.mxu0 0
    %3124 = vmatprep.subr.bf16.mxu0 0
    %3125 = vmatpush2.bf16.msra.mxu0 0
    %3126 = vmatprep.mubr.bf16.mxu0 0
    %3127 = vmatmul.mubr.bf16.gmra.mxu0 %v3092
    %v3128 = vpop.f32.mrf.mxu0
    %v3129 = vadd.f32 0.0, %v3128
    %v3130 = vpop.f32.mrf.mxu0
    %v3131 = vpop.f32.mrf.mxu0
    %v3132 = vpop.f32.mrf.mxu0
    %3133 = vdwg.mxu0
    %v3134 = vadd.f32 %v3030, %v3129
    %s3135 = scalar_lea.vmem %s8, 14
    %v3136 = vld [vmem:[%s3135] sm:$0x3]
    %v3137 = vpack.c.bf16 %v3136, %v3136
    %v3139 = vsel %vm2408, %v3137, 0
    %3141 = vmatprep.subr.bf16.mxu0 0
    %3142 = vmatpush1.bf16.msra.mxu0 0
    %3143 = vmatprep.subr.bf16.mxu0 0
    %3144 = vmatpush1.bf16.msra.mxu0 0
    %3145 = vmatprep.subr.bf16.mxu0 0
    %3146 = vmatpush1.bf16.msra.mxu0 0
    %3147 = vmatprep.subr.bf16.mxu0 0
    %3148 = vmatpush1.bf16.msra.mxu0 0
    %3149 = vmatprep.subr.bf16.mxu0 0
    %3150 = vmatpush1.bf16.msra.mxu0 0
    %3151 = vmatprep.subr.bf16.mxu0 0
    %3152 = vmatpush1.bf16.msra.mxu0 0
    %3153 = vmatprep.subr.bf16.mxu0 0
    %3154 = vmatpush1.bf16.msra.mxu0 %v2414
    %3155 = vmatprep.subr.bf16.mxu0 0
    %3156 = vmatpush1.bf16.msra.mxu0 %v2406
    %3157 = vmatprep.subr.bf16.mxu0 0
    %3158 = vmatpush2.bf16.msra.mxu0 0
    %3159 = vmatprep.subr.bf16.mxu0 0
    %3160 = vmatpush2.bf16.msra.mxu0 0
    %3161 = vmatprep.subr.bf16.mxu0 0
    %3162 = vmatpush2.bf16.msra.mxu0 0
    %3163 = vmatprep.subr.bf16.mxu0 0
    %3164 = vmatpush2.bf16.msra.mxu0 0
    %3165 = vmatprep.subr.bf16.mxu0 0
    %3166 = vmatpush2.bf16.msra.mxu0 0
    %3167 = vmatprep.subr.bf16.mxu0 0
    %3168 = vmatpush2.bf16.msra.mxu0 0
    %3169 = vmatprep.subr.bf16.mxu0 0
    %3170 = vmatpush2.bf16.msra.mxu0 0
    %3171 = vmatprep.subr.bf16.mxu0 0
    %3172 = vmatpush2.bf16.msra.mxu0 0
    %3173 = vmatprep.mubr.bf16.mxu0 0
    %3174 = vmatmul.mubr.bf16.gmra.mxu0 %v3139
    %v3175 = vpop.f32.mrf.mxu0
    %v3176 = vadd.f32 0.0, %v3175
    %v3177 = vpop.f32.mrf.mxu0
    %v3178 = vpop.f32.mrf.mxu0
    %v3179 = vpop.f32.mrf.mxu0
    %3180 = vdwg.mxu0
    %s3181 = scalar_lea.vmem %s9, 448
    %v3182 = vld [vmem:[%s3181] sm:$0xff]
    %v3183 = vld [vmem:[%s3181 + $0x8] sm:$0xff]
    %v3184 = vld [vmem:[%s3181 + $0x10] sm:$0xff]
    %v3185 = vld [vmem:[%s3181 + $0x18] sm:$0xff]
    %v3186 = vld [vmem:[%s3181 + $0x20] sm:$0xff]
    %v3187 = vld [vmem:[%s3181 + $0x28] sm:$0xff]
    %v3188 = vld [vmem:[%s3181 + $0x30] sm:$0xff]
    %v3189 = vld [vmem:[%s3181 + $0x38] sm:$0xff]
    %v3190 = vpack.c.bf16 %v3176, %v3176
    %v3191 = vpack.c.bf16 %v3183, %v3182
    %v3192 = vpack.c.bf16 %v3185, %v3184
    %v3193 = vpack.c.bf16 %v3187, %v3186
    %v3194 = vpack.c.bf16 %v3189, %v3188
    %v3196 = vsel %vm2346, %v3190, 0
    %3198 = vmatprep.subr.bf16.mxu0 0
    %3199 = vmatpush1.bf16.msra.mxu0 0
    %3200 = vmatprep.subr.bf16.mxu0 0
    %3201 = vmatpush1.bf16.msra.mxu0 0
    %3202 = vmatprep.subr.bf16.mxu0 0
    %3203 = vmatpush1.bf16.msra.mxu0 0
    %3204 = vmatprep.subr.bf16.mxu0 0
    %3205 = vmatpush1.bf16.msra.mxu0 0
    %3206 = vmatprep.subr.bf16.mxu0 0
    %3207 = vmatpush1.bf16.msra.mxu0 %v3194
    %3208 = vmatprep.subr.bf16.mxu0 0
    %3209 = vmatpush1.bf16.msra.mxu0 %v3193
    %3210 = vmatprep.subr.bf16.mxu0 0
    %3211 = vmatpush1.bf16.msra.mxu0 %v3192
    %3212 = vmatprep.subr.bf16.mxu0 0
    %3213 = vmatpush1.bf16.msra.mxu0 %v3191
    %3214 = vmatprep.subr.bf16.mxu0 0
    %3215 = vmatpush2.bf16.msra.mxu0 0
    %3216 = vmatprep.subr.bf16.mxu0 0
    %3217 = vmatpush2.bf16.msra.mxu0 0
    %3218 = vmatprep.subr.bf16.mxu0 0
    %3219 = vmatpush2.bf16.msra.mxu0 0
    %3220 = vmatprep.subr.bf16.mxu0 0
    %3221 = vmatpush2.bf16.msra.mxu0 0
    %3222 = vmatprep.subr.bf16.mxu0 0
    %3223 = vmatpush2.bf16.msra.mxu0 0
    %3224 = vmatprep.subr.bf16.mxu0 0
    %3225 = vmatpush2.bf16.msra.mxu0 0
    %3226 = vmatprep.subr.bf16.mxu0 0
    %3227 = vmatpush2.bf16.msra.mxu0 0
    %3228 = vmatprep.subr.bf16.mxu0 0
    %3229 = vmatpush2.bf16.msra.mxu0 0
    %3230 = vmatprep.mubr.bf16.mxu0 0
    %3231 = vmatmul.mubr.bf16.gmra.mxu0 %v3196
    %v3232 = vpop.f32.mrf.mxu0
    %v3233 = vadd.f32 0.0, %v3232
    %v3234 = vpop.f32.mrf.mxu0
    %v3235 = vpop.f32.mrf.mxu0
    %v3236 = vpop.f32.mrf.mxu0
    %3237 = vdwg.mxu0
    %v3238 = vadd.f32 %v3134, %v3233
    %s3239 = scalar_lea.vmem %s8, 16
    %v3240 = vld [vmem:[%s3239] sm:$0x3]
    %v3241 = vpack.c.bf16 %v3240, %v3240
    %v3243 = vsel %vm2408, %v3241, 0
    %3245 = vmatprep.subr.bf16.mxu0 0
    %3246 = vmatpush1.bf16.msra.mxu0 0
    %3247 = vmatprep.subr.bf16.mxu0 0
    %3248 = vmatpush1.bf16.msra.mxu0 0
    %3249 = vmatprep.subr.bf16.mxu0 0
    %3250 = vmatpush1.bf16.msra.mxu0 0
    %3251 = vmatprep.subr.bf16.mxu0 0
    %3252 = vmatpush1.bf16.msra.mxu0 0
    %3253 = vmatprep.subr.bf16.mxu0 0
    %3254 = vmatpush1.bf16.msra.mxu0 0
    %3255 = vmatprep.subr.bf16.mxu0 0
    %3256 = vmatpush1.bf16.msra.mxu0 0
    %3257 = vmatprep.subr.bf16.mxu0 0
    %3258 = vmatpush1.bf16.msra.mxu0 %v2414
    %3259 = vmatprep.subr.bf16.mxu0 0
    %3260 = vmatpush1.bf16.msra.mxu0 %v2406
    %3261 = vmatprep.subr.bf16.mxu0 0
    %3262 = vmatpush2.bf16.msra.mxu0 0
    %3263 = vmatprep.subr.bf16.mxu0 0
    %3264 = vmatpush2.bf16.msra.mxu0 0
    %3265 = vmatprep.subr.bf16.mxu0 0
    %3266 = vmatpush2.bf16.msra.mxu0 0
    %3267 = vmatprep.subr.bf16.mxu0 0
    %3268 = vmatpush2.bf16.msra.mxu0 0
    %3269 = vmatprep.subr.bf16.mxu0 0
    %3270 = vmatpush2.bf16.msra.mxu0 0
    %3271 = vmatprep.subr.bf16.mxu0 0
    %3272 = vmatpush2.bf16.msra.mxu0 0
    %3273 = vmatprep.subr.bf16.mxu0 0
    %3274 = vmatpush2.bf16.msra.mxu0 0
    %3275 = vmatprep.subr.bf16.mxu0 0
    %3276 = vmatpush2.bf16.msra.mxu0 0
    %3277 = vmatprep.mubr.bf16.mxu0 0
    %3278 = vmatmul.mubr.bf16.gmra.mxu0 %v3243
    %v3279 = vpop.f32.mrf.mxu0
    %v3280 = vadd.f32 0.0, %v3279
    %v3281 = vpop.f32.mrf.mxu0
    %v3282 = vpop.f32.mrf.mxu0
    %v3283 = vpop.f32.mrf.mxu0
    %3284 = vdwg.mxu0
    %s3285 = scalar_lea.vmem %s9, 512
    %v3286 = vld [vmem:[%s3285] sm:$0xff]
    %v3287 = vld [vmem:[%s3285 + $0x8] sm:$0xff]
    %v3288 = vld [vmem:[%s3285 + $0x10] sm:$0xff]
    %v3289 = vld [vmem:[%s3285 + $0x18] sm:$0xff]
    %v3290 = vld [vmem:[%s3285 + $0x20] sm:$0xff]
    %v3291 = vld [vmem:[%s3285 + $0x28] sm:$0xff]
    %v3292 = vld [vmem:[%s3285 + $0x30] sm:$0xff]
    %v3293 = vld [vmem:[%s3285 + $0x38] sm:$0xff]
    %v3294 = vpack.c.bf16 %v3280, %v3280
    %v3295 = vpack.c.bf16 %v3287, %v3286
    %v3296 = vpack.c.bf16 %v3289, %v3288
    %v3297 = vpack.c.bf16 %v3291, %v3290
    %v3298 = vpack.c.bf16 %v3293, %v3292
    %v3300 = vsel %vm2346, %v3294, 0
    %3302 = vmatprep.subr.bf16.mxu0 0
    %3303 = vmatpush1.bf16.msra.mxu0 0
    %3304 = vmatprep.subr.bf16.mxu0 0
    %3305 = vmatpush1.bf16.msra.mxu0 0
    %3306 = vmatprep.subr.bf16.mxu0 0
    %3307 = vmatpush1.bf16.msra.mxu0 0
    %3308 = vmatprep.subr.bf16.mxu0 0
    %3309 = vmatpush1.bf16.msra.mxu0 0
    %3310 = vmatprep.subr.bf16.mxu0 0
    %3311 = vmatpush1.bf16.msra.mxu0 %v3298
    %3312 = vmatprep.subr.bf16.mxu0 0
    %3313 = vmatpush1.bf16.msra.mxu0 %v3297
    %3314 = vmatprep.subr.bf16.mxu0 0
    %3315 = vmatpush1.bf16.msra.mxu0 %v3296
    %3316 = vmatprep.subr.bf16.mxu0 0
    %3317 = vmatpush1.bf16.msra.mxu0 %v3295
    %3318 = vmatprep.subr.bf16.mxu0 0
    %3319 = vmatpush2.bf16.msra.mxu0 0
    %3320 = vmatprep.subr.bf16.mxu0 0
    %3321 = vmatpush2.bf16.msra.mxu0 0
    %3322 = vmatprep.subr.bf16.mxu0 0
    %3323 = vmatpush2.bf16.msra.mxu0 0
    %3324 = vmatprep.subr.bf16.mxu0 0
    %3325 = vmatpush2.bf16.msra.mxu0 0
    %3326 = vmatprep.subr.bf16.mxu0 0
    %3327 = vmatpush2.bf16.msra.mxu0 0
    %3328 = vmatprep.subr.bf16.mxu0 0
    %3329 = vmatpush2.bf16.msra.mxu0 0
    %3330 = vmatprep.subr.bf16.mxu0 0
    %3331 = vmatpush2.bf16.msra.mxu0 0
    %3332 = vmatprep.subr.bf16.mxu0 0
    %3333 = vmatpush2.bf16.msra.mxu0 0
    %3334 = vmatprep.mubr.bf16.mxu0 0
    %3335 = vmatmul.mubr.bf16.gmra.mxu0 %v3300
    %v3336 = vpop.f32.mrf.mxu0
    %v3337 = vadd.f32 0.0, %v3336
    %v3338 = vpop.f32.mrf.mxu0
    %v3339 = vpop.f32.mrf.mxu0
    %v3340 = vpop.f32.mrf.mxu0
    %3341 = vdwg.mxu0
    %v3342 = vadd.f32 %v3238, %v3337
    %v3343 = vld [vmem:[%s10] sm:$0x1]
    %v3344 = vld [vmem:[%s11] sm:$0x1]
    %v3345 = vsel %vm2350, %v3342, 0.0
    %v3346 = vrot.slane %v3345, 4
    %v3347 = vadd.f32 %v3345, %v3346
    %v3348 = vrot.slane %v3347, 2
    %v3349 = vadd.f32 %v3347, %v3348
    %v3350 = vrot.slane %v3349, 1
    %v3351 = vadd.f32 %v3349, %v3350
    %v3352 = vrcp.pop 2.0
    %v3353 = vmul.f32 %v3351, %v3352
    %v3354 = vmul.f32 %v3342, %v3342
    %v3355 = vsel %vm2350, %v3354, 0.0
    %v3356 = vrot.slane %v3355, 4
    %v3357 = vadd.f32 %v3355, %v3356
    %v3358 = vrot.slane %v3357, 2
    %v3359 = vadd.f32 %v3357, %v3358
    %v3360 = vrot.slane %v3359, 1
    %v3361 = vadd.f32 %v3359, %v3360
    %v3362 = vmul.f32 %v3361, %v3352
    %v3363 = vmul.f32 %v3353, %v3353
    %v3364 = vsub.f32 %v3362, %v3363
    %v3365 = vmax.f32 %v3364, 0.0
    %v3366 = vsub.f32 %v3342, %v3353
    %v3367 = vadd.f32 %v3365, 1e-05
    %v3368 = vrsqrt.pop %v3367
    %v3369 = vmul.f32 %v3368, %v3343
    %v3370 = vlaneseq
    %v3371 = vshrl.u32 %v3370, 7
    %v3372 = vsub.s32 0, %v3371
    %v3373 = vrot.slane %v3369, %v3372
    %v3374 = vmul.f32 %v3366, %v3373
    %v3376 = vlaneseq
    %v3377 = vshrl.u32 %v3376, 7
    %v3378 = vsub.s32 0, %v3377
    %v3379 = vrot.slane %v3344, %v3378
    %v3381 = vadd.f32 %v3374, %v3379
    %v3382 = vmax.f32 %v3381, 0.0
    %v3383 = vld [vmem:[%s12] sm:$0xff]
    %v3384 = vld [vmem:[%s12 + $0x8] sm:$0xff]
    %v3385 = vld [vmem:[%s12 + $0x10] sm:$0xff]
    %v3386 = vld [vmem:[%s12 + $0x18] sm:$0xff]
    %v3387 = vld [vmem:[%s12 + $0x20] sm:$0xff]
    %v3388 = vld [vmem:[%s12 + $0x28] sm:$0xff]
    %v3389 = vld [vmem:[%s12 + $0x30] sm:$0xff]
    %v3390 = vld [vmem:[%s12 + $0x38] sm:$0xff]
    %v3391 = vld [vmem:[%s12 + $0x40] sm:$0xff]
    %v3392 = vld [vmem:[%s12 + $0x48] sm:$0xff]
    %v3393 = vld [vmem:[%s12 + $0x50] sm:$0xff]
    %v3394 = vld [vmem:[%s12 + $0x58] sm:$0xff]
    %v3395 = vld [vmem:[%s12 + $0x60] sm:$0xff]
    %v3396 = vld [vmem:[%s12 + $0x68] sm:$0xff]
    %v3397 = vld [vmem:[%s12 + $0x70] sm:$0xff]
    %v3398 = vld [vmem:[%s12 + $0x78] sm:$0xff]
    %v3399 = vld [vmem:[%s12 + $0x80] sm:$0xff]
    %v3400 = vld [vmem:[%s12 + $0x88] sm:$0xff]
    %v3401 = vld [vmem:[%s12 + $0x90] sm:$0xff]
    %v3402 = vld [vmem:[%s12 + $0x98] sm:$0xff]
    %v3403 = vld [vmem:[%s12 + $0xa0] sm:$0xff]
    %v3404 = vld [vmem:[%s12 + $0xa8] sm:$0xff]
    %v3405 = vld [vmem:[%s12 + $0xb0] sm:$0xff]
    %v3406 = vld [vmem:[%s12 + $0xb8] sm:$0xff]
    %v3407 = vld [vmem:[%s12 + $0xc0] sm:$0xff]
    %v3408 = vld [vmem:[%s12 + $0xc8] sm:$0xff]
    %v3409 = vld [vmem:[%s12 + $0xd0] sm:$0xff]
    %v3410 = vld [vmem:[%s12 + $0xd8] sm:$0xff]
    %v3411 = vld [vmem:[%s12 + $0xe0] sm:$0xff]
    %v3412 = vld [vmem:[%s12 + $0xe8] sm:$0xff]
    %v3413 = vld [vmem:[%s12 + $0xf0] sm:$0xff]
    %v3414 = vld [vmem:[%s12 + $0xf8] sm:$0xff]
    %v3415 = vpack.c.bf16 %v3382, %v3382
    %v3416 = vpack.c.bf16 %v3387, %v3383
    %v3417 = vpack.c.bf16 %v3388, %v3384
    %v3418 = vpack.c.bf16 %v3389, %v3385
    %v3419 = vpack.c.bf16 %v3390, %v3386
    %v3420 = vpack.c.bf16 %v3395, %v3391
    %v3421 = vpack.c.bf16 %v3396, %v3392
    %v3422 = vpack.c.bf16 %v3397, %v3393
    %v3423 = vpack.c.bf16 %v3398, %v3394
    %v3424 = vpack.c.bf16 %v3403, %v3399
    %v3425 = vpack.c.bf16 %v3404, %v3400
    %v3426 = vpack.c.bf16 %v3405, %v3401
    %v3427 = vpack.c.bf16 %v3406, %v3402
    %v3428 = vpack.c.bf16 %v3411, %v3407
    %v3429 = vpack.c.bf16 %v3412, %v3408
    %v3430 = vpack.c.bf16 %v3413, %v3409
    %v3431 = vpack.c.bf16 %v3414, %v3410
    %v3432 = vld [vmem:[%s13] sm:$0xf]
    %v3434 = vlaneseq
    %v3435 = vshrl.u32 %v3434, 7
    %v3436 = vsub.s32 0, %v3435
    %v3437 = vrot.slane %v3432, %v3436
    %v3438 = vlaneseq
    %v3439 = vshrl.u32 %v3438, 7
    %v3440 = vsub.s32 1, %v3439
    %v3441 = vrot.slane %v3432, %v3440
    %v3442 = vlaneseq
    %v3443 = vshrl.u32 %v3442, 7
    %v3444 = vsub.s32 2, %v3443
    %v3445 = vrot.slane %v3432, %v3444
    %v3446 = vlaneseq
    %v3447 = vshrl.u32 %v3446, 7
    %v3448 = vsub.s32 3, %v3447
    %v3449 = vrot.slane %v3432, %v3448
    %v3455 = vsel %vm2346, %v3415, 0
    %3457 = vmatprep.subr.bf16.mxu0 0
    %3458 = vmatpush1.bf16.msra.mxu0 0
    %3459 = vmatprep.subr.bf16.mxu0 0
    %3460 = vmatpush1.bf16.msra.mxu0 0
    %3461 = vmatprep.subr.bf16.mxu0 0
    %3462 = vmatpush1.bf16.msra.mxu0 0
    %3463 = vmatprep.subr.bf16.mxu0 0
    %3464 = vmatpush1.bf16.msra.mxu0 0
    %3465 = vmatprep.subr.bf16.mxu0 %v3429
    %3466 = vmatpush1.bf16.msra.mxu0 %v3428
    %3467 = vmatprep.subr.bf16.mxu0 %v3425
    %3468 = vmatpush1.bf16.msra.mxu0 %v3424
    %3469 = vmatprep.subr.bf16.mxu0 %v3421
    %3470 = vmatpush1.bf16.msra.mxu0 %v3420
    %3471 = vmatprep.subr.bf16.mxu0 %v3417
    %3472 = vmatpush1.bf16.msra.mxu0 %v3416
    %3473 = vmatprep.subr.bf16.mxu0 0
    %3474 = vmatpush2.bf16.msra.mxu0 0
    %3475 = vmatprep.subr.bf16.mxu0 0
    %3476 = vmatpush2.bf16.msra.mxu0 0
    %3477 = vmatprep.subr.bf16.mxu0 0
    %3478 = vmatpush2.bf16.msra.mxu0 0
    %3479 = vmatprep.subr.bf16.mxu0 0
    %3480 = vmatpush2.bf16.msra.mxu0 0
    %3481 = vmatprep.subr.bf16.mxu0 0
    %3482 = vmatpush2.bf16.msra.mxu0 0
    %3483 = vmatprep.subr.bf16.mxu0 0
    %3484 = vmatpush2.bf16.msra.mxu0 0
    %3485 = vmatprep.subr.bf16.mxu0 0
    %3486 = vmatpush2.bf16.msra.mxu0 0
    %3487 = vmatprep.subr.bf16.mxu0 0
    %3488 = vmatpush2.bf16.msra.mxu0 0
    %3489 = vmatprep.mubr.bf16.mxu0 0
    %3490 = vmatmul.mubr.bf16.gmra.mxu0 %v3455
    %v3491 = vpop.f32.mrf.mxu0
    %v3492 = vadd.f32 %v3437, %v3491
    %v3493 = vpop.f32.mrf.mxu0
    %v3494 = vadd.f32 %v3441, %v3493
    %v3495 = vpop.f32.mrf.mxu0
    %v3496 = vpop.f32.mrf.mxu0
    %3497 = vdwg.mxu0
    %3498 = vmatprep.subr.bf16.mxu0 0
    %3499 = vmatpush1.bf16.msra.mxu0 0
    %3500 = vmatprep.subr.bf16.mxu0 0
    %3501 = vmatpush1.bf16.msra.mxu0 0
    %3502 = vmatprep.subr.bf16.mxu0 0
    %3503 = vmatpush1.bf16.msra.mxu0 0
    %3504 = vmatprep.subr.bf16.mxu0 0
    %3505 = vmatpush1.bf16.msra.mxu0 0
    %3506 = vmatprep.subr.bf16.mxu0 %v3431
    %3507 = vmatpush1.bf16.msra.mxu0 %v3430
    %3508 = vmatprep.subr.bf16.mxu0 %v3427
    %3509 = vmatpush1.bf16.msra.mxu0 %v3426
    %3510 = vmatprep.subr.bf16.mxu0 %v3423
    %3511 = vmatpush1.bf16.msra.mxu0 %v3422
    %3512 = vmatprep.subr.bf16.mxu0 %v3419
    %3513 = vmatpush1.bf16.msra.mxu0 %v3418
    %3514 = vmatprep.subr.bf16.mxu0 0
    %3515 = vmatpush2.bf16.msra.mxu0 0
    %3516 = vmatprep.subr.bf16.mxu0 0
    %3517 = vmatpush2.bf16.msra.mxu0 0
    %3518 = vmatprep.subr.bf16.mxu0 0
    %3519 = vmatpush2.bf16.msra.mxu0 0
    %3520 = vmatprep.subr.bf16.mxu0 0
    %3521 = vmatpush2.bf16.msra.mxu0 0
    %3522 = vmatprep.subr.bf16.mxu0 0
    %3523 = vmatpush2.bf16.msra.mxu0 0
    %3524 = vmatprep.subr.bf16.mxu0 0
    %3525 = vmatpush2.bf16.msra.mxu0 0
    %3526 = vmatprep.subr.bf16.mxu0 0
    %3527 = vmatpush2.bf16.msra.mxu0 0
    %3528 = vmatprep.subr.bf16.mxu0 0
    %3529 = vmatpush2.bf16.msra.mxu0 0
    %3530 = vmatprep.mubr.bf16.mxu0 0
    %3531 = vmatmul.mubr.bf16.gmra.mxu0 %v3455
    %v3532 = vpop.f32.mrf.mxu0
    %v3533 = vadd.f32 %v3445, %v3532
    %v3534 = vpop.f32.mrf.mxu0
    %v3535 = vadd.f32 %v3449, %v3534
    %v3536 = vpop.f32.mrf.mxu0
    %v3537 = vpop.f32.mrf.mxu0
    %3538 = vdwg.mxu0
    %v3539 = vmax.f32 %v3492, 0.0
    %v3540 = vmax.f32 %v3494, 0.0
    %v3541 = vmax.f32 %v3533, 0.0
    %v3542 = vmax.f32 %v3535, 0.0
    %v3543 = vld [vmem:[%s14] sm:$0xff]
    %v3544 = vld [vmem:[%s14 + $0x8] sm:$0xff]
    %v3545 = vld [vmem:[%s14 + $0x10] sm:$0xff]
    %v3546 = vld [vmem:[%s14 + $0x18] sm:$0xff]
    %v3547 = vld [vmem:[%s14 + $0x20] sm:$0xff]
    %v3548 = vld [vmem:[%s14 + $0x28] sm:$0xff]
    %v3549 = vld [vmem:[%s14 + $0x30] sm:$0xff]
    %v3550 = vld [vmem:[%s14 + $0x38] sm:$0xff]
    %v3551 = vld [vmem:[%s14 + $0x40] sm:$0xff]
    %v3552 = vld [vmem:[%s14 + $0x48] sm:$0xff]
    %v3553 = vld [vmem:[%s14 + $0x50] sm:$0xff]
    %v3554 = vld [vmem:[%s14 + $0x58] sm:$0xff]
    %v3555 = vld [vmem:[%s14 + $0x60] sm:$0xff]
    %v3556 = vld [vmem:[%s14 + $0x68] sm:$0xff]
    %v3557 = vld [vmem:[%s14 + $0x70] sm:$0xff]
    %v3558 = vld [vmem:[%s14 + $0x78] sm:$0xff]
    %v3559 = vld [vmem:[%s14 + $0x80] sm:$0xff]
    %v3560 = vld [vmem:[%s14 + $0x88] sm:$0xff]
    %v3561 = vld [vmem:[%s14 + $0x90] sm:$0xff]
    %v3562 = vld [vmem:[%s14 + $0x98] sm:$0xff]
    %v3563 = vld [vmem:[%s14 + $0xa0] sm:$0xff]
    %v3564 = vld [vmem:[%s14 + $0xa8] sm:$0xff]
    %v3565 = vld [vmem:[%s14 + $0xb0] sm:$0xff]
    %v3566 = vld [vmem:[%s14 + $0xb8] sm:$0xff]
    %v3567 = vld [vmem:[%s14 + $0xc0] sm:$0xff]
    %v3568 = vld [vmem:[%s14 + $0xc8] sm:$0xff]
    %v3569 = vld [vmem:[%s14 + $0xd0] sm:$0xff]
    %v3570 = vld [vmem:[%s14 + $0xd8] sm:$0xff]
    %v3571 = vld [vmem:[%s14 + $0xe0] sm:$0xff]
    %v3572 = vld [vmem:[%s14 + $0xe8] sm:$0xff]
    %v3573 = vld [vmem:[%s14 + $0xf0] sm:$0xff]
    %v3574 = vld [vmem:[%s14 + $0xf8] sm:$0xff]
    %v3575 = vld [vmem:[%s14 + $0x100] sm:$0xff]
    %v3576 = vld [vmem:[%s14 + $0x108] sm:$0xff]
    %v3577 = vld [vmem:[%s14 + $0x110] sm:$0xff]
    %v3578 = vld [vmem:[%s14 + $0x118] sm:$0xff]
    %v3579 = vld [vmem:[%s14 + $0x120] sm:$0xff]
    %v3580 = vld [vmem:[%s14 + $0x128] sm:$0xff]
    %v3581 = vld [vmem:[%s14 + $0x130] sm:$0xff]
    %v3582 = vld [vmem:[%s14 + $0x138] sm:$0xff]
    %v3583 = vld [vmem:[%s14 + $0x140] sm:$0xff]
    %v3584 = vld [vmem:[%s14 + $0x148] sm:$0xff]
    %v3585 = vld [vmem:[%s14 + $0x150] sm:$0xff]
    %v3586 = vld [vmem:[%s14 + $0x158] sm:$0xff]
    %v3587 = vld [vmem:[%s14 + $0x160] sm:$0xff]
    %v3588 = vld [vmem:[%s14 + $0x168] sm:$0xff]
    %v3589 = vld [vmem:[%s14 + $0x170] sm:$0xff]
    %v3590 = vld [vmem:[%s14 + $0x178] sm:$0xff]
    %v3591 = vld [vmem:[%s14 + $0x180] sm:$0xff]
    %v3592 = vld [vmem:[%s14 + $0x188] sm:$0xff]
    %v3593 = vld [vmem:[%s14 + $0x190] sm:$0xff]
    %v3594 = vld [vmem:[%s14 + $0x198] sm:$0xff]
    %v3595 = vld [vmem:[%s14 + $0x1a0] sm:$0xff]
    %v3596 = vld [vmem:[%s14 + $0x1a8] sm:$0xff]
    %v3597 = vld [vmem:[%s14 + $0x1b0] sm:$0xff]
    %v3598 = vld [vmem:[%s14 + $0x1b8] sm:$0xff]
    %v3599 = vld [vmem:[%s14 + $0x1c0] sm:$0xff]
    %v3600 = vld [vmem:[%s14 + $0x1c8] sm:$0xff]
    %v3601 = vld [vmem:[%s14 + $0x1d0] sm:$0xff]
    %v3602 = vld [vmem:[%s14 + $0x1d8] sm:$0xff]
    %v3603 = vld [vmem:[%s14 + $0x1e0] sm:$0xff]
    %v3604 = vld [vmem:[%s14 + $0x1e8] sm:$0xff]
    %v3605 = vld [vmem:[%s14 + $0x1f0] sm:$0xff]
    %v3606 = vld [vmem:[%s14 + $0x1f8] sm:$0xff]
    %v3607 = vpack.c.bf16 %v3539, %v3539
    %v3608 = vpack.c.bf16 %v3540, %v3540
    %v3609 = vpack.c.bf16 %v3541, %v3541
    %v3610 = vpack.c.bf16 %v3542, %v3542
    %v3611 = vpack.c.bf16 %v3544, %v3543
    %v3612 = vpack.c.bf16 %v3546, %v3545
    %v3613 = vpack.c.bf16 %v3548, %v3547
    %v3614 = vpack.c.bf16 %v3550, %v3549
    %v3615 = vpack.c.bf16 %v3552, %v3551
    %v3616 = vpack.c.bf16 %v3554, %v3553
    %v3617 = vpack.c.bf16 %v3556, %v3555
    %v3618 = vpack.c.bf16 %v3558, %v3557
    %v3619 = vpack.c.bf16 %v3560, %v3559
    %v3620 = vpack.c.bf16 %v3562, %v3561
    %v3621 = vpack.c.bf16 %v3564, %v3563
    %v3622 = vpack.c.bf16 %v3566, %v3565
    %v3623 = vpack.c.bf16 %v3568, %v3567
    %v3624 = vpack.c.bf16 %v3570, %v3569
    %v3625 = vpack.c.bf16 %v3572, %v3571
    %v3626 = vpack.c.bf16 %v3574, %v3573
    %v3627 = vpack.c.bf16 %v3576, %v3575
    %v3628 = vpack.c.bf16 %v3578, %v3577
    %v3629 = vpack.c.bf16 %v3580, %v3579
    %v3630 = vpack.c.bf16 %v3582, %v3581
    %v3631 = vpack.c.bf16 %v3584, %v3583
    %v3632 = vpack.c.bf16 %v3586, %v3585
    %v3633 = vpack.c.bf16 %v3588, %v3587
    %v3634 = vpack.c.bf16 %v3590, %v3589
    %v3635 = vpack.c.bf16 %v3592, %v3591
    %v3636 = vpack.c.bf16 %v3594, %v3593
    %v3637 = vpack.c.bf16 %v3596, %v3595
    %v3638 = vpack.c.bf16 %v3598, %v3597
    %v3639 = vpack.c.bf16 %v3600, %v3599
    %v3640 = vpack.c.bf16 %v3602, %v3601
    %v3641 = vpack.c.bf16 %v3604, %v3603
    %v3642 = vpack.c.bf16 %v3606, %v3605
    %v3643 = vld [vmem:[%s15] sm:$0x1]
    %v3645 = vlaneseq
    %v3646 = vshrl.u32 %v3645, 7
    %v3647 = vsub.s32 0, %v3646
    %v3648 = vrot.slane %v3643, %v3647
    %3650 = vmatprep.subr.bf16.mxu0 0
    %3651 = vmatpush1.bf16.msra.mxu0 %v3618
    %3652 = vmatprep.subr.bf16.mxu0 0
    %3653 = vmatpush1.bf16.msra.mxu0 %v3617
    %3654 = vmatprep.subr.bf16.mxu0 0
    %3655 = vmatpush1.bf16.msra.mxu0 %v3616
    %3656 = vmatprep.subr.bf16.mxu0 0
    %3657 = vmatpush1.bf16.msra.mxu0 %v3615
    %3658 = vmatprep.subr.bf16.mxu0 0
    %3659 = vmatpush1.bf16.msra.mxu0 %v3614
    %3660 = vmatprep.subr.bf16.mxu0 0
    %3661 = vmatpush1.bf16.msra.mxu0 %v3613
    %3662 = vmatprep.subr.bf16.mxu0 0
    %3663 = vmatpush1.bf16.msra.mxu0 %v3612
    %3664 = vmatprep.subr.bf16.mxu0 0
    %3665 = vmatpush1.bf16.msra.mxu0 %v3611
    %3666 = vmatprep.subr.bf16.mxu0 0
    %3667 = vmatpush2.bf16.msra.mxu0 %v3626
    %3668 = vmatprep.subr.bf16.mxu0 0
    %3669 = vmatpush2.bf16.msra.mxu0 %v3625
    %3670 = vmatprep.subr.bf16.mxu0 0
    %3671 = vmatpush2.bf16.msra.mxu0 %v3624
    %3672 = vmatprep.subr.bf16.mxu0 0
    %3673 = vmatpush2.bf16.msra.mxu0 %v3623
    %3674 = vmatprep.subr.bf16.mxu0 0
    %3675 = vmatpush2.bf16.msra.mxu0 %v3622
    %3676 = vmatprep.subr.bf16.mxu0 0
    %3677 = vmatpush2.bf16.msra.mxu0 %v3621
    %3678 = vmatprep.subr.bf16.mxu0 0
    %3679 = vmatpush2.bf16.msra.mxu0 %v3620
    %3680 = vmatprep.subr.bf16.mxu0 0
    %3681 = vmatpush2.bf16.msra.mxu0 %v3619
    %3682 = vmatprep.mubr.bf16.mxu0 %v3608
    %3683 = vmatmul.mubr.bf16.gmra.mxu0 %v3607
    %v3684 = vpop.f32.mrf.mxu0
    %v3685 = vadd.f32 %v3648, %v3684
    %v3686 = vpop.f32.mrf.mxu0
    %v3687 = vpop.f32.mrf.mxu0
    %v3688 = vpop.f32.mrf.mxu0
    %3689 = vdwg.mxu0
    %3690 = vmatprep.subr.bf16.mxu0 0
    %3691 = vmatpush1.bf16.msra.mxu0 %v3634
    %3692 = vmatprep.subr.bf16.mxu0 0
    %3693 = vmatpush1.bf16.msra.mxu0 %v3633
    %3694 = vmatprep.subr.bf16.mxu0 0
    %3695 = vmatpush1.bf16.msra.mxu0 %v3632
    %3696 = vmatprep.subr.bf16.mxu0 0
    %3697 = vmatpush1.bf16.msra.mxu0 %v3631
    %3698 = vmatprep.subr.bf16.mxu0 0
    %3699 = vmatpush1.bf16.msra.mxu0 %v3630
    %3700 = vmatprep.subr.bf16.mxu0 0
    %3701 = vmatpush1.bf16.msra.mxu0 %v3629
    %3702 = vmatprep.subr.bf16.mxu0 0
    %3703 = vmatpush1.bf16.msra.mxu0 %v3628
    %3704 = vmatprep.subr.bf16.mxu0 0
    %3705 = vmatpush1.bf16.msra.mxu0 %v3627
    %3706 = vmatprep.subr.bf16.mxu0 0
    %3707 = vmatpush2.bf16.msra.mxu0 %v3642
    %3708 = vmatprep.subr.bf16.mxu0 0
    %3709 = vmatpush2.bf16.msra.mxu0 %v3641
    %3710 = vmatprep.subr.bf16.mxu0 0
    %3711 = vmatpush2.bf16.msra.mxu0 %v3640
    %3712 = vmatprep.subr.bf16.mxu0 0
    %3713 = vmatpush2.bf16.msra.mxu0 %v3639
    %3714 = vmatprep.subr.bf16.mxu0 0
    %3715 = vmatpush2.bf16.msra.mxu0 %v3638
    %3716 = vmatprep.subr.bf16.mxu0 0
    %3717 = vmatpush2.bf16.msra.mxu0 %v3637
    %3718 = vmatprep.subr.bf16.mxu0 0
    %3719 = vmatpush2.bf16.msra.mxu0 %v3636
    %3720 = vmatprep.subr.bf16.mxu0 0
    %3721 = vmatpush2.bf16.msra.mxu0 %v3635
    %3722 = vmatprep.mubr.bf16.mxu0 %v3610
    %3723 = vmatmul.mubr.bf16.gmra.mxu0 %v3609
    %v3724 = vpop.f32.mrf.mxu0
    %v3725 = vadd.f32 %v3685, %v3724
    %v3726 = vpop.f32.mrf.mxu0
    %v3727 = vpop.f32.mrf.mxu0
    %v3728 = vpop.f32.mrf.mxu0
    %3729 = vdwg.mxu0
    %vm3730 = vcmask 41984
    %3731 = vst.msk [vmem:[#allocation2] sm:$0x3] %vm3730, %v3725
    // Predicated region
    $region66: #{dqn_forward_pallas.1} parent=1 // pred_check
      _
    $region67: #{dqn_forward_pallas.1} parent=1 // pred_check_branch
      %3733 = sbr.rel (0) target = $region69
    $region68: #{dqn_forward_pallas.1} parent=1 // pred_region
      %s3735 = ssub.s32 32, 32
      %3736 = vsyncadd [#allocation3], %s3735
      %s3738 = sshll.u32 [#allocation2], 4
      %s3739 = int_to_ptr.vmem [resolvable:$true] %s3738
      %3741 = dma.vmem_to_hbm [thread:$0]  %s3739, 32, %s16, [#allocation3]
    $region69: #{dqn_forward_pallas.1} parent=1 // pred_fallthru
      _
    // Predicated region
    $region70: #{dqn_forward_pallas.1} parent=1 // pred_check
      _
    $region71: #{dqn_forward_pallas.1} parent=1 // pred_check_branch
      %3743 = sbr.rel (0) target = $region73
    $region72: #{dqn_forward_pallas.1} parent=1 // pred_region
      %3744 = dma.done [#allocation3], 32
    $region73: #{dqn_forward_pallas.1} parent=1 // pred_fallthru
      _
    %3745 = vsyncpa [#allocation3], 1

</llo_original>
